<compile_context>
chip_gen: v5e
topology: v5e:2x2
jax: 0.10.0
libtpu: 0.0.40
codegen_flags: <defaults>
</compile_context>

<pallas_src>
import functools

import jax
import jax.numpy as jnp
from jax.experimental import pallas as pl
from jax.experimental.pallas import tpu as pltpu  # noqa: F401  (TPU backend)

EPS = 1e-5


def _fused_kernel(x_ref, w1_ref, g_ref, b_ref, w2_ref, o_ref, *, m_real):
    # x_ref : [C_in,  M_pad]  bf16, columns >= m_real are exact zeros
    # w1_ref: [C_mid, C_in ]  bf16, per-channel scale already folded in
    # g_ref : [C_mid, 1]      f32  BN gamma
    # b_ref : [C_mid, 1]      f32  BN beta
    # w2_ref: [C_out, C_mid]  bf16
    # o_ref : [C_out, m_real] f32

    # 1x1 conv #1 == MXU matmul with f32 accumulation.
    y = jnp.dot(w1_ref[...], x_ref[...], preferred_element_type=jnp.float32)

    # BatchNorm2d (training mode): batch mean / biased variance over N*H*W.
    # Padded columns of y are exactly zero (x pads are zero), so the plain sum
    # is the true sum; divide by the real element count.
    inv_m = 1.0 / float(m_real)
    mean = jnp.sum(y, axis=1, keepdims=True) * inv_m
    centered = y - mean
    # Two-pass variance; padded columns hold -mean after centering, mask them.
    col = jax.lax.broadcasted_iota(jnp.int32, y.shape, dimension=1)
    centered_m = jnp.where(col < m_real, centered, 0.0)
    var = jnp.sum(centered_m * centered_m, axis=1, keepdims=True) * inv_m
    inv_std = jax.lax.rsqrt(var + EPS)
    y_norm = centered * (inv_std * g_ref[...]) + b_ref[...]

    # 1x1 conv #2 == MXU matmul; drop the padded pixel columns on store.
    out_full = jnp.dot(w2_ref[...], y_norm.astype(jnp.bfloat16),
                       preferred_element_type=jnp.float32)
    o_ref[...] = out_full[:, :m_real]


@jax.jit
def fused_mul_conv_bn_conv(x_nchw, scale, w1, gamma, beta, w2):
    """x_nchw: [N, C_in, H, W], scale: [1, C_in, 1, 1],
    w1: [C_mid, C_in, 1, 1], gamma/beta: [C_mid], w2: [C_out, C_mid, 1, 1]."""
    N, C_in, H, W = x_nchw.shape
    C_mid = w1.shape[0]
    C_out = w2.shape[0]
    m_real = N * H * W
    m_pad = ((m_real + 127) // 128) * 128     # lane-align the pixel axis

    # Channel-major slab [C_in, N*H*W]; for N == 1 this is a free reshape of
    # NCHW (no data movement).  Pad pixels to a lane multiple + cast to bf16.
    x_cm = jnp.transpose(x_nchw, (1, 0, 2, 3)).reshape(C_in, m_real)
    x_cm = jnp.pad(x_cm, ((0, 0), (0, m_pad - m_real))).astype(jnp.bfloat16)

    # Fold the per-channel scale into conv #1:  (x*s) conv W1 == x conv (W1*s).
    w1s = (w1.reshape(C_mid, C_in) * scale.reshape(1, C_in)).astype(jnp.bfloat16)
    w2m = w2.reshape(C_out, C_mid).astype(jnp.bfloat16)
    g2d = gamma.reshape(C_mid, 1).astype(jnp.float32)
    b2d = beta.reshape(C_mid, 1).astype(jnp.float32)

    out_cm = pl.pallas_call(
        functools.partial(_fused_kernel, m_real=m_real),
        out_shape=jax.ShapeDtypeStruct((C_out, m_real), jnp.float32),
        in_specs=[
            pl.BlockSpec((C_in, m_pad), lambda: (0, 0)),
            pl.BlockSpec((C_mid, C_in), lambda: (0, 0)),
            pl.BlockSpec((C_mid, 1), lambda: (0, 0)),
            pl.BlockSpec((C_mid, 1), lambda: (0, 0)),
            pl.BlockSpec((C_out, C_mid), lambda: (0, 0)),
        ],
        out_specs=pl.BlockSpec((C_out, m_real), lambda: (0, 0)),
    )(x_cm, w1s, g2d, b2d, w2m)

    # [C_out, N*H*W] -> NCHW; free for N == 1.
    return jnp.transpose(out_cm.reshape(C_out, N, H, W), (1, 0, 2, 3))


def _reference(x_nchw, scale, w1, gamma, beta, w2):
    # Pure-JAX f32 reference matching PyTorch training-mode BN semantics.
    x = x_nchw * scale
    C_mid = w1.shape[0]
    C_out = w2.shape[0]
    y = jnp.einsum("nchw,oc->nohw", x, w1.reshape(C_mid, -1))
    mean = jnp.mean(y, axis=(0, 2, 3), keepdims=True)
    var = jnp.mean((y - mean) ** 2, axis=(0, 2, 3), keepdims=True)
    y = (y - mean) / jnp.sqrt(var + EPS)
    y = y * gamma.reshape(1, -1, 1, 1) + beta.reshape(1, -1, 1, 1)
    return jnp.einsum("nchw,oc->nohw", y, w2.reshape(C_out, -1))


if __name__ == "__main__":
    key = jax.random.PRNGKey(0)
    k_x, k_s, k_w1, k_g, k_b, k_w2 = jax.random.split(key, 6)

    N, C_in, H, W = 1, 1152, 7, 7
    C_mid, C_out = 320, 1280

    x226 = jax.random.normal(k_x, (N, C_in, H, W), dtype=jnp.float32)
    x231 = jax.random.normal(k_s, (1, C_in, 1, 1), dtype=jnp.float32)

    # Deterministic synthetic parameters (shapes from the module __init__).
    w_conv79 = jax.random.normal(k_w1, (C_mid, C_in, 1, 1), dtype=jnp.float32) * 0.02
    bn_gamma = 1.0 + 0.1 * jax.random.normal(k_g, (C_mid,), dtype=jnp.float32)
    bn_beta = 0.1 * jax.random.normal(k_b, (C_mid,), dtype=jnp.float32)
    w_conv80 = jax.random.normal(k_w2, (C_out, C_mid, 1, 1), dtype=jnp.float32) * 0.02

    out = fused_mul_conv_bn_conv(x226, x231, w_conv79, bn_gamma, bn_beta, w_conv80)
    out = jax.block_until_ready(out)

    ref = _reference(x226, x231, w_conv79, bn_gamma, bn_beta, w_conv80)
    assert out.shape == (N, C_out, H, W), out.shape
    # bf16 operands with f32 accumulation -> looser tolerance than pure f32.
    assert jnp.allclose(out, ref, atol=2e-2, rtol=2e-2), float(
        jnp.max(jnp.abs(out - ref))
    )

    print("KERNEL_OK")
</pallas_src>

<mosaic_0001>
module attributes {stable_mosaic.version = 11 : i64} {
  func.func @_fused_kernel(%arg0: memref<1152x128xbf16, #tpu.memory_space<vmem>>, %arg1: memref<320x1152xbf16, #tpu.memory_space<vmem>>, %arg2: memref<320x1xf32, #tpu.memory_space<vmem>>, %arg3: memref<320x1xf32, #tpu.memory_space<vmem>>, %arg4: memref<1280x320xbf16, #tpu.memory_space<vmem>>, %arg5: memref<1280x49xf32, #tpu.memory_space<vmem>>) attributes {dimension_semantics = [], scalar_prefetch = 0 : i64, scratch_operands = 0 : i64, tpu.core_type = #tpu.core_type<tc>} {
    %c0 = arith.constant 0 : index
    %c0_0 = arith.constant 0 : index
    %0 = vector.load %arg1[%c0, %c0_0] : memref<320x1152xbf16, #tpu.memory_space<vmem>>, vector<320x1152xbf16>
    %c0_1 = arith.constant 0 : index
    %c0_2 = arith.constant 0 : index
    %1 = vector.load %arg0[%c0_1, %c0_2] : memref<1152x128xbf16, #tpu.memory_space<vmem>>, vector<1152x128xbf16>
    %cst = arith.constant dense<0.000000e+00> : vector<320x128xf32>
    %2 = tpu.matmul %0, %1, %cst {dimension_numbers = #tpu.dot_dimension_numbers<[1], [0], [0], [1], [0, 0, 1, 1], [], []>} : vector<320x1152xbf16>, vector<1152x128xbf16>, vector<320x128xf32> -> vector<320x128xf32>
    %cst_3 = arith.constant dense<0.000000e+00> : vector<320xf32>
    %3 = vector.multi_reduction <add>, %2, %cst_3 [1] : vector<320x128xf32> to vector<320xf32>
    %4 = vector.shape_cast %3 : vector<320xf32> to vector<320x1xf32>
    %cst_4 = arith.constant 0.0204081628 : f32
    %5 = vector.broadcast %cst_4 : f32 to vector<320x1xf32>
    %6 = arith.mulf %4, %5 : vector<320x1xf32>
    %7 = vector.broadcast %6 : vector<320x1xf32> to vector<320x128xf32>
    %8 = arith.subf %2, %7 : vector<320x128xf32>
    %9 = tpu.iota {dimensions = array<i32: 1>} : vector<320x128xi32>
    %c49_i32 = arith.constant 49 : i32
    %10 = vector.broadcast %c49_i32 : i32 to vector<320x128xi32>
    %11 = arith.cmpi slt, %9, %10 : vector<320x128xi32>
    %cst_5 = arith.constant 0.000000e+00 : f32
    %12 = vector.broadcast %cst_5 : f32 to vector<320x128xf32>
    %13 = arith.select %11, %8, %12 : vector<320x128xi1>, vector<320x128xf32>
    %14 = arith.mulf %13, %13 : vector<320x128xf32>
    %cst_6 = arith.constant dense<0.000000e+00> : vector<320xf32>
    %15 = vector.multi_reduction <add>, %14, %cst_6 [1] : vector<320x128xf32> to vector<320xf32>
    %16 = vector.shape_cast %15 : vector<320xf32> to vector<320x1xf32>
    %cst_7 = arith.constant 0.0204081628 : f32
    %17 = vector.broadcast %cst_7 : f32 to vector<320x1xf32>
    %18 = arith.mulf %16, %17 : vector<320x1xf32>
    %cst_8 = arith.constant 9.99999974E-6 : f32
    %19 = vector.broadcast %cst_8 : f32 to vector<320x1xf32>
    %20 = arith.addf %18, %19 : vector<320x1xf32>
    %21 = math.rsqrt %20 : vector<320x1xf32>
    %c0_9 = arith.constant 0 : index
    %c0_10 = arith.constant 0 : index
    %22 = vector.load %arg2[%c0_9, %c0_10] : memref<320x1xf32, #tpu.memory_space<vmem>>, vector<320x1xf32>
    %23 = arith.mulf %21, %22 : vector<320x1xf32>
    %24 = vector.broadcast %23 : vector<320x1xf32> to vector<320x128xf32>
    %25 = arith.mulf %8, %24 : vector<320x128xf32>
    %c0_11 = arith.constant 0 : index
    %c0_12 = arith.constant 0 : index
    %26 = vector.load %arg3[%c0_11, %c0_12] : memref<320x1xf32, #tpu.memory_space<vmem>>, vector<320x1xf32>
    %27 = vector.broadcast %26 : vector<320x1xf32> to vector<320x128xf32>
    %28 = arith.addf %25, %27 : vector<320x128xf32>
    %c0_13 = arith.constant 0 : index
    %c0_14 = arith.constant 0 : index
    %29 = vector.load %arg4[%c0_13, %c0_14] : memref<1280x320xbf16, #tpu.memory_space<vmem>>, vector<1280x320xbf16>
    %30 = arith.truncf %28 : vector<320x128xf32> to vector<320x128xbf16>
    %cst_15 = arith.constant dense<0.000000e+00> : vector<1280x128xf32>
    %31 = tpu.matmul %29, %30, %cst_15 {dimension_numbers = #tpu.dot_dimension_numbers<[1], [0], [0], [1], [0, 0, 1, 1], [], []>} : vector<1280x320xbf16>, vector<320x128xbf16>, vector<1280x128xf32> -> vector<1280x128xf32>
    %32 = vector.extract_strided_slice %31 {offsets = [0, 0], sizes = [1280, 49], strides = [1, 1]} : vector<1280x128xf32> to vector<1280x49xf32>
    %c0_16 = arith.constant 0 : index
    %c0_17 = arith.constant 0 : index
    %33 = vector.load %arg5[%c0_16, %c0_17] : memref<1280x49xf32, #tpu.memory_space<vmem>>, vector<1280x49xf32>
    tpu.vector_store %arg5[%c0_16, %c0_17], %32 {strides = array<i32>} : memref<1280x49xf32, #tpu.memory_space<vmem>>, vector<1280x49xf32>,
    return
  }
}

</mosaic_0001>

<llo_original>
// kernel: fused_mul_conv_bn_conv.1
$region0: #{fused_mul_conv_bn_conv.1}
  #allocation0 [shape = 'u32[]', space=smem, size = 0x4, offset = 0x4, fixed_abs, tag = 'smem constant byte address 0x4 - core index']
  #allocation1 [shape = 'u32[72,128]{1,0:T(1,128)}', space=vmem, size = 0x9000, scoped, tag = 'internal scratch']
  %s0 = inlined_call_operand.vmem [shape: bf16[1152,128], index: 0, kind: input, shape index: {}]
  %s1 = inlined_call_operand.vmem [shape: bf16[320,1152], index: 1, kind: input, shape index: {}]
  %s2 = inlined_call_operand.vmem [shape: f32[320,1], index: 2, kind: input, shape index: {}]
  %s3 = inlined_call_operand.vmem [shape: f32[320,1], index: 3, kind: input, shape index: {}]
  %s4 = inlined_call_operand.vmem [shape: bf16[1280,320], index: 4, kind: input, shape index: {}]
  %s5 = inlined_call_operand.vmem [shape: f32[1280,49], index: 5, kind: output, shape index: {}]
  %s6 = sld [smem:[#allocation0]]
  $region30: #{fused_mul_conv_bn_conv.1} parent=0
    _
  %s8 = ssub.s32 1, %s6
  %s9 = scalar_select 0, %s8, %s6
  // Predicated region
  $region2: #{fused_mul_conv_bn_conv.1} parent=0 // pred_check
    _
  $region3: #{fused_mul_conv_bn_conv.1} parent=0 // pred_check_branch
    %11 = sbr.rel (0) target = $region5
  $region4: #{fused_mul_conv_bn_conv.1} parent=0 // pred_region
    _
  $region5: #{fused_mul_conv_bn_conv.1} parent=0 // pred_fallthru
    _
  // Predicated region
  $region6: #{fused_mul_conv_bn_conv.1} parent=0 // pred_check
    _
  $region7: #{fused_mul_conv_bn_conv.1} parent=0 // pred_check_branch
    %13 = sbr.rel (0) target = $region9
  $region8: #{fused_mul_conv_bn_conv.1} parent=0 // pred_region
    _
  $region9: #{fused_mul_conv_bn_conv.1} parent=0 // pred_fallthru
    _
  // Predicated region
  $region10: #{fused_mul_conv_bn_conv.1} parent=0 // pred_check
    _
  $region11: #{fused_mul_conv_bn_conv.1} parent=0 // pred_check_branch
    %15 = sbr.rel (0) target = $region13
  $region12: #{fused_mul_conv_bn_conv.1} parent=0 // pred_region
    _
  $region13: #{fused_mul_conv_bn_conv.1} parent=0 // pred_fallthru
    _
  // Predicated region
  $region14: #{fused_mul_conv_bn_conv.1} parent=0 // pred_check
    _
  $region15: #{fused_mul_conv_bn_conv.1} parent=0 // pred_check_branch
    %17 = sbr.rel (0) target = $region17
  $region16: #{fused_mul_conv_bn_conv.1} parent=0 // pred_region
    _
  $region17: #{fused_mul_conv_bn_conv.1} parent=0 // pred_fallthru
    _
  // Predicated region
  $region18: #{fused_mul_conv_bn_conv.1} parent=0 // pred_check
    _
  $region19: #{fused_mul_conv_bn_conv.1} parent=0 // pred_check_branch
    %19 = sbr.rel (0) target = $region21
  $region20: #{fused_mul_conv_bn_conv.1} parent=0 // pred_region
    _
  $region21: #{fused_mul_conv_bn_conv.1} parent=0 // pred_fallthru
    _
  %v21 = vld [vmem:[%s1] sm:$0xff]
  %v22 = vld [vmem:[%s1 + $0x8] sm:$0xff]
  %v23 = vld [vmem:[%s1 + $0x10] sm:$0xff]
  %v24 = vld [vmem:[%s1 + $0x18] sm:$0xff]
  %v25 = vld [vmem:[%s1 + $0x20] sm:$0xf]
  %v26 = vld [vmem:[%s1 + $0x24] sm:$0xff]
  %v27 = vld [vmem:[%s1 + $0x2c] sm:$0xff]
  %v28 = vld [vmem:[%s1 + $0x34] sm:$0xff]
  %v29 = vld [vmem:[%s1 + $0x3c] sm:$0xff]
  %v30 = vld [vmem:[%s1 + $0x44] sm:$0xf]
  %v31 = vld [vmem:[%s1 + $0x48] sm:$0xff]
  %v32 = vld [vmem:[%s1 + $0x50] sm:$0xff]
  %v33 = vld [vmem:[%s1 + $0x58] sm:$0xff]
  %v34 = vld [vmem:[%s1 + $0x60] sm:$0xff]
  %v35 = vld [vmem:[%s1 + $0x68] sm:$0xf]
  %v36 = vld [vmem:[%s1 + $0x6c] sm:$0xff]
  %v37 = vld [vmem:[%s1 + $0x74] sm:$0xff]
  %v38 = vld [vmem:[%s1 + $0x7c] sm:$0xff]
  %v39 = vld [vmem:[%s1 + $0x84] sm:$0xff]
  %v40 = vld [vmem:[%s1 + $0x8c] sm:$0xf]
  %v41 = vld [vmem:[%s1 + $0x90] sm:$0xff]
  %v42 = vld [vmem:[%s1 + $0x98] sm:$0xff]
  %v43 = vld [vmem:[%s1 + $0xa0] sm:$0xff]
  %v44 = vld [vmem:[%s1 + $0xa8] sm:$0xff]
  %v45 = vld [vmem:[%s1 + $0xb0] sm:$0xf]
  %v46 = vld [vmem:[%s1 + $0xb4] sm:$0xff]
  %v47 = vld [vmem:[%s1 + $0xbc] sm:$0xff]
  %v48 = vld [vmem:[%s1 + $0xc4] sm:$0xff]
  %v49 = vld [vmem:[%s1 + $0xcc] sm:$0xff]
  %v50 = vld [vmem:[%s1 + $0xd4] sm:$0xf]
  %v51 = vld [vmem:[%s1 + $0xd8] sm:$0xff]
  %v52 = vld [vmem:[%s1 + $0xe0] sm:$0xff]
  %v53 = vld [vmem:[%s1 + $0xe8] sm:$0xff]
  %v54 = vld [vmem:[%s1 + $0xf0] sm:$0xff]
  %v55 = vld [vmem:[%s1 + $0xf8] sm:$0xf]
  %v56 = vld [vmem:[%s1 + $0xfc] sm:$0xff]
  %v57 = vld [vmem:[%s1 + $0x104] sm:$0xff]
  %v58 = vld [vmem:[%s1 + $0x10c] sm:$0xff]
  %v59 = vld [vmem:[%s1 + $0x114] sm:$0xff]
  %v60 = vld [vmem:[%s1 + $0x11c] sm:$0xf]
  %v61 = vld [vmem:[%s1 + $0x120] sm:$0xff]
  %v62 = vld [vmem:[%s1 + $0x128] sm:$0xff]
  %v63 = vld [vmem:[%s1 + $0x130] sm:$0xff]
  %v64 = vld [vmem:[%s1 + $0x138] sm:$0xff]
  %v65 = vld [vmem:[%s1 + $0x140] sm:$0xf]
  %v66 = vld [vmem:[%s1 + $0x144] sm:$0xff]
  %v67 = vld [vmem:[%s1 + $0x14c] sm:$0xff]
  %v68 = vld [vmem:[%s1 + $0x154] sm:$0xff]
  %v69 = vld [vmem:[%s1 + $0x15c] sm:$0xff]
  %v70 = vld [vmem:[%s1 + $0x164] sm:$0xf]
  %v71 = vld [vmem:[%s1 + $0x168] sm:$0xff]
  %v72 = vld [vmem:[%s1 + $0x170] sm:$0xff]
  %v73 = vld [vmem:[%s1 + $0x178] sm:$0xff]
  %v74 = vld [vmem:[%s1 + $0x180] sm:$0xff]
  %v75 = vld [vmem:[%s1 + $0x188] sm:$0xf]
  %v76 = vld [vmem:[%s1 + $0x18c] sm:$0xff]
  %v77 = vld [vmem:[%s1 + $0x194] sm:$0xff]
  %v78 = vld [vmem:[%s1 + $0x19c] sm:$0xff]
  %v79 = vld [vmem:[%s1 + $0x1a4] sm:$0xff]
  %v80 = vld [vmem:[%s1 + $0x1ac] sm:$0xf]
  %v81 = vld [vmem:[%s1 + $0x1b0] sm:$0xff]
  %v82 = vld [vmem:[%s1 + $0x1b8] sm:$0xff]
  %v83 = vld [vmem:[%s1 + $0x1c0] sm:$0xff]
  %v84 = vld [vmem:[%s1 + $0x1c8] sm:$0xff]
  %v85 = vld [vmem:[%s1 + $0x1d0] sm:$0xf]
  %v86 = vld [vmem:[%s1 + $0x1d4] sm:$0xff]
  %v87 = vld [vmem:[%s1 + $0x1dc] sm:$0xff]
  %v88 = vld [vmem:[%s1 + $0x1e4] sm:$0xff]
  %v89 = vld [vmem:[%s1 + $0x1ec] sm:$0xff]
  %v90 = vld [vmem:[%s1 + $0x1f4] sm:$0xf]
  %v91 = vld [vmem:[%s1 + $0x1f8] sm:$0xff]
  %v92 = vld [vmem:[%s1 + $0x200] sm:$0xff]
  %v93 = vld [vmem:[%s1 + $0x208] sm:$0xff]
  %v94 = vld [vmem:[%s1 + $0x210] sm:$0xff]
  %v95 = vld [vmem:[%s1 + $0x218] sm:$0xf]
  %v96 = vld [vmem:[%s1 + $0x21c] sm:$0xff]
  %v97 = vld [vmem:[%s1 + $0x224] sm:$0xff]
  %v98 = vld [vmem:[%s1 + $0x22c] sm:$0xff]
  %v99 = vld [vmem:[%s1 + $0x234] sm:$0xff]
  %v100 = vld [vmem:[%s1 + $0x23c] sm:$0xf]
  %v101 = vld [vmem:[%s1 + $0x240] sm:$0xff]
  %v102 = vld [vmem:[%s1 + $0x248] sm:$0xff]
  %v103 = vld [vmem:[%s1 + $0x250] sm:$0xff]
  %v104 = vld [vmem:[%s1 + $0x258] sm:$0xff]
  %v105 = vld [vmem:[%s1 + $0x260] sm:$0xf]
  %v106 = vld [vmem:[%s1 + $0x264] sm:$0xff]
  %v107 = vld [vmem:[%s1 + $0x26c] sm:$0xff]
  %v108 = vld [vmem:[%s1 + $0x274] sm:$0xff]
  %v109 = vld [vmem:[%s1 + $0x27c] sm:$0xff]
  %v110 = vld [vmem:[%s1 + $0x284] sm:$0xf]
  %v111 = vld [vmem:[%s1 + $0x288] sm:$0xff]
  %v112 = vld [vmem:[%s1 + $0x290] sm:$0xff]
  %v113 = vld [vmem:[%s1 + $0x298] sm:$0xff]
  %v114 = vld [vmem:[%s1 + $0x2a0] sm:$0xff]
  %v115 = vld [vmem:[%s1 + $0x2a8] sm:$0xf]
  %v116 = vld [vmem:[%s1 + $0x2ac] sm:$0xff]
  %v117 = vld [vmem:[%s1 + $0x2b4] sm:$0xff]
  %v118 = vld [vmem:[%s1 + $0x2bc] sm:$0xff]
  %v119 = vld [vmem:[%s1 + $0x2c4] sm:$0xff]
  %v120 = vld [vmem:[%s1 + $0x2cc] sm:$0xf]
  %v121 = vld [vmem:[%s1 + $0x2d0] sm:$0xff]
  %v122 = vld [vmem:[%s1 + $0x2d8] sm:$0xff]
  %v123 = vld [vmem:[%s1 + $0x2e0] sm:$0xff]
  %v124 = vld [vmem:[%s1 + $0x2e8] sm:$0xff]
  %v125 = vld [vmem:[%s1 + $0x2f0] sm:$0xf]
  %v126 = vld [vmem:[%s1 + $0x2f4] sm:$0xff]
  %v127 = vld [vmem:[%s1 + $0x2fc] sm:$0xff]
  %v128 = vld [vmem:[%s1 + $0x304] sm:$0xff]
  %v129 = vld [vmem:[%s1 + $0x30c] sm:$0xff]
  %v130 = vld [vmem:[%s1 + $0x314] sm:$0xf]
  %v131 = vld [vmem:[%s1 + $0x318] sm:$0xff]
  %v132 = vld [vmem:[%s1 + $0x320] sm:$0xff]
  %v133 = vld [vmem:[%s1 + $0x328] sm:$0xff]
  %v134 = vld [vmem:[%s1 + $0x330] sm:$0xff]
  %v135 = vld [vmem:[%s1 + $0x338] sm:$0xf]
  %v136 = vld [vmem:[%s1 + $0x33c] sm:$0xff]
  %v137 = vld [vmem:[%s1 + $0x344] sm:$0xff]
  %v138 = vld [vmem:[%s1 + $0x34c] sm:$0xff]
  %v139 = vld [vmem:[%s1 + $0x354] sm:$0xff]
  %v140 = vld [vmem:[%s1 + $0x35c] sm:$0xf]
  %v141 = vld [vmem:[%s1 + $0x360] sm:$0xff]
  %v142 = vld [vmem:[%s1 + $0x368] sm:$0xff]
  %v143 = vld [vmem:[%s1 + $0x370] sm:$0xff]
  %v144 = vld [vmem:[%s1 + $0x378] sm:$0xff]
  %v145 = vld [vmem:[%s1 + $0x380] sm:$0xf]
  %v146 = vld [vmem:[%s1 + $0x384] sm:$0xff]
  %v147 = vld [vmem:[%s1 + $0x38c] sm:$0xff]
  %v148 = vld [vmem:[%s1 + $0x394] sm:$0xff]
  %v149 = vld [vmem:[%s1 + $0x39c] sm:$0xff]
  %v150 = vld [vmem:[%s1 + $0x3a4] sm:$0xf]
  %v151 = vld [vmem:[%s1 + $0x3a8] sm:$0xff]
  %v152 = vld [vmem:[%s1 + $0x3b0] sm:$0xff]
  %v153 = vld [vmem:[%s1 + $0x3b8] sm:$0xff]
  %v154 = vld [vmem:[%s1 + $0x3c0] sm:$0xff]
  %v155 = vld [vmem:[%s1 + $0x3c8] sm:$0xf]
  %v156 = vld [vmem:[%s1 + $0x3cc] sm:$0xff]
  %v157 = vld [vmem:[%s1 + $0x3d4] sm:$0xff]
  %v158 = vld [vmem:[%s1 + $0x3dc] sm:$0xff]
  %v159 = vld [vmem:[%s1 + $0x3e4] sm:$0xff]
  %v160 = vld [vmem:[%s1 + $0x3ec] sm:$0xf]
  %v161 = vld [vmem:[%s1 + $0x3f0] sm:$0xff]
  %v162 = vld [vmem:[%s1 + $0x3f8] sm:$0xff]
  %v163 = vld [vmem:[%s1 + $0x400] sm:$0xff]
  %v164 = vld [vmem:[%s1 + $0x408] sm:$0xff]
  %v165 = vld [vmem:[%s1 + $0x410] sm:$0xf]
  %v166 = vld [vmem:[%s1 + $0x414] sm:$0xff]
  %v167 = vld [vmem:[%s1 + $0x41c] sm:$0xff]
  %v168 = vld [vmem:[%s1 + $0x424] sm:$0xff]
  %v169 = vld [vmem:[%s1 + $0x42c] sm:$0xff]
  %v170 = vld [vmem:[%s1 + $0x434] sm:$0xf]
  %v171 = vld [vmem:[%s1 + $0x438] sm:$0xff]
  %v172 = vld [vmem:[%s1 + $0x440] sm:$0xff]
  %v173 = vld [vmem:[%s1 + $0x448] sm:$0xff]
  %v174 = vld [vmem:[%s1 + $0x450] sm:$0xff]
  %v175 = vld [vmem:[%s1 + $0x458] sm:$0xf]
  %v176 = vld [vmem:[%s1 + $0x45c] sm:$0xff]
  %v177 = vld [vmem:[%s1 + $0x464] sm:$0xff]
  %v178 = vld [vmem:[%s1 + $0x46c] sm:$0xff]
  %v179 = vld [vmem:[%s1 + $0x474] sm:$0xff]
  %v180 = vld [vmem:[%s1 + $0x47c] sm:$0xf]
  %v181 = vld [vmem:[%s1 + $0x480] sm:$0xff]
  %v182 = vld [vmem:[%s1 + $0x488] sm:$0xff]
  %v183 = vld [vmem:[%s1 + $0x490] sm:$0xff]
  %v184 = vld [vmem:[%s1 + $0x498] sm:$0xff]
  %v185 = vld [vmem:[%s1 + $0x4a0] sm:$0xf]
  %v186 = vld [vmem:[%s1 + $0x4a4] sm:$0xff]
  %v187 = vld [vmem:[%s1 + $0x4ac] sm:$0xff]
  %v188 = vld [vmem:[%s1 + $0x4b4] sm:$0xff]
  %v189 = vld [vmem:[%s1 + $0x4bc] sm:$0xff]
  %v190 = vld [vmem:[%s1 + $0x4c4] sm:$0xf]
  %v191 = vld [vmem:[%s1 + $0x4c8] sm:$0xff]
  %v192 = vld [vmem:[%s1 + $0x4d0] sm:$0xff]
  %v193 = vld [vmem:[%s1 + $0x4d8] sm:$0xff]
  %v194 = vld [vmem:[%s1 + $0x4e0] sm:$0xff]
  %v195 = vld [vmem:[%s1 + $0x4e8] sm:$0xf]
  %v196 = vld [vmem:[%s1 + $0x4ec] sm:$0xff]
  %v197 = vld [vmem:[%s1 + $0x4f4] sm:$0xff]
  %v198 = vld [vmem:[%s1 + $0x4fc] sm:$0xff]
  %v199 = vld [vmem:[%s1 + $0x504] sm:$0xff]
  %v200 = vld [vmem:[%s1 + $0x50c] sm:$0xf]
  %v201 = vld [vmem:[%s1 + $0x510] sm:$0xff]
  %v202 = vld [vmem:[%s1 + $0x518] sm:$0xff]
  %v203 = vld [vmem:[%s1 + $0x520] sm:$0xff]
  %v204 = vld [vmem:[%s1 + $0x528] sm:$0xff]
  %v205 = vld [vmem:[%s1 + $0x530] sm:$0xf]
  %v206 = vld [vmem:[%s1 + $0x534] sm:$0xff]
  %v207 = vld [vmem:[%s1 + $0x53c] sm:$0xff]
  %v208 = vld [vmem:[%s1 + $0x544] sm:$0xff]
  %v209 = vld [vmem:[%s1 + $0x54c] sm:$0xff]
  %v210 = vld [vmem:[%s1 + $0x554] sm:$0xf]
  %v211 = vld [vmem:[%s1 + $0x558] sm:$0xff]
  %v212 = vld [vmem:[%s1 + $0x560] sm:$0xff]
  %v213 = vld [vmem:[%s1 + $0x568] sm:$0xff]
  %v214 = vld [vmem:[%s1 + $0x570] sm:$0xff]
  %v215 = vld [vmem:[%s1 + $0x578] sm:$0xf]
  %v216 = vld [vmem:[%s1 + $0x57c] sm:$0xff]
  %v217 = vld [vmem:[%s1 + $0x584] sm:$0xff]
  %v218 = vld [vmem:[%s1 + $0x58c] sm:$0xff]
  %v219 = vld [vmem:[%s1 + $0x594] sm:$0xff]
  %v220 = vld [vmem:[%s1 + $0x59c] sm:$0xf]
  %v221 = vld [vmem:[%s0] sm:$0xf]
  %v222 = vld [vmem:[%s0 + $0x4] sm:$0xf]
  %v223 = vld [vmem:[%s0 + $0x8] sm:$0xf]
  %v224 = vld [vmem:[%s0 + $0xc] sm:$0xf]
  %v225 = vld [vmem:[%s0 + $0x10] sm:$0xf]
  %v226 = vld [vmem:[%s0 + $0x14] sm:$0xf]
  %v227 = vld [vmem:[%s0 + $0x18] sm:$0xf]
  %v228 = vld [vmem:[%s0 + $0x1c] sm:$0xf]
  %v229 = vld [vmem:[%s0 + $0x20] sm:$0xf]
  %v230 = vld [vmem:[%s0 + $0x24] sm:$0xf]
  %v231 = vld [vmem:[%s0 + $0x28] sm:$0xf]
  %v232 = vld [vmem:[%s0 + $0x2c] sm:$0xf]
  %v233 = vld [vmem:[%s0 + $0x30] sm:$0xf]
  %v234 = vld [vmem:[%s0 + $0x34] sm:$0xf]
  %v235 = vld [vmem:[%s0 + $0x38] sm:$0xf]
  %v236 = vld [vmem:[%s0 + $0x3c] sm:$0xf]
  %v237 = vld [vmem:[%s0 + $0x40] sm:$0xf]
  %v238 = vld [vmem:[%s0 + $0x44] sm:$0xf]
  %v239 = vld [vmem:[%s0 + $0x48] sm:$0xf]
  %v240 = vld [vmem:[%s0 + $0x4c] sm:$0xf]
  %v241 = vld [vmem:[%s0 + $0x50] sm:$0xf]
  %v242 = vld [vmem:[%s0 + $0x54] sm:$0xf]
  %v243 = vld [vmem:[%s0 + $0x58] sm:$0xf]
  %v244 = vld [vmem:[%s0 + $0x5c] sm:$0xf]
  %v245 = vld [vmem:[%s0 + $0x60] sm:$0xf]
  %v246 = vld [vmem:[%s0 + $0x64] sm:$0xf]
  %v247 = vld [vmem:[%s0 + $0x68] sm:$0xf]
  %v248 = vld [vmem:[%s0 + $0x6c] sm:$0xf]
  %v249 = vld [vmem:[%s0 + $0x70] sm:$0xf]
  %v250 = vld [vmem:[%s0 + $0x74] sm:$0xf]
  %v251 = vld [vmem:[%s0 + $0x78] sm:$0xf]
  %v252 = vld [vmem:[%s0 + $0x7c] sm:$0xf]
  %v253 = vld [vmem:[%s0 + $0x80] sm:$0xf]
  %v254 = vld [vmem:[%s0 + $0x84] sm:$0xf]
  %v255 = vld [vmem:[%s0 + $0x88] sm:$0xf]
  %v256 = vld [vmem:[%s0 + $0x8c] sm:$0xf]
  %v257 = vld [vmem:[%s0 + $0x90] sm:$0xf]
  %v258 = vld [vmem:[%s0 + $0x94] sm:$0xf]
  %v259 = vld [vmem:[%s0 + $0x98] sm:$0xf]
  %v260 = vld [vmem:[%s0 + $0x9c] sm:$0xf]
  %v261 = vld [vmem:[%s0 + $0xa0] sm:$0xf]
  %v262 = vld [vmem:[%s0 + $0xa4] sm:$0xf]
  %v263 = vld [vmem:[%s0 + $0xa8] sm:$0xf]
  %v264 = vld [vmem:[%s0 + $0xac] sm:$0xf]
  %v265 = vld [vmem:[%s0 + $0xb0] sm:$0xf]
  %v266 = vld [vmem:[%s0 + $0xb4] sm:$0xf]
  %v267 = vld [vmem:[%s0 + $0xb8] sm:$0xf]
  %v268 = vld [vmem:[%s0 + $0xbc] sm:$0xf]
  %v269 = vld [vmem:[%s0 + $0xc0] sm:$0xf]
  %v270 = vld [vmem:[%s0 + $0xc4] sm:$0xf]
  %v271 = vld [vmem:[%s0 + $0xc8] sm:$0xf]
  %v272 = vld [vmem:[%s0 + $0xcc] sm:$0xf]
  %v273 = vld [vmem:[%s0 + $0xd0] sm:$0xf]
  %v274 = vld [vmem:[%s0 + $0xd4] sm:$0xf]
  %v275 = vld [vmem:[%s0 + $0xd8] sm:$0xf]
  %v276 = vld [vmem:[%s0 + $0xdc] sm:$0xf]
  %v277 = vld [vmem:[%s0 + $0xe0] sm:$0xf]
  %v278 = vld [vmem:[%s0 + $0xe4] sm:$0xf]
  %v279 = vld [vmem:[%s0 + $0xe8] sm:$0xf]
  %v280 = vld [vmem:[%s0 + $0xec] sm:$0xf]
  %v281 = vld [vmem:[%s0 + $0xf0] sm:$0xf]
  %v282 = vld [vmem:[%s0 + $0xf4] sm:$0xf]
  %v283 = vld [vmem:[%s0 + $0xf8] sm:$0xf]
  %v284 = vld [vmem:[%s0 + $0xfc] sm:$0xf]
  %v285 = vld [vmem:[%s0 + $0x100] sm:$0xf]
  %v286 = vld [vmem:[%s0 + $0x104] sm:$0xf]
  %v287 = vld [vmem:[%s0 + $0x108] sm:$0xf]
  %v288 = vld [vmem:[%s0 + $0x10c] sm:$0xf]
  %v289 = vld [vmem:[%s0 + $0x110] sm:$0xf]
  %v290 = vld [vmem:[%s0 + $0x114] sm:$0xf]
  %v291 = vld [vmem:[%s0 + $0x118] sm:$0xf]
  %v292 = vld [vmem:[%s0 + $0x11c] sm:$0xf]
  %v293 = vld [vmem:[%s0 + $0x120] sm:$0xf]
  %v294 = vld [vmem:[%s0 + $0x124] sm:$0xf]
  %v295 = vld [vmem:[%s0 + $0x128] sm:$0xf]
  %v296 = vld [vmem:[%s0 + $0x12c] sm:$0xf]
  %v297 = vld [vmem:[%s0 + $0x130] sm:$0xf]
  %v298 = vld [vmem:[%s0 + $0x134] sm:$0xf]
  %v299 = vld [vmem:[%s0 + $0x138] sm:$0xf]
  %v300 = vld [vmem:[%s0 + $0x13c] sm:$0xf]
  %v301 = vld [vmem:[%s0 + $0x140] sm:$0xf]
  %v302 = vld [vmem:[%s0 + $0x144] sm:$0xf]
  %v303 = vld [vmem:[%s0 + $0x148] sm:$0xf]
  %v304 = vld [vmem:[%s0 + $0x14c] sm:$0xf]
  %v305 = vld [vmem:[%s0 + $0x150] sm:$0xf]
  %v306 = vld [vmem:[%s0 + $0x154] sm:$0xf]
  %v307 = vld [vmem:[%s0 + $0x158] sm:$0xf]
  %v308 = vld [vmem:[%s0 + $0x15c] sm:$0xf]
  %v309 = vld [vmem:[%s0 + $0x160] sm:$0xf]
  %v310 = vld [vmem:[%s0 + $0x164] sm:$0xf]
  %v311 = vld [vmem:[%s0 + $0x168] sm:$0xf]
  %v312 = vld [vmem:[%s0 + $0x16c] sm:$0xf]
  %v313 = vld [vmem:[%s0 + $0x170] sm:$0xf]
  %v314 = vld [vmem:[%s0 + $0x174] sm:$0xf]
  %v315 = vld [vmem:[%s0 + $0x178] sm:$0xf]
  %v316 = vld [vmem:[%s0 + $0x17c] sm:$0xf]
  %v317 = vld [vmem:[%s0 + $0x180] sm:$0xf]
  %v318 = vld [vmem:[%s0 + $0x184] sm:$0xf]
  %v319 = vld [vmem:[%s0 + $0x188] sm:$0xf]
  %v320 = vld [vmem:[%s0 + $0x18c] sm:$0xf]
  %v321 = vld [vmem:[%s0 + $0x190] sm:$0xf]
  %v322 = vld [vmem:[%s0 + $0x194] sm:$0xf]
  %v323 = vld [vmem:[%s0 + $0x198] sm:$0xf]
  %v324 = vld [vmem:[%s0 + $0x19c] sm:$0xf]
  %v325 = vld [vmem:[%s0 + $0x1a0] sm:$0xf]
  %v326 = vld [vmem:[%s0 + $0x1a4] sm:$0xf]
  %v327 = vld [vmem:[%s0 + $0x1a8] sm:$0xf]
  %v328 = vld [vmem:[%s0 + $0x1ac] sm:$0xf]
  %v329 = vld [vmem:[%s0 + $0x1b0] sm:$0xf]
  %v330 = vld [vmem:[%s0 + $0x1b4] sm:$0xf]
  %v331 = vld [vmem:[%s0 + $0x1b8] sm:$0xf]
  %v332 = vld [vmem:[%s0 + $0x1bc] sm:$0xf]
  %v333 = vld [vmem:[%s0 + $0x1c0] sm:$0xf]
  %v334 = vld [vmem:[%s0 + $0x1c4] sm:$0xf]
  %v335 = vld [vmem:[%s0 + $0x1c8] sm:$0xf]
  %v336 = vld [vmem:[%s0 + $0x1cc] sm:$0xf]
  %v337 = vld [vmem:[%s0 + $0x1d0] sm:$0xf]
  %v338 = vld [vmem:[%s0 + $0x1d4] sm:$0xf]
  %v339 = vld [vmem:[%s0 + $0x1d8] sm:$0xf]
  %v340 = vld [vmem:[%s0 + $0x1dc] sm:$0xf]
  %v341 = vld [vmem:[%s0 + $0x1e0] sm:$0xf]
  %v342 = vld [vmem:[%s0 + $0x1e4] sm:$0xf]
  %v343 = vld [vmem:[%s0 + $0x1e8] sm:$0xf]
  %v344 = vld [vmem:[%s0 + $0x1ec] sm:$0xf]
  %v345 = vld [vmem:[%s0 + $0x1f0] sm:$0xf]
  %v346 = vld [vmem:[%s0 + $0x1f4] sm:$0xf]
  %v347 = vld [vmem:[%s0 + $0x1f8] sm:$0xf]
  %v348 = vld [vmem:[%s0 + $0x1fc] sm:$0xf]
  %v349 = vld [vmem:[%s0 + $0x200] sm:$0xf]
  %v350 = vld [vmem:[%s0 + $0x204] sm:$0xf]
  %v351 = vld [vmem:[%s0 + $0x208] sm:$0xf]
  %v352 = vld [vmem:[%s0 + $0x20c] sm:$0xf]
  %v353 = vld [vmem:[%s0 + $0x210] sm:$0xf]
  %v354 = vld [vmem:[%s0 + $0x214] sm:$0xf]
  %v355 = vld [vmem:[%s0 + $0x218] sm:$0xf]
  %v356 = vld [vmem:[%s0 + $0x21c] sm:$0xf]
  %v357 = vld [vmem:[%s0 + $0x220] sm:$0xf]
  %v358 = vld [vmem:[%s0 + $0x224] sm:$0xf]
  %v359 = vld [vmem:[%s0 + $0x228] sm:$0xf]
  %v360 = vld [vmem:[%s0 + $0x22c] sm:$0xf]
  %v361 = vld [vmem:[%s0 + $0x230] sm:$0xf]
  %v362 = vld [vmem:[%s0 + $0x234] sm:$0xf]
  %v363 = vld [vmem:[%s0 + $0x238] sm:$0xf]
  %v364 = vld [vmem:[%s0 + $0x23c] sm:$0xf]
  %v565 = vunpack.c.l.b16 %v21
  %v566 = vunpack.c.h.b16 %v21
  %v567 = vunpack.c.l.b16 %v22
  %v568 = vunpack.c.h.b16 %v22
  %v569 = vunpack.c.l.b16 %v23
  %v570 = vunpack.c.h.b16 %v23
  %v571 = vunpack.c.l.b16 %v24
  %v572 = vunpack.c.h.b16 %v24
  %v573 = vunpack.c.l.b16 %v25
  %v574 = vunpack.c.l.b16 %v26
  %v575 = vunpack.c.h.b16 %v26
  %v576 = vunpack.c.l.b16 %v27
  %v577 = vunpack.c.h.b16 %v27
  %v578 = vunpack.c.l.b16 %v28
  %v579 = vunpack.c.h.b16 %v28
  %v580 = vunpack.c.l.b16 %v29
  %v581 = vunpack.c.h.b16 %v29
  %v582 = vunpack.c.l.b16 %v30
  %v583 = vunpack.c.l.b16 %v31
  %v584 = vunpack.c.h.b16 %v31
  %v585 = vunpack.c.l.b16 %v32
  %v586 = vunpack.c.h.b16 %v32
  %v587 = vunpack.c.l.b16 %v33
  %v588 = vunpack.c.h.b16 %v33
  %v589 = vunpack.c.l.b16 %v34
  %v590 = vunpack.c.h.b16 %v34
  %v591 = vunpack.c.l.b16 %v35
  %v592 = vunpack.c.l.b16 %v36
  %v593 = vunpack.c.h.b16 %v36
  %v594 = vunpack.c.l.b16 %v37
  %v595 = vunpack.c.h.b16 %v37
  %v596 = vunpack.c.l.b16 %v38
  %v597 = vunpack.c.h.b16 %v38
  %v598 = vunpack.c.l.b16 %v39
  %v599 = vunpack.c.h.b16 %v39
  %v600 = vunpack.c.l.b16 %v40
  %v601 = vunpack.c.l.b16 %v41
  %v602 = vunpack.c.h.b16 %v41
  %v603 = vunpack.c.l.b16 %v42
  %v604 = vunpack.c.h.b16 %v42
  %v605 = vunpack.c.l.b16 %v43
  %v606 = vunpack.c.h.b16 %v43
  %v607 = vunpack.c.l.b16 %v44
  %v608 = vunpack.c.h.b16 %v44
  %v609 = vunpack.c.l.b16 %v45
  %v610 = vunpack.c.l.b16 %v46
  %v611 = vunpack.c.h.b16 %v46
  %v612 = vunpack.c.l.b16 %v47
  %v613 = vunpack.c.h.b16 %v47
  %v614 = vunpack.c.l.b16 %v48
  %v615 = vunpack.c.h.b16 %v48
  %v616 = vunpack.c.l.b16 %v49
  %v617 = vunpack.c.h.b16 %v49
  %v618 = vunpack.c.l.b16 %v50
  %v619 = vunpack.c.l.b16 %v51
  %v620 = vunpack.c.h.b16 %v51
  %v621 = vunpack.c.l.b16 %v52
  %v622 = vunpack.c.h.b16 %v52
  %v623 = vunpack.c.l.b16 %v53
  %v624 = vunpack.c.h.b16 %v53
  %v625 = vunpack.c.l.b16 %v54
  %v626 = vunpack.c.h.b16 %v54
  %v627 = vunpack.c.l.b16 %v55
  %v628 = vunpack.c.l.b16 %v56
  %v629 = vunpack.c.h.b16 %v56
  %v630 = vunpack.c.l.b16 %v57
  %v631 = vunpack.c.h.b16 %v57
  %v632 = vunpack.c.l.b16 %v58
  %v633 = vunpack.c.h.b16 %v58
  %v634 = vunpack.c.l.b16 %v59
  %v635 = vunpack.c.h.b16 %v59
  %v636 = vunpack.c.l.b16 %v60
  %v637 = vunpack.c.l.b16 %v61
  %v638 = vunpack.c.h.b16 %v61
  %v639 = vunpack.c.l.b16 %v62
  %v640 = vunpack.c.h.b16 %v62
  %v641 = vunpack.c.l.b16 %v63
  %v642 = vunpack.c.h.b16 %v63
  %v643 = vunpack.c.l.b16 %v64
  %v644 = vunpack.c.h.b16 %v64
  %v645 = vunpack.c.l.b16 %v65
  %v646 = vunpack.c.l.b16 %v66
  %v647 = vunpack.c.h.b16 %v66
  %v648 = vunpack.c.l.b16 %v67
  %v649 = vunpack.c.h.b16 %v67
  %v650 = vunpack.c.l.b16 %v68
  %v651 = vunpack.c.h.b16 %v68
  %v652 = vunpack.c.l.b16 %v69
  %v653 = vunpack.c.h.b16 %v69
  %v654 = vunpack.c.l.b16 %v70
  %v655 = vunpack.c.l.b16 %v71
  %v656 = vunpack.c.h.b16 %v71
  %v657 = vunpack.c.l.b16 %v72
  %v658 = vunpack.c.h.b16 %v72
  %v659 = vunpack.c.l.b16 %v73
  %v660 = vunpack.c.h.b16 %v73
  %v661 = vunpack.c.l.b16 %v74
  %v662 = vunpack.c.h.b16 %v74
  %v663 = vunpack.c.l.b16 %v75
  %v664 = vunpack.c.l.b16 %v76
  %v665 = vunpack.c.h.b16 %v76
  %v666 = vunpack.c.l.b16 %v77
  %v667 = vunpack.c.h.b16 %v77
  %v668 = vunpack.c.l.b16 %v78
  %v669 = vunpack.c.h.b16 %v78
  %v670 = vunpack.c.l.b16 %v79
  %v671 = vunpack.c.h.b16 %v79
  %v672 = vunpack.c.l.b16 %v80
  %v673 = vunpack.c.l.b16 %v81
  %v674 = vunpack.c.h.b16 %v81
  %v675 = vunpack.c.l.b16 %v82
  %v676 = vunpack.c.h.b16 %v82
  %v677 = vunpack.c.l.b16 %v83
  %v678 = vunpack.c.h.b16 %v83
  %v679 = vunpack.c.l.b16 %v84
  %v680 = vunpack.c.h.b16 %v84
  %v681 = vunpack.c.l.b16 %v85
  %v682 = vunpack.c.l.b16 %v86
  %v683 = vunpack.c.h.b16 %v86
  %v684 = vunpack.c.l.b16 %v87
  %v685 = vunpack.c.h.b16 %v87
  %v686 = vunpack.c.l.b16 %v88
  %v687 = vunpack.c.h.b16 %v88
  %v688 = vunpack.c.l.b16 %v89
  %v689 = vunpack.c.h.b16 %v89
  %v690 = vunpack.c.l.b16 %v90
  %v691 = vunpack.c.l.b16 %v91
  %v692 = vunpack.c.h.b16 %v91
  %v693 = vunpack.c.l.b16 %v92
  %v694 = vunpack.c.h.b16 %v92
  %v695 = vunpack.c.l.b16 %v93
  %v696 = vunpack.c.h.b16 %v93
  %v697 = vunpack.c.l.b16 %v94
  %v698 = vunpack.c.h.b16 %v94
  %v699 = vunpack.c.l.b16 %v95
  %v700 = vunpack.c.l.b16 %v96
  %v701 = vunpack.c.h.b16 %v96
  %v702 = vunpack.c.l.b16 %v97
  %v703 = vunpack.c.h.b16 %v97
  %v704 = vunpack.c.l.b16 %v98
  %v705 = vunpack.c.h.b16 %v98
  %v706 = vunpack.c.l.b16 %v99
  %v707 = vunpack.c.h.b16 %v99
  %v708 = vunpack.c.l.b16 %v100
  %v709 = vunpack.c.l.b16 %v101
  %v710 = vunpack.c.h.b16 %v101
  %v711 = vunpack.c.l.b16 %v102
  %v712 = vunpack.c.h.b16 %v102
  %v713 = vunpack.c.l.b16 %v103
  %v714 = vunpack.c.h.b16 %v103
  %v715 = vunpack.c.l.b16 %v104
  %v716 = vunpack.c.h.b16 %v104
  %v717 = vunpack.c.l.b16 %v105
  %v718 = vunpack.c.l.b16 %v106
  %v719 = vunpack.c.h.b16 %v106
  %v720 = vunpack.c.l.b16 %v107
  %v721 = vunpack.c.h.b16 %v107
  %v722 = vunpack.c.l.b16 %v108
  %v723 = vunpack.c.h.b16 %v108
  %v724 = vunpack.c.l.b16 %v109
  %v725 = vunpack.c.h.b16 %v109
  %v726 = vunpack.c.l.b16 %v110
  %v727 = vunpack.c.l.b16 %v111
  %v728 = vunpack.c.h.b16 %v111
  %v729 = vunpack.c.l.b16 %v112
  %v730 = vunpack.c.h.b16 %v112
  %v731 = vunpack.c.l.b16 %v113
  %v732 = vunpack.c.h.b16 %v113
  %v733 = vunpack.c.l.b16 %v114
  %v734 = vunpack.c.h.b16 %v114
  %v735 = vunpack.c.l.b16 %v115
  %v736 = vunpack.c.l.b16 %v116
  %v737 = vunpack.c.h.b16 %v116
  %v738 = vunpack.c.l.b16 %v117
  %v739 = vunpack.c.h.b16 %v117
  %v740 = vunpack.c.l.b16 %v118
  %v741 = vunpack.c.h.b16 %v118
  %v742 = vunpack.c.l.b16 %v119
  %v743 = vunpack.c.h.b16 %v119
  %v744 = vunpack.c.l.b16 %v120
  %v745 = vunpack.c.l.b16 %v121
  %v746 = vunpack.c.h.b16 %v121
  %v747 = vunpack.c.l.b16 %v122
  %v748 = vunpack.c.h.b16 %v122
  %v749 = vunpack.c.l.b16 %v123
  %v750 = vunpack.c.h.b16 %v123
  %v751 = vunpack.c.l.b16 %v124
  %v752 = vunpack.c.h.b16 %v124
  %v753 = vunpack.c.l.b16 %v125
  %v754 = vunpack.c.l.b16 %v126
  %v755 = vunpack.c.h.b16 %v126
  %v756 = vunpack.c.l.b16 %v127
  %v757 = vunpack.c.h.b16 %v127
  %v758 = vunpack.c.l.b16 %v128
  %v759 = vunpack.c.h.b16 %v128
  %v760 = vunpack.c.l.b16 %v129
  %v761 = vunpack.c.h.b16 %v129
  %v762 = vunpack.c.l.b16 %v130
  %v763 = vunpack.c.l.b16 %v131
  %v764 = vunpack.c.h.b16 %v131
  %v765 = vunpack.c.l.b16 %v132
  %v766 = vunpack.c.h.b16 %v132
  %v767 = vunpack.c.l.b16 %v133
  %v768 = vunpack.c.h.b16 %v133
  %v769 = vunpack.c.l.b16 %v134
  %v770 = vunpack.c.h.b16 %v134
  %v771 = vunpack.c.l.b16 %v135
  %v772 = vunpack.c.l.b16 %v136
  %v773 = vunpack.c.h.b16 %v136
  %v774 = vunpack.c.l.b16 %v137
  %v775 = vunpack.c.h.b16 %v137
  %v776 = vunpack.c.l.b16 %v138
  %v777 = vunpack.c.h.b16 %v138
  %v778 = vunpack.c.l.b16 %v139
  %v779 = vunpack.c.h.b16 %v139
  %v780 = vunpack.c.l.b16 %v140
  %v781 = vunpack.c.l.b16 %v141
  %v782 = vunpack.c.h.b16 %v141
  %v783 = vunpack.c.l.b16 %v142
  %v784 = vunpack.c.h.b16 %v142
  %v785 = vunpack.c.l.b16 %v143
  %v786 = vunpack.c.h.b16 %v143
  %v787 = vunpack.c.l.b16 %v144
  %v788 = vunpack.c.h.b16 %v144
  %v789 = vunpack.c.l.b16 %v145
  %v790 = vunpack.c.l.b16 %v146
  %v791 = vunpack.c.h.b16 %v146
  %v792 = vunpack.c.l.b16 %v147
  %v793 = vunpack.c.h.b16 %v147
  %v794 = vunpack.c.l.b16 %v148
  %v795 = vunpack.c.h.b16 %v148
  %v796 = vunpack.c.l.b16 %v149
  %v797 = vunpack.c.h.b16 %v149
  %v798 = vunpack.c.l.b16 %v150
  %v799 = vunpack.c.l.b16 %v151
  %v800 = vunpack.c.h.b16 %v151
  %v801 = vunpack.c.l.b16 %v152
  %v802 = vunpack.c.h.b16 %v152
  %v803 = vunpack.c.l.b16 %v153
  %v804 = vunpack.c.h.b16 %v153
  %v805 = vunpack.c.l.b16 %v154
  %v806 = vunpack.c.h.b16 %v154
  %v807 = vunpack.c.l.b16 %v155
  %v808 = vunpack.c.l.b16 %v156
  %v809 = vunpack.c.h.b16 %v156
  %v810 = vunpack.c.l.b16 %v157
  %v811 = vunpack.c.h.b16 %v157
  %v812 = vunpack.c.l.b16 %v158
  %v813 = vunpack.c.h.b16 %v158
  %v814 = vunpack.c.l.b16 %v159
  %v815 = vunpack.c.h.b16 %v159
  %v816 = vunpack.c.l.b16 %v160
  %v817 = vunpack.c.l.b16 %v161
  %v818 = vunpack.c.h.b16 %v161
  %v819 = vunpack.c.l.b16 %v162
  %v820 = vunpack.c.h.b16 %v162
  %v821 = vunpack.c.l.b16 %v163
  %v822 = vunpack.c.h.b16 %v163
  %v823 = vunpack.c.l.b16 %v164
  %v824 = vunpack.c.h.b16 %v164
  %v825 = vunpack.c.l.b16 %v165
  %v826 = vunpack.c.l.b16 %v166
  %v827 = vunpack.c.h.b16 %v166
  %v828 = vunpack.c.l.b16 %v167
  %v829 = vunpack.c.h.b16 %v167
  %v830 = vunpack.c.l.b16 %v168
  %v831 = vunpack.c.h.b16 %v168
  %v832 = vunpack.c.l.b16 %v169
  %v833 = vunpack.c.h.b16 %v169
  %v834 = vunpack.c.l.b16 %v170
  %v835 = vunpack.c.l.b16 %v171
  %v836 = vunpack.c.h.b16 %v171
  %v837 = vunpack.c.l.b16 %v172
  %v838 = vunpack.c.h.b16 %v172
  %v839 = vunpack.c.l.b16 %v173
  %v840 = vunpack.c.h.b16 %v173
  %v841 = vunpack.c.l.b16 %v174
  %v842 = vunpack.c.h.b16 %v174
  %v843 = vunpack.c.l.b16 %v175
  %v844 = vunpack.c.l.b16 %v176
  %v845 = vunpack.c.h.b16 %v176
  %v846 = vunpack.c.l.b16 %v177
  %v847 = vunpack.c.h.b16 %v177
  %v848 = vunpack.c.l.b16 %v178
  %v849 = vunpack.c.h.b16 %v178
  %v850 = vunpack.c.l.b16 %v179
  %v851 = vunpack.c.h.b16 %v179
  %v852 = vunpack.c.l.b16 %v180
  %v853 = vunpack.c.l.b16 %v181
  %v854 = vunpack.c.h.b16 %v181
  %v855 = vunpack.c.l.b16 %v182
  %v856 = vunpack.c.h.b16 %v182
  %v857 = vunpack.c.l.b16 %v183
  %v858 = vunpack.c.h.b16 %v183
  %v859 = vunpack.c.l.b16 %v184
  %v860 = vunpack.c.h.b16 %v184
  %v861 = vunpack.c.l.b16 %v185
  %v862 = vunpack.c.l.b16 %v186
  %v863 = vunpack.c.h.b16 %v186
  %v864 = vunpack.c.l.b16 %v187
  %v865 = vunpack.c.h.b16 %v187
  %v866 = vunpack.c.l.b16 %v188
  %v867 = vunpack.c.h.b16 %v188
  %v868 = vunpack.c.l.b16 %v189
  %v869 = vunpack.c.h.b16 %v189
  %v870 = vunpack.c.l.b16 %v190
  %v871 = vunpack.c.l.b16 %v191
  %v872 = vunpack.c.h.b16 %v191
  %v873 = vunpack.c.l.b16 %v192
  %v874 = vunpack.c.h.b16 %v192
  %v875 = vunpack.c.l.b16 %v193
  %v876 = vunpack.c.h.b16 %v193
  %v877 = vunpack.c.l.b16 %v194
  %v878 = vunpack.c.h.b16 %v194
  %v879 = vunpack.c.l.b16 %v195
  %v880 = vunpack.c.l.b16 %v196
  %v881 = vunpack.c.h.b16 %v196
  %v882 = vunpack.c.l.b16 %v197
  %v883 = vunpack.c.h.b16 %v197
  %v884 = vunpack.c.l.b16 %v198
  %v885 = vunpack.c.h.b16 %v198
  %v886 = vunpack.c.l.b16 %v199
  %v887 = vunpack.c.h.b16 %v199
  %v888 = vunpack.c.l.b16 %v200
  %v889 = vunpack.c.l.b16 %v201
  %v890 = vunpack.c.h.b16 %v201
  %v891 = vunpack.c.l.b16 %v202
  %v892 = vunpack.c.h.b16 %v202
  %v893 = vunpack.c.l.b16 %v203
  %v894 = vunpack.c.h.b16 %v203
  %v895 = vunpack.c.l.b16 %v204
  %v896 = vunpack.c.h.b16 %v204
  %v897 = vunpack.c.l.b16 %v205
  %v898 = vunpack.c.l.b16 %v206
  %v899 = vunpack.c.h.b16 %v206
  %v900 = vunpack.c.l.b16 %v207
  %v901 = vunpack.c.h.b16 %v207
  %v902 = vunpack.c.l.b16 %v208
  %v903 = vunpack.c.h.b16 %v208
  %v904 = vunpack.c.l.b16 %v209
  %v905 = vunpack.c.h.b16 %v209
  %v906 = vunpack.c.l.b16 %v210
  %v907 = vunpack.c.l.b16 %v211
  %v908 = vunpack.c.h.b16 %v211
  %v909 = vunpack.c.l.b16 %v212
  %v910 = vunpack.c.h.b16 %v212
  %v911 = vunpack.c.l.b16 %v213
  %v912 = vunpack.c.h.b16 %v213
  %v913 = vunpack.c.l.b16 %v214
  %v914 = vunpack.c.h.b16 %v214
  %v915 = vunpack.c.l.b16 %v215
  %v916 = vunpack.c.l.b16 %v216
  %v917 = vunpack.c.h.b16 %v216
  %v918 = vunpack.c.l.b16 %v217
  %v919 = vunpack.c.h.b16 %v217
  %v920 = vunpack.c.l.b16 %v218
  %v921 = vunpack.c.h.b16 %v218
  %v922 = vunpack.c.l.b16 %v219
  %v923 = vunpack.c.h.b16 %v219
  %v924 = vunpack.c.l.b16 %v220
  %v925 = vpack.c.b16 %v574, %v565
  %v926 = vpack.c.b16 %v575, %v566
  %v927 = vpack.c.b16 %v576, %v567
  %v928 = vpack.c.b16 %v577, %v568
  %v929 = vpack.c.b16 %v578, %v569
  %v930 = vpack.c.b16 %v579, %v570
  %v931 = vpack.c.b16 %v580, %v571
  %v932 = vpack.c.b16 %v581, %v572
  %v933 = vpack.c.b16 %v582, %v573
  %v934 = vpack.c.b16 %v592, %v583
  %v935 = vpack.c.b16 %v593, %v584
  %v936 = vpack.c.b16 %v594, %v585
  %v937 = vpack.c.b16 %v595, %v586
  %v938 = vpack.c.b16 %v596, %v587
  %v939 = vpack.c.b16 %v597, %v588
  %v940 = vpack.c.b16 %v598, %v589
  %v941 = vpack.c.b16 %v599, %v590
  %v942 = vpack.c.b16 %v600, %v591
  %v943 = vpack.c.b16 %v610, %v601
  %v944 = vpack.c.b16 %v611, %v602
  %v945 = vpack.c.b16 %v612, %v603
  %v946 = vpack.c.b16 %v613, %v604
  %v947 = vpack.c.b16 %v614, %v605
  %v948 = vpack.c.b16 %v615, %v606
  %v949 = vpack.c.b16 %v616, %v607
  %v950 = vpack.c.b16 %v617, %v608
  %v951 = vpack.c.b16 %v618, %v609
  %v952 = vpack.c.b16 %v628, %v619
  %v953 = vpack.c.b16 %v629, %v620
  %v954 = vpack.c.b16 %v630, %v621
  %v955 = vpack.c.b16 %v631, %v622
  %v956 = vpack.c.b16 %v632, %v623
  %v957 = vpack.c.b16 %v633, %v624
  %v958 = vpack.c.b16 %v634, %v625
  %v959 = vpack.c.b16 %v635, %v626
  %v960 = vpack.c.b16 %v636, %v627
  %v961 = vpack.c.b16 %v646, %v637
  %v962 = vpack.c.b16 %v647, %v638
  %v963 = vpack.c.b16 %v648, %v639
  %v964 = vpack.c.b16 %v649, %v640
  %v965 = vpack.c.b16 %v650, %v641
  %v966 = vpack.c.b16 %v651, %v642
  %v967 = vpack.c.b16 %v652, %v643
  %v968 = vpack.c.b16 %v653, %v644
  %v969 = vpack.c.b16 %v654, %v645
  %v970 = vpack.c.b16 %v664, %v655
  %v971 = vpack.c.b16 %v665, %v656
  %v972 = vpack.c.b16 %v666, %v657
  %v973 = vpack.c.b16 %v667, %v658
  %v974 = vpack.c.b16 %v668, %v659
  %v975 = vpack.c.b16 %v669, %v660
  %v976 = vpack.c.b16 %v670, %v661
  %v977 = vpack.c.b16 %v671, %v662
  %v978 = vpack.c.b16 %v672, %v663
  %v979 = vpack.c.b16 %v682, %v673
  %v980 = vpack.c.b16 %v683, %v674
  %v981 = vpack.c.b16 %v684, %v675
  %v982 = vpack.c.b16 %v685, %v676
  %v983 = vpack.c.b16 %v686, %v677
  %v984 = vpack.c.b16 %v687, %v678
  %v985 = vpack.c.b16 %v688, %v679
  %v986 = vpack.c.b16 %v689, %v680
  %v987 = vpack.c.b16 %v690, %v681
  %v988 = vpack.c.b16 %v700, %v691
  %v989 = vpack.c.b16 %v701, %v692
  %v990 = vpack.c.b16 %v702, %v693
  %v991 = vpack.c.b16 %v703, %v694
  %v992 = vpack.c.b16 %v704, %v695
  %v993 = vpack.c.b16 %v705, %v696
  %v994 = vpack.c.b16 %v706, %v697
  %v995 = vpack.c.b16 %v707, %v698
  %v996 = vpack.c.b16 %v708, %v699
  %v997 = vpack.c.b16 %v718, %v709
  %v998 = vpack.c.b16 %v719, %v710
  %v999 = vpack.c.b16 %v720, %v711
  %v1000 = vpack.c.b16 %v721, %v712
  %v1001 = vpack.c.b16 %v722, %v713
  %v1002 = vpack.c.b16 %v723, %v714
  %v1003 = vpack.c.b16 %v724, %v715
  %v1004 = vpack.c.b16 %v725, %v716
  %v1005 = vpack.c.b16 %v726, %v717
  %v1006 = vpack.c.b16 %v736, %v727
  %v1007 = vpack.c.b16 %v737, %v728
  %v1008 = vpack.c.b16 %v738, %v729
  %v1009 = vpack.c.b16 %v739, %v730
  %v1010 = vpack.c.b16 %v740, %v731
  %v1011 = vpack.c.b16 %v741, %v732
  %v1012 = vpack.c.b16 %v742, %v733
  %v1013 = vpack.c.b16 %v743, %v734
  %v1014 = vpack.c.b16 %v744, %v735
  %v1015 = vpack.c.b16 %v754, %v745
  %v1016 = vpack.c.b16 %v755, %v746
  %v1017 = vpack.c.b16 %v756, %v747
  %v1018 = vpack.c.b16 %v757, %v748
  %v1019 = vpack.c.b16 %v758, %v749
  %v1020 = vpack.c.b16 %v759, %v750
  %v1021 = vpack.c.b16 %v760, %v751
  %v1022 = vpack.c.b16 %v761, %v752
  %v1023 = vpack.c.b16 %v762, %v753
  %v1024 = vpack.c.b16 %v772, %v763
  %v1025 = vpack.c.b16 %v773, %v764
  %v1026 = vpack.c.b16 %v774, %v765
  %v1027 = vpack.c.b16 %v775, %v766
  %v1028 = vpack.c.b16 %v776, %v767
  %v1029 = vpack.c.b16 %v777, %v768
  %v1030 = vpack.c.b16 %v778, %v769
  %v1031 = vpack.c.b16 %v779, %v770
  %v1032 = vpack.c.b16 %v780, %v771
  %v1033 = vpack.c.b16 %v790, %v781
  %v1034 = vpack.c.b16 %v791, %v782
  %v1035 = vpack.c.b16 %v792, %v783
  %v1036 = vpack.c.b16 %v793, %v784
  %v1037 = vpack.c.b16 %v794, %v785
  %v1038 = vpack.c.b16 %v795, %v786
  %v1039 = vpack.c.b16 %v796, %v787
  %v1040 = vpack.c.b16 %v797, %v788
  %v1041 = vpack.c.b16 %v798, %v789
  %v1042 = vpack.c.b16 %v808, %v799
  %v1043 = vpack.c.b16 %v809, %v800
  %v1044 = vpack.c.b16 %v810, %v801
  %v1045 = vpack.c.b16 %v811, %v802
  %v1046 = vpack.c.b16 %v812, %v803
  %v1047 = vpack.c.b16 %v813, %v804
  %v1048 = vpack.c.b16 %v814, %v805
  %v1049 = vpack.c.b16 %v815, %v806
  %v1050 = vpack.c.b16 %v816, %v807
  %v1051 = vpack.c.b16 %v826, %v817
  %v1052 = vpack.c.b16 %v827, %v818
  %v1053 = vpack.c.b16 %v828, %v819
  %v1054 = vpack.c.b16 %v829, %v820
  %v1055 = vpack.c.b16 %v830, %v821
  %v1056 = vpack.c.b16 %v831, %v822
  %v1057 = vpack.c.b16 %v832, %v823
  %v1058 = vpack.c.b16 %v833, %v824
  %v1059 = vpack.c.b16 %v834, %v825
  %v1060 = vpack.c.b16 %v844, %v835
  %v1061 = vpack.c.b16 %v845, %v836
  %v1062 = vpack.c.b16 %v846, %v837
  %v1063 = vpack.c.b16 %v847, %v838
  %v1064 = vpack.c.b16 %v848, %v839
  %v1065 = vpack.c.b16 %v849, %v840
  %v1066 = vpack.c.b16 %v850, %v841
  %v1067 = vpack.c.b16 %v851, %v842
  %v1068 = vpack.c.b16 %v852, %v843
  %v1069 = vpack.c.b16 %v862, %v853
  %v1070 = vpack.c.b16 %v863, %v854
  %v1071 = vpack.c.b16 %v864, %v855
  %v1072 = vpack.c.b16 %v865, %v856
  %v1073 = vpack.c.b16 %v866, %v857
  %v1074 = vpack.c.b16 %v867, %v858
  %v1075 = vpack.c.b16 %v868, %v859
  %v1076 = vpack.c.b16 %v869, %v860
  %v1077 = vpack.c.b16 %v870, %v861
  %v1078 = vpack.c.b16 %v880, %v871
  %v1079 = vpack.c.b16 %v881, %v872
  %v1080 = vpack.c.b16 %v882, %v873
  %v1081 = vpack.c.b16 %v883, %v874
  %v1082 = vpack.c.b16 %v884, %v875
  %v1083 = vpack.c.b16 %v885, %v876
  %v1084 = vpack.c.b16 %v886, %v877
  %v1085 = vpack.c.b16 %v887, %v878
  %v1086 = vpack.c.b16 %v888, %v879
  %v1087 = vpack.c.b16 %v898, %v889
  %v1088 = vpack.c.b16 %v899, %v890
  %v1089 = vpack.c.b16 %v900, %v891
  %v1090 = vpack.c.b16 %v901, %v892
  %v1091 = vpack.c.b16 %v902, %v893
  %v1092 = vpack.c.b16 %v903, %v894
  %v1093 = vpack.c.b16 %v904, %v895
  %v1094 = vpack.c.b16 %v905, %v896
  %v1095 = vpack.c.b16 %v906, %v897
  %v1096 = vpack.c.b16 %v916, %v907
  %v1097 = vpack.c.b16 %v917, %v908
  %v1098 = vpack.c.b16 %v918, %v909
  %v1099 = vpack.c.b16 %v919, %v910
  %v1100 = vpack.c.b16 %v920, %v911
  %v1101 = vpack.c.b16 %v921, %v912
  %v1102 = vpack.c.b16 %v922, %v913
  %v1103 = vpack.c.b16 %v923, %v914
  %v1104 = vpack.c.b16 %v924, %v915
  %v1429 = vunpack.c.l.b16 %v221
  %v1430 = vunpack.c.l.b16 %v222
  %v1431 = vunpack.c.l.b16 %v223
  %v1432 = vunpack.c.l.b16 %v224
  %v1433 = vunpack.c.l.b16 %v225
  %v1434 = vunpack.c.l.b16 %v226
  %v1435 = vunpack.c.l.b16 %v227
  %v1436 = vunpack.c.l.b16 %v228
  %v1437 = vunpack.c.l.b16 %v229
  %v1438 = vunpack.c.l.b16 %v230
  %v1439 = vunpack.c.l.b16 %v231
  %v1440 = vunpack.c.l.b16 %v232
  %v1441 = vunpack.c.l.b16 %v233
  %v1442 = vunpack.c.l.b16 %v234
  %v1443 = vunpack.c.l.b16 %v235
  %v1444 = vunpack.c.l.b16 %v236
  %v1445 = vunpack.c.l.b16 %v237
  %v1446 = vunpack.c.l.b16 %v238
  %v1447 = vunpack.c.l.b16 %v239
  %v1448 = vunpack.c.l.b16 %v240
  %v1449 = vunpack.c.l.b16 %v241
  %v1450 = vunpack.c.l.b16 %v242
  %v1451 = vunpack.c.l.b16 %v243
  %v1452 = vunpack.c.l.b16 %v244
  %v1453 = vunpack.c.l.b16 %v245
  %v1454 = vunpack.c.l.b16 %v246
  %v1455 = vunpack.c.l.b16 %v247
  %v1456 = vunpack.c.l.b16 %v248
  %v1457 = vunpack.c.l.b16 %v249
  %v1458 = vunpack.c.l.b16 %v250
  %v1459 = vunpack.c.l.b16 %v251
  %v1460 = vunpack.c.l.b16 %v252
  %v1461 = vunpack.c.l.b16 %v253
  %v1462 = vunpack.c.l.b16 %v254
  %v1463 = vunpack.c.l.b16 %v255
  %v1464 = vunpack.c.l.b16 %v256
  %v1465 = vunpack.c.l.b16 %v257
  %v1466 = vunpack.c.l.b16 %v258
  %v1467 = vunpack.c.l.b16 %v259
  %v1468 = vunpack.c.l.b16 %v260
  %v1469 = vunpack.c.l.b16 %v261
  %v1470 = vunpack.c.l.b16 %v262
  %v1471 = vunpack.c.l.b16 %v263
  %v1472 = vunpack.c.l.b16 %v264
  %v1473 = vunpack.c.l.b16 %v265
  %v1474 = vunpack.c.l.b16 %v266
  %v1475 = vunpack.c.l.b16 %v267
  %v1476 = vunpack.c.l.b16 %v268
  %v1477 = vunpack.c.l.b16 %v269
  %v1478 = vunpack.c.l.b16 %v270
  %v1479 = vunpack.c.l.b16 %v271
  %v1480 = vunpack.c.l.b16 %v272
  %v1481 = vunpack.c.l.b16 %v273
  %v1482 = vunpack.c.l.b16 %v274
  %v1483 = vunpack.c.l.b16 %v275
  %v1484 = vunpack.c.l.b16 %v276
  %v1485 = vunpack.c.l.b16 %v277
  %v1486 = vunpack.c.l.b16 %v278
  %v1487 = vunpack.c.l.b16 %v279
  %v1488 = vunpack.c.l.b16 %v280
  %v1489 = vunpack.c.l.b16 %v281
  %v1490 = vunpack.c.l.b16 %v282
  %v1491 = vunpack.c.l.b16 %v283
  %v1492 = vunpack.c.l.b16 %v284
  %v1493 = vunpack.c.l.b16 %v285
  %v1494 = vunpack.c.l.b16 %v286
  %v1495 = vunpack.c.l.b16 %v287
  %v1496 = vunpack.c.l.b16 %v288
  %v1497 = vunpack.c.l.b16 %v289
  %v1498 = vunpack.c.l.b16 %v290
  %v1499 = vunpack.c.l.b16 %v291
  %v1500 = vunpack.c.l.b16 %v292
  %v1501 = vunpack.c.l.b16 %v293
  %v1502 = vunpack.c.l.b16 %v294
  %v1503 = vunpack.c.l.b16 %v295
  %v1504 = vunpack.c.l.b16 %v296
  %v1505 = vunpack.c.l.b16 %v297
  %v1506 = vunpack.c.l.b16 %v298
  %v1507 = vunpack.c.l.b16 %v299
  %v1508 = vunpack.c.l.b16 %v300
  %v1509 = vunpack.c.l.b16 %v301
  %v1510 = vunpack.c.l.b16 %v302
  %v1511 = vunpack.c.l.b16 %v303
  %v1512 = vunpack.c.l.b16 %v304
  %v1513 = vunpack.c.l.b16 %v305
  %v1514 = vunpack.c.l.b16 %v306
  %v1515 = vunpack.c.l.b16 %v307
  %v1516 = vunpack.c.l.b16 %v308
  %v1517 = vunpack.c.l.b16 %v309
  %v1518 = vunpack.c.l.b16 %v310
  %v1519 = vunpack.c.l.b16 %v311
  %v1520 = vunpack.c.l.b16 %v312
  %v1521 = vunpack.c.l.b16 %v313
  %v1522 = vunpack.c.l.b16 %v314
  %v1523 = vunpack.c.l.b16 %v315
  %v1524 = vunpack.c.l.b16 %v316
  %v1525 = vunpack.c.l.b16 %v317
  %v1526 = vunpack.c.l.b16 %v318
  %v1527 = vunpack.c.l.b16 %v319
  %v1528 = vunpack.c.l.b16 %v320
  %v1529 = vunpack.c.l.b16 %v321
  %v1530 = vunpack.c.l.b16 %v322
  %v1531 = vunpack.c.l.b16 %v323
  %v1532 = vunpack.c.l.b16 %v324
  %v1533 = vunpack.c.l.b16 %v325
  %v1534 = vunpack.c.l.b16 %v326
  %v1535 = vunpack.c.l.b16 %v327
  %v1536 = vunpack.c.l.b16 %v328
  %v1537 = vunpack.c.l.b16 %v329
  %v1538 = vunpack.c.l.b16 %v330
  %v1539 = vunpack.c.l.b16 %v331
  %v1540 = vunpack.c.l.b16 %v332
  %v1541 = vunpack.c.l.b16 %v333
  %v1542 = vunpack.c.l.b16 %v334
  %v1543 = vunpack.c.l.b16 %v335
  %v1544 = vunpack.c.l.b16 %v336
  %v1545 = vunpack.c.l.b16 %v337
  %v1546 = vunpack.c.l.b16 %v338
  %v1547 = vunpack.c.l.b16 %v339
  %v1548 = vunpack.c.l.b16 %v340
  %v1549 = vunpack.c.l.b16 %v341
  %v1550 = vunpack.c.l.b16 %v342
  %v1551 = vunpack.c.l.b16 %v343
  %v1552 = vunpack.c.l.b16 %v344
  %v1553 = vunpack.c.l.b16 %v345
  %v1554 = vunpack.c.l.b16 %v346
  %v1555 = vunpack.c.l.b16 %v347
  %v1556 = vunpack.c.l.b16 %v348
  %v1557 = vunpack.c.l.b16 %v349
  %v1558 = vunpack.c.l.b16 %v350
  %v1559 = vunpack.c.l.b16 %v351
  %v1560 = vunpack.c.l.b16 %v352
  %v1561 = vunpack.c.l.b16 %v353
  %v1562 = vunpack.c.l.b16 %v354
  %v1563 = vunpack.c.l.b16 %v355
  %v1564 = vunpack.c.l.b16 %v356
  %v1565 = vunpack.c.l.b16 %v357
  %v1566 = vunpack.c.l.b16 %v358
  %v1567 = vunpack.c.l.b16 %v359
  %v1568 = vunpack.c.l.b16 %v360
  %v1569 = vunpack.c.l.b16 %v361
  %v1570 = vunpack.c.l.b16 %v362
  %v1571 = vunpack.c.l.b16 %v363
  %v1572 = vunpack.c.l.b16 %v364
  %v1573 = vpack.c.b16 %v1430, %v1429
  %v1574 = vpack.c.b16 %v1432, %v1431
  %v1575 = vpack.c.b16 %v1434, %v1433
  %v1576 = vpack.c.b16 %v1436, %v1435
  %v1577 = vpack.c.b16 %v1438, %v1437
  %v1578 = vpack.c.b16 %v1440, %v1439
  %v1579 = vpack.c.b16 %v1442, %v1441
  %v1580 = vpack.c.b16 %v1444, %v1443
  %v1581 = vpack.c.b16 %v1446, %v1445
  %v1582 = vpack.c.b16 %v1448, %v1447
  %v1583 = vpack.c.b16 %v1450, %v1449
  %v1584 = vpack.c.b16 %v1452, %v1451
  %v1585 = vpack.c.b16 %v1454, %v1453
  %v1586 = vpack.c.b16 %v1456, %v1455
  %v1587 = vpack.c.b16 %v1458, %v1457
  %v1588 = vpack.c.b16 %v1460, %v1459
  %v1589 = vpack.c.b16 %v1462, %v1461
  %v1590 = vpack.c.b16 %v1464, %v1463
  %v1591 = vpack.c.b16 %v1466, %v1465
  %v1592 = vpack.c.b16 %v1468, %v1467
  %v1593 = vpack.c.b16 %v1470, %v1469
  %v1594 = vpack.c.b16 %v1472, %v1471
  %v1595 = vpack.c.b16 %v1474, %v1473
  %v1596 = vpack.c.b16 %v1476, %v1475
  %v1597 = vpack.c.b16 %v1478, %v1477
  %v1598 = vpack.c.b16 %v1480, %v1479
  %v1599 = vpack.c.b16 %v1482, %v1481
  %v1600 = vpack.c.b16 %v1484, %v1483
  %v1601 = vpack.c.b16 %v1486, %v1485
  %v1602 = vpack.c.b16 %v1488, %v1487
  %v1603 = vpack.c.b16 %v1490, %v1489
  %v1604 = vpack.c.b16 %v1492, %v1491
  %v1605 = vpack.c.b16 %v1494, %v1493
  %v1606 = vpack.c.b16 %v1496, %v1495
  %v1607 = vpack.c.b16 %v1498, %v1497
  %v1608 = vpack.c.b16 %v1500, %v1499
  %v1609 = vpack.c.b16 %v1502, %v1501
  %v1610 = vpack.c.b16 %v1504, %v1503
  %v1611 = vpack.c.b16 %v1506, %v1505
  %v1612 = vpack.c.b16 %v1508, %v1507
  %v1613 = vpack.c.b16 %v1510, %v1509
  %v1614 = vpack.c.b16 %v1512, %v1511
  %v1615 = vpack.c.b16 %v1514, %v1513
  %v1616 = vpack.c.b16 %v1516, %v1515
  %v1617 = vpack.c.b16 %v1518, %v1517
  %v1618 = vpack.c.b16 %v1520, %v1519
  %v1619 = vpack.c.b16 %v1522, %v1521
  %v1620 = vpack.c.b16 %v1524, %v1523
  %v1621 = vpack.c.b16 %v1526, %v1525
  %v1622 = vpack.c.b16 %v1528, %v1527
  %v1623 = vpack.c.b16 %v1530, %v1529
  %v1624 = vpack.c.b16 %v1532, %v1531
  %v1625 = vpack.c.b16 %v1534, %v1533
  %v1626 = vpack.c.b16 %v1536, %v1535
  %v1627 = vpack.c.b16 %v1538, %v1537
  %v1628 = vpack.c.b16 %v1540, %v1539
  %v1629 = vpack.c.b16 %v1542, %v1541
  %v1630 = vpack.c.b16 %v1544, %v1543
  %v1631 = vpack.c.b16 %v1546, %v1545
  %v1632 = vpack.c.b16 %v1548, %v1547
  %v1633 = vpack.c.b16 %v1550, %v1549
  %v1634 = vpack.c.b16 %v1552, %v1551
  %v1635 = vpack.c.b16 %v1554, %v1553
  %v1636 = vpack.c.b16 %v1556, %v1555
  %v1637 = vpack.c.b16 %v1558, %v1557
  %v1638 = vpack.c.b16 %v1560, %v1559
  %v1639 = vpack.c.b16 %v1562, %v1561
  %v1640 = vpack.c.b16 %v1564, %v1563
  %v1641 = vpack.c.b16 %v1566, %v1565
  %v1642 = vpack.c.b16 %v1568, %v1567
  %v1643 = vpack.c.b16 %v1570, %v1569
  %v1644 = vpack.c.b16 %v1572, %v1571
  %1717 = vmatpush.bf16.msra.mxu0 %v1580
  %1718 = vmatpush.bf16.msra.mxu0 %v1579
  %1719 = vmatpush.bf16.msra.mxu0 %v1578
  %1720 = vmatpush.bf16.msra.mxu0 %v1577
  %1721 = vmatpush.bf16.msra.mxu0 %v1576
  %1722 = vmatpush.bf16.msra.mxu0 %v1575
  %1723 = vmatpush.bf16.msra.mxu0 %v1574
  %1724 = vmatpush.bf16.msra.mxu0 %v1573
  %1725 = vmatmul.bf16.gmra.mxu0 %v925
  %v1726 = vpop.f32.mrf.mxu0
  %v1727 = vadd.f32 0.0, %v1726
  %v1728 = vpop.f32.mrf.mxu0
  %v1729 = vadd.f32 0.0, %v1728
  %1730 = vmatmul.bf16.gmra.mxu0 %v934
  %v1731 = vpop.f32.mrf.mxu0
  %v1732 = vadd.f32 0.0, %v1731
  %v1733 = vpop.f32.mrf.mxu0
  %v1734 = vadd.f32 0.0, %v1733
  %1735 = vmatmul.bf16.gmra.mxu0 %v943
  %v1736 = vpop.f32.mrf.mxu0
  %v1737 = vadd.f32 0.0, %v1736
  %v1738 = vpop.f32.mrf.mxu0
  %v1739 = vadd.f32 0.0, %v1738
  %1740 = vmatmul.bf16.gmra.mxu0 %v952
  %v1741 = vpop.f32.mrf.mxu0
  %v1742 = vadd.f32 0.0, %v1741
  %v1743 = vpop.f32.mrf.mxu0
  %v1744 = vadd.f32 0.0, %v1743
  %1745 = vmatmul.bf16.gmra.mxu0 %v961
  %v1746 = vpop.f32.mrf.mxu0
  %v1747 = vadd.f32 0.0, %v1746
  %v1748 = vpop.f32.mrf.mxu0
  %v1749 = vadd.f32 0.0, %v1748
  %1750 = vmatmul.bf16.gmra.mxu0 %v970
  %v1751 = vpop.f32.mrf.mxu0
  %v1752 = vadd.f32 0.0, %v1751
  %v1753 = vpop.f32.mrf.mxu0
  %v1754 = vadd.f32 0.0, %v1753
  %1755 = vmatmul.bf16.gmra.mxu0 %v979
  %v1756 = vpop.f32.mrf.mxu0
  %v1757 = vadd.f32 0.0, %v1756
  %v1758 = vpop.f32.mrf.mxu0
  %v1759 = vadd.f32 0.0, %v1758
  %1760 = vmatmul.bf16.gmra.mxu0 %v988
  %v1761 = vpop.f32.mrf.mxu0
  %v1762 = vadd.f32 0.0, %v1761
  %v1763 = vpop.f32.mrf.mxu0
  %v1764 = vadd.f32 0.0, %v1763
  %1765 = vmatmul.bf16.gmra.mxu0 %v997
  %v1766 = vpop.f32.mrf.mxu0
  %v1767 = vadd.f32 0.0, %v1766
  %v1768 = vpop.f32.mrf.mxu0
  %v1769 = vadd.f32 0.0, %v1768
  %1770 = vmatmul.bf16.gmra.mxu0 %v1006
  %v1771 = vpop.f32.mrf.mxu0
  %v1772 = vadd.f32 0.0, %v1771
  %v1773 = vpop.f32.mrf.mxu0
  %v1774 = vadd.f32 0.0, %v1773
  %1775 = vmatmul.bf16.gmra.mxu0 %v1015
  %v1776 = vpop.f32.mrf.mxu0
  %v1777 = vadd.f32 0.0, %v1776
  %v1778 = vpop.f32.mrf.mxu0
  %v1779 = vadd.f32 0.0, %v1778
  %1780 = vmatmul.bf16.gmra.mxu0 %v1024
  %v1781 = vpop.f32.mrf.mxu0
  %v1782 = vadd.f32 0.0, %v1781
  %v1783 = vpop.f32.mrf.mxu0
  %v1784 = vadd.f32 0.0, %v1783
  %1785 = vmatmul.bf16.gmra.mxu0 %v1033
  %v1786 = vpop.f32.mrf.mxu0
  %v1787 = vadd.f32 0.0, %v1786
  %v1788 = vpop.f32.mrf.mxu0
  %v1789 = vadd.f32 0.0, %v1788
  %1790 = vmatmul.bf16.gmra.mxu0 %v1042
  %v1791 = vpop.f32.mrf.mxu0
  %v1792 = vadd.f32 0.0, %v1791
  %v1793 = vpop.f32.mrf.mxu0
  %v1794 = vadd.f32 0.0, %v1793
  %1795 = vmatmul.bf16.gmra.mxu0 %v1051
  %v1796 = vpop.f32.mrf.mxu0
  %v1797 = vadd.f32 0.0, %v1796
  %v1798 = vpop.f32.mrf.mxu0
  %v1799 = vadd.f32 0.0, %v1798
  %1800 = vmatmul.bf16.gmra.mxu0 %v1060
  %v1801 = vpop.f32.mrf.mxu0
  %v1802 = vadd.f32 0.0, %v1801
  %v1803 = vpop.f32.mrf.mxu0
  %v1804 = vadd.f32 0.0, %v1803
  %1805 = vmatmul.bf16.gmra.mxu0 %v1069
  %v1806 = vpop.f32.mrf.mxu0
  %v1807 = vadd.f32 0.0, %v1806
  %v1808 = vpop.f32.mrf.mxu0
  %v1809 = vadd.f32 0.0, %v1808
  %1810 = vmatmul.bf16.gmra.mxu0 %v1078
  %v1811 = vpop.f32.mrf.mxu0
  %v1812 = vadd.f32 0.0, %v1811
  %v1813 = vpop.f32.mrf.mxu0
  %v1814 = vadd.f32 0.0, %v1813
  %1815 = vmatmul.bf16.gmra.mxu0 %v1087
  %v1816 = vpop.f32.mrf.mxu0
  %v1817 = vadd.f32 0.0, %v1816
  %v1818 = vpop.f32.mrf.mxu0
  %v1819 = vadd.f32 0.0, %v1818
  %1820 = vmatmul.bf16.gmra.mxu0 %v1096
  %v1821 = vpop.f32.mrf.mxu0
  %v1822 = vadd.f32 0.0, %v1821
  %v1823 = vpop.f32.mrf.mxu0
  %v1824 = vadd.f32 0.0, %v1823
  %1825 = vdwg.mxu0
  %1826 = vmatpush.bf16.msra.mxu0 %v1588
  %1827 = vmatpush.bf16.msra.mxu0 %v1587
  %1828 = vmatpush.bf16.msra.mxu0 %v1586
  %1829 = vmatpush.bf16.msra.mxu0 %v1585
  %1830 = vmatpush.bf16.msra.mxu0 %v1584
  %1831 = vmatpush.bf16.msra.mxu0 %v1583
  %1832 = vmatpush.bf16.msra.mxu0 %v1582
  %1833 = vmatpush.bf16.msra.mxu0 %v1581
  %1834 = vmatmul.bf16.gmra.mxu0 %v926
  %v1835 = vpop.f32.mrf.mxu0
  %v1836 = vadd.f32 %v1727, %v1835
  %v1837 = vpop.f32.mrf.mxu0
  %v1838 = vadd.f32 %v1729, %v1837
  %1839 = vmatmul.bf16.gmra.mxu0 %v935
  %v1840 = vpop.f32.mrf.mxu0
  %v1841 = vadd.f32 %v1732, %v1840
  %v1842 = vpop.f32.mrf.mxu0
  %v1843 = vadd.f32 %v1734, %v1842
  %1844 = vmatmul.bf16.gmra.mxu0 %v944
  %v1845 = vpop.f32.mrf.mxu0
  %v1846 = vadd.f32 %v1737, %v1845
  %v1847 = vpop.f32.mrf.mxu0
  %v1848 = vadd.f32 %v1739, %v1847
  %1849 = vmatmul.bf16.gmra.mxu0 %v953
  %v1850 = vpop.f32.mrf.mxu0
  %v1851 = vadd.f32 %v1742, %v1850
  %v1852 = vpop.f32.mrf.mxu0
  %v1853 = vadd.f32 %v1744, %v1852
  %1854 = vmatmul.bf16.gmra.mxu0 %v962
  %v1855 = vpop.f32.mrf.mxu0
  %v1856 = vadd.f32 %v1747, %v1855
  %v1857 = vpop.f32.mrf.mxu0
  %v1858 = vadd.f32 %v1749, %v1857
  %1859 = vmatmul.bf16.gmra.mxu0 %v971
  %v1860 = vpop.f32.mrf.mxu0
  %v1861 = vadd.f32 %v1752, %v1860
  %v1862 = vpop.f32.mrf.mxu0
  %v1863 = vadd.f32 %v1754, %v1862
  %1864 = vmatmul.bf16.gmra.mxu0 %v980
  %v1865 = vpop.f32.mrf.mxu0
  %v1866 = vadd.f32 %v1757, %v1865
  %v1867 = vpop.f32.mrf.mxu0
  %v1868 = vadd.f32 %v1759, %v1867
  %1869 = vmatmul.bf16.gmra.mxu0 %v989
  %v1870 = vpop.f32.mrf.mxu0
  %v1871 = vadd.f32 %v1762, %v1870
  %v1872 = vpop.f32.mrf.mxu0
  %v1873 = vadd.f32 %v1764, %v1872
  %1874 = vmatmul.bf16.gmra.mxu0 %v998
  %v1875 = vpop.f32.mrf.mxu0
  %v1876 = vadd.f32 %v1767, %v1875
  %v1877 = vpop.f32.mrf.mxu0
  %v1878 = vadd.f32 %v1769, %v1877
  %1879 = vmatmul.bf16.gmra.mxu0 %v1007
  %v1880 = vpop.f32.mrf.mxu0
  %v1881 = vadd.f32 %v1772, %v1880
  %v1882 = vpop.f32.mrf.mxu0
  %v1883 = vadd.f32 %v1774, %v1882
  %1884 = vmatmul.bf16.gmra.mxu0 %v1016
  %v1885 = vpop.f32.mrf.mxu0
  %v1886 = vadd.f32 %v1777, %v1885
  %v1887 = vpop.f32.mrf.mxu0
  %v1888 = vadd.f32 %v1779, %v1887
  %1889 = vmatmul.bf16.gmra.mxu0 %v1025
  %v1890 = vpop.f32.mrf.mxu0
  %v1891 = vadd.f32 %v1782, %v1890
  %v1892 = vpop.f32.mrf.mxu0
  %v1893 = vadd.f32 %v1784, %v1892
  %1894 = vmatmul.bf16.gmra.mxu0 %v1034
  %v1895 = vpop.f32.mrf.mxu0
  %v1896 = vadd.f32 %v1787, %v1895
  %v1897 = vpop.f32.mrf.mxu0
  %v1898 = vadd.f32 %v1789, %v1897
  %1899 = vmatmul.bf16.gmra.mxu0 %v1043
  %v1900 = vpop.f32.mrf.mxu0
  %v1901 = vadd.f32 %v1792, %v1900
  %v1902 = vpop.f32.mrf.mxu0
  %v1903 = vadd.f32 %v1794, %v1902
  %1904 = vmatmul.bf16.gmra.mxu0 %v1052
  %v1905 = vpop.f32.mrf.mxu0
  %v1906 = vadd.f32 %v1797, %v1905
  %v1907 = vpop.f32.mrf.mxu0
  %v1908 = vadd.f32 %v1799, %v1907
  %1909 = vmatmul.bf16.gmra.mxu0 %v1061
  %v1910 = vpop.f32.mrf.mxu0
  %v1911 = vadd.f32 %v1802, %v1910
  %v1912 = vpop.f32.mrf.mxu0
  %v1913 = vadd.f32 %v1804, %v1912
  %1914 = vmatmul.bf16.gmra.mxu0 %v1070
  %v1915 = vpop.f32.mrf.mxu0
  %v1916 = vadd.f32 %v1807, %v1915
  %v1917 = vpop.f32.mrf.mxu0
  %v1918 = vadd.f32 %v1809, %v1917
  %1919 = vmatmul.bf16.gmra.mxu0 %v1079
  %v1920 = vpop.f32.mrf.mxu0
  %v1921 = vadd.f32 %v1812, %v1920
  %v1922 = vpop.f32.mrf.mxu0
  %v1923 = vadd.f32 %v1814, %v1922
  %1924 = vmatmul.bf16.gmra.mxu0 %v1088
  %v1925 = vpop.f32.mrf.mxu0
  %v1926 = vadd.f32 %v1817, %v1925
  %v1927 = vpop.f32.mrf.mxu0
  %v1928 = vadd.f32 %v1819, %v1927
  %1929 = vmatmul.bf16.gmra.mxu0 %v1097
  %v1930 = vpop.f32.mrf.mxu0
  %v1931 = vadd.f32 %v1822, %v1930
  %v1932 = vpop.f32.mrf.mxu0
  %v1933 = vadd.f32 %v1824, %v1932
  %1934 = vdwg.mxu0
  %1935 = vmatpush.bf16.msra.mxu0 %v1596
  %1936 = vmatpush.bf16.msra.mxu0 %v1595
  %1937 = vmatpush.bf16.msra.mxu0 %v1594
  %1938 = vmatpush.bf16.msra.mxu0 %v1593
  %1939 = vmatpush.bf16.msra.mxu0 %v1592
  %1940 = vmatpush.bf16.msra.mxu0 %v1591
  %1941 = vmatpush.bf16.msra.mxu0 %v1590
  %1942 = vmatpush.bf16.msra.mxu0 %v1589
  %1943 = vmatmul.bf16.gmra.mxu0 %v927
  %v1944 = vpop.f32.mrf.mxu0
  %v1945 = vadd.f32 %v1836, %v1944
  %v1946 = vpop.f32.mrf.mxu0
  %v1947 = vadd.f32 %v1838, %v1946
  %1948 = vmatmul.bf16.gmra.mxu0 %v936
  %v1949 = vpop.f32.mrf.mxu0
  %v1950 = vadd.f32 %v1841, %v1949
  %v1951 = vpop.f32.mrf.mxu0
  %v1952 = vadd.f32 %v1843, %v1951
  %1953 = vmatmul.bf16.gmra.mxu0 %v945
  %v1954 = vpop.f32.mrf.mxu0
  %v1955 = vadd.f32 %v1846, %v1954
  %v1956 = vpop.f32.mrf.mxu0
  %v1957 = vadd.f32 %v1848, %v1956
  %1958 = vmatmul.bf16.gmra.mxu0 %v954
  %v1959 = vpop.f32.mrf.mxu0
  %v1960 = vadd.f32 %v1851, %v1959
  %v1961 = vpop.f32.mrf.mxu0
  %v1962 = vadd.f32 %v1853, %v1961
  %1963 = vmatmul.bf16.gmra.mxu0 %v963
  %v1964 = vpop.f32.mrf.mxu0
  %v1965 = vadd.f32 %v1856, %v1964
  %v1966 = vpop.f32.mrf.mxu0
  %v1967 = vadd.f32 %v1858, %v1966
  %1968 = vmatmul.bf16.gmra.mxu0 %v972
  %v1969 = vpop.f32.mrf.mxu0
  %v1970 = vadd.f32 %v1861, %v1969
  %v1971 = vpop.f32.mrf.mxu0
  %v1972 = vadd.f32 %v1863, %v1971
  %1973 = vmatmul.bf16.gmra.mxu0 %v981
  %v1974 = vpop.f32.mrf.mxu0
  %v1975 = vadd.f32 %v1866, %v1974
  %v1976 = vpop.f32.mrf.mxu0
  %v1977 = vadd.f32 %v1868, %v1976
  %1978 = vmatmul.bf16.gmra.mxu0 %v990
  %v1979 = vpop.f32.mrf.mxu0
  %v1980 = vadd.f32 %v1871, %v1979
  %v1981 = vpop.f32.mrf.mxu0
  %v1982 = vadd.f32 %v1873, %v1981
  %1983 = vmatmul.bf16.gmra.mxu0 %v999
  %v1984 = vpop.f32.mrf.mxu0
  %v1985 = vadd.f32 %v1876, %v1984
  %v1986 = vpop.f32.mrf.mxu0
  %v1987 = vadd.f32 %v1878, %v1986
  %1988 = vmatmul.bf16.gmra.mxu0 %v1008
  %v1989 = vpop.f32.mrf.mxu0
  %v1990 = vadd.f32 %v1881, %v1989
  %v1991 = vpop.f32.mrf.mxu0
  %v1992 = vadd.f32 %v1883, %v1991
  %1993 = vmatmul.bf16.gmra.mxu0 %v1017
  %v1994 = vpop.f32.mrf.mxu0
  %v1995 = vadd.f32 %v1886, %v1994
  %v1996 = vpop.f32.mrf.mxu0
  %v1997 = vadd.f32 %v1888, %v1996
  %1998 = vmatmul.bf16.gmra.mxu0 %v1026
  %v1999 = vpop.f32.mrf.mxu0
  %v2000 = vadd.f32 %v1891, %v1999
  %v2001 = vpop.f32.mrf.mxu0
  %v2002 = vadd.f32 %v1893, %v2001
  %2003 = vmatmul.bf16.gmra.mxu0 %v1035
  %v2004 = vpop.f32.mrf.mxu0
  %v2005 = vadd.f32 %v1896, %v2004
  %v2006 = vpop.f32.mrf.mxu0
  %v2007 = vadd.f32 %v1898, %v2006
  %2008 = vmatmul.bf16.gmra.mxu0 %v1044
  %v2009 = vpop.f32.mrf.mxu0
  %v2010 = vadd.f32 %v1901, %v2009
  %v2011 = vpop.f32.mrf.mxu0
  %v2012 = vadd.f32 %v1903, %v2011
  %2013 = vmatmul.bf16.gmra.mxu0 %v1053
  %v2014 = vpop.f32.mrf.mxu0
  %v2015 = vadd.f32 %v1906, %v2014
  %v2016 = vpop.f32.mrf.mxu0
  %v2017 = vadd.f32 %v1908, %v2016
  %2018 = vmatmul.bf16.gmra.mxu0 %v1062
  %v2019 = vpop.f32.mrf.mxu0
  %v2020 = vadd.f32 %v1911, %v2019
  %v2021 = vpop.f32.mrf.mxu0
  %v2022 = vadd.f32 %v1913, %v2021
  %2023 = vmatmul.bf16.gmra.mxu0 %v1071
  %v2024 = vpop.f32.mrf.mxu0
  %v2025 = vadd.f32 %v1916, %v2024
  %v2026 = vpop.f32.mrf.mxu0
  %v2027 = vadd.f32 %v1918, %v2026
  %2028 = vmatmul.bf16.gmra.mxu0 %v1080
  %v2029 = vpop.f32.mrf.mxu0
  %v2030 = vadd.f32 %v1921, %v2029
  %v2031 = vpop.f32.mrf.mxu0
  %v2032 = vadd.f32 %v1923, %v2031
  %2033 = vmatmul.bf16.gmra.mxu0 %v1089
  %v2034 = vpop.f32.mrf.mxu0
  %v2035 = vadd.f32 %v1926, %v2034
  %v2036 = vpop.f32.mrf.mxu0
  %v2037 = vadd.f32 %v1928, %v2036
  %2038 = vmatmul.bf16.gmra.mxu0 %v1098
  %v2039 = vpop.f32.mrf.mxu0
  %v2040 = vadd.f32 %v1931, %v2039
  %v2041 = vpop.f32.mrf.mxu0
  %v2042 = vadd.f32 %v1933, %v2041
  %2043 = vdwg.mxu0
  %2044 = vmatpush.bf16.msra.mxu0 %v1604
  %2045 = vmatpush.bf16.msra.mxu0 %v1603
  %2046 = vmatpush.bf16.msra.mxu0 %v1602
  %2047 = vmatpush.bf16.msra.mxu0 %v1601
  %2048 = vmatpush.bf16.msra.mxu0 %v1600
  %2049 = vmatpush.bf16.msra.mxu0 %v1599
  %2050 = vmatpush.bf16.msra.mxu0 %v1598
  %2051 = vmatpush.bf16.msra.mxu0 %v1597
  %2052 = vmatmul.bf16.gmra.mxu0 %v928
  %v2053 = vpop.f32.mrf.mxu0
  %v2054 = vadd.f32 %v1945, %v2053
  %v2055 = vpop.f32.mrf.mxu0
  %v2056 = vadd.f32 %v1947, %v2055
  %2057 = vmatmul.bf16.gmra.mxu0 %v937
  %v2058 = vpop.f32.mrf.mxu0
  %v2059 = vadd.f32 %v1950, %v2058
  %v2060 = vpop.f32.mrf.mxu0
  %v2061 = vadd.f32 %v1952, %v2060
  %2062 = vmatmul.bf16.gmra.mxu0 %v946
  %v2063 = vpop.f32.mrf.mxu0
  %v2064 = vadd.f32 %v1955, %v2063
  %v2065 = vpop.f32.mrf.mxu0
  %v2066 = vadd.f32 %v1957, %v2065
  %2067 = vmatmul.bf16.gmra.mxu0 %v955
  %v2068 = vpop.f32.mrf.mxu0
  %v2069 = vadd.f32 %v1960, %v2068
  %v2070 = vpop.f32.mrf.mxu0
  %v2071 = vadd.f32 %v1962, %v2070
  %2072 = vmatmul.bf16.gmra.mxu0 %v964
  %v2073 = vpop.f32.mrf.mxu0
  %v2074 = vadd.f32 %v1965, %v2073
  %v2075 = vpop.f32.mrf.mxu0
  %v2076 = vadd.f32 %v1967, %v2075
  %2077 = vmatmul.bf16.gmra.mxu0 %v973
  %v2078 = vpop.f32.mrf.mxu0
  %v2079 = vadd.f32 %v1970, %v2078
  %v2080 = vpop.f32.mrf.mxu0
  %v2081 = vadd.f32 %v1972, %v2080
  %2082 = vmatmul.bf16.gmra.mxu0 %v982
  %v2083 = vpop.f32.mrf.mxu0
  %v2084 = vadd.f32 %v1975, %v2083
  %v2085 = vpop.f32.mrf.mxu0
  %v2086 = vadd.f32 %v1977, %v2085
  %2087 = vmatmul.bf16.gmra.mxu0 %v991
  %v2088 = vpop.f32.mrf.mxu0
  %v2089 = vadd.f32 %v1980, %v2088
  %v2090 = vpop.f32.mrf.mxu0
  %v2091 = vadd.f32 %v1982, %v2090
  %2092 = vmatmul.bf16.gmra.mxu0 %v1000
  %v2093 = vpop.f32.mrf.mxu0
  %v2094 = vadd.f32 %v1985, %v2093
  %v2095 = vpop.f32.mrf.mxu0
  %v2096 = vadd.f32 %v1987, %v2095
  %2097 = vmatmul.bf16.gmra.mxu0 %v1009
  %v2098 = vpop.f32.mrf.mxu0
  %v2099 = vadd.f32 %v1990, %v2098
  %v2100 = vpop.f32.mrf.mxu0
  %v2101 = vadd.f32 %v1992, %v2100
  %2102 = vmatmul.bf16.gmra.mxu0 %v1018
  %v2103 = vpop.f32.mrf.mxu0
  %v2104 = vadd.f32 %v1995, %v2103
  %v2105 = vpop.f32.mrf.mxu0
  %v2106 = vadd.f32 %v1997, %v2105
  %2107 = vmatmul.bf16.gmra.mxu0 %v1027
  %v2108 = vpop.f32.mrf.mxu0
  %v2109 = vadd.f32 %v2000, %v2108
  %v2110 = vpop.f32.mrf.mxu0
  %v2111 = vadd.f32 %v2002, %v2110
  %2112 = vmatmul.bf16.gmra.mxu0 %v1036
  %v2113 = vpop.f32.mrf.mxu0
  %v2114 = vadd.f32 %v2005, %v2113
  %v2115 = vpop.f32.mrf.mxu0
  %v2116 = vadd.f32 %v2007, %v2115
  %2117 = vmatmul.bf16.gmra.mxu0 %v1045
  %v2118 = vpop.f32.mrf.mxu0
  %v2119 = vadd.f32 %v2010, %v2118
  %v2120 = vpop.f32.mrf.mxu0
  %v2121 = vadd.f32 %v2012, %v2120
  %2122 = vmatmul.bf16.gmra.mxu0 %v1054
  %v2123 = vpop.f32.mrf.mxu0
  %v2124 = vadd.f32 %v2015, %v2123
  %v2125 = vpop.f32.mrf.mxu0
  %v2126 = vadd.f32 %v2017, %v2125
  %2127 = vmatmul.bf16.gmra.mxu0 %v1063
  %v2128 = vpop.f32.mrf.mxu0
  %v2129 = vadd.f32 %v2020, %v2128
  %v2130 = vpop.f32.mrf.mxu0
  %v2131 = vadd.f32 %v2022, %v2130
  %2132 = vmatmul.bf16.gmra.mxu0 %v1072
  %v2133 = vpop.f32.mrf.mxu0
  %v2134 = vadd.f32 %v2025, %v2133
  %v2135 = vpop.f32.mrf.mxu0
  %v2136 = vadd.f32 %v2027, %v2135
  %2137 = vmatmul.bf16.gmra.mxu0 %v1081
  %v2138 = vpop.f32.mrf.mxu0
  %v2139 = vadd.f32 %v2030, %v2138
  %v2140 = vpop.f32.mrf.mxu0
  %v2141 = vadd.f32 %v2032, %v2140
  %2142 = vmatmul.bf16.gmra.mxu0 %v1090
  %v2143 = vpop.f32.mrf.mxu0
  %v2144 = vadd.f32 %v2035, %v2143
  %v2145 = vpop.f32.mrf.mxu0
  %v2146 = vadd.f32 %v2037, %v2145
  %2147 = vmatmul.bf16.gmra.mxu0 %v1099
  %v2148 = vpop.f32.mrf.mxu0
  %v2149 = vadd.f32 %v2040, %v2148
  %v2150 = vpop.f32.mrf.mxu0
  %v2151 = vadd.f32 %v2042, %v2150
  %2152 = vdwg.mxu0
  %2153 = vmatpush.bf16.msra.mxu0 %v1612
  %2154 = vmatpush.bf16.msra.mxu0 %v1611
  %2155 = vmatpush.bf16.msra.mxu0 %v1610
  %2156 = vmatpush.bf16.msra.mxu0 %v1609
  %2157 = vmatpush.bf16.msra.mxu0 %v1608
  %2158 = vmatpush.bf16.msra.mxu0 %v1607
  %2159 = vmatpush.bf16.msra.mxu0 %v1606
  %2160 = vmatpush.bf16.msra.mxu0 %v1605
  %2161 = vmatmul.bf16.gmra.mxu0 %v929
  %v2162 = vpop.f32.mrf.mxu0
  %v2163 = vadd.f32 %v2054, %v2162
  %v2164 = vpop.f32.mrf.mxu0
  %v2165 = vadd.f32 %v2056, %v2164
  %2166 = vmatmul.bf16.gmra.mxu0 %v938
  %v2167 = vpop.f32.mrf.mxu0
  %v2168 = vadd.f32 %v2059, %v2167
  %v2169 = vpop.f32.mrf.mxu0
  %v2170 = vadd.f32 %v2061, %v2169
  %2171 = vmatmul.bf16.gmra.mxu0 %v947
  %v2172 = vpop.f32.mrf.mxu0
  %v2173 = vadd.f32 %v2064, %v2172
  %v2174 = vpop.f32.mrf.mxu0
  %v2175 = vadd.f32 %v2066, %v2174
  %2176 = vmatmul.bf16.gmra.mxu0 %v956
  %v2177 = vpop.f32.mrf.mxu0
  %v2178 = vadd.f32 %v2069, %v2177
  %v2179 = vpop.f32.mrf.mxu0
  %v2180 = vadd.f32 %v2071, %v2179
  %2181 = vmatmul.bf16.gmra.mxu0 %v965
  %v2182 = vpop.f32.mrf.mxu0
  %v2183 = vadd.f32 %v2074, %v2182
  %v2184 = vpop.f32.mrf.mxu0
  %v2185 = vadd.f32 %v2076, %v2184
  %2186 = vmatmul.bf16.gmra.mxu0 %v974
  %v2187 = vpop.f32.mrf.mxu0
  %v2188 = vadd.f32 %v2079, %v2187
  %v2189 = vpop.f32.mrf.mxu0
  %v2190 = vadd.f32 %v2081, %v2189
  %2191 = vmatmul.bf16.gmra.mxu0 %v983
  %v2192 = vpop.f32.mrf.mxu0
  %v2193 = vadd.f32 %v2084, %v2192
  %v2194 = vpop.f32.mrf.mxu0
  %v2195 = vadd.f32 %v2086, %v2194
  %2196 = vmatmul.bf16.gmra.mxu0 %v992
  %v2197 = vpop.f32.mrf.mxu0
  %v2198 = vadd.f32 %v2089, %v2197
  %v2199 = vpop.f32.mrf.mxu0
  %v2200 = vadd.f32 %v2091, %v2199
  %2201 = vmatmul.bf16.gmra.mxu0 %v1001
  %v2202 = vpop.f32.mrf.mxu0
  %v2203 = vadd.f32 %v2094, %v2202
  %v2204 = vpop.f32.mrf.mxu0
  %v2205 = vadd.f32 %v2096, %v2204
  %2206 = vmatmul.bf16.gmra.mxu0 %v1010
  %v2207 = vpop.f32.mrf.mxu0
  %v2208 = vadd.f32 %v2099, %v2207
  %v2209 = vpop.f32.mrf.mxu0
  %v2210 = vadd.f32 %v2101, %v2209
  %2211 = vmatmul.bf16.gmra.mxu0 %v1019
  %v2212 = vpop.f32.mrf.mxu0
  %v2213 = vadd.f32 %v2104, %v2212
  %v2214 = vpop.f32.mrf.mxu0
  %v2215 = vadd.f32 %v2106, %v2214
  %2216 = vmatmul.bf16.gmra.mxu0 %v1028
  %v2217 = vpop.f32.mrf.mxu0
  %v2218 = vadd.f32 %v2109, %v2217
  %v2219 = vpop.f32.mrf.mxu0
  %v2220 = vadd.f32 %v2111, %v2219
  %2221 = vmatmul.bf16.gmra.mxu0 %v1037
  %v2222 = vpop.f32.mrf.mxu0
  %v2223 = vadd.f32 %v2114, %v2222
  %v2224 = vpop.f32.mrf.mxu0
  %v2225 = vadd.f32 %v2116, %v2224
  %2226 = vmatmul.bf16.gmra.mxu0 %v1046
  %v2227 = vpop.f32.mrf.mxu0
  %v2228 = vadd.f32 %v2119, %v2227
  %v2229 = vpop.f32.mrf.mxu0
  %v2230 = vadd.f32 %v2121, %v2229
  %2231 = vmatmul.bf16.gmra.mxu0 %v1055
  %v2232 = vpop.f32.mrf.mxu0
  %v2233 = vadd.f32 %v2124, %v2232
  %v2234 = vpop.f32.mrf.mxu0
  %v2235 = vadd.f32 %v2126, %v2234
  %2236 = vmatmul.bf16.gmra.mxu0 %v1064
  %v2237 = vpop.f32.mrf.mxu0
  %v2238 = vadd.f32 %v2129, %v2237
  %v2239 = vpop.f32.mrf.mxu0
  %v2240 = vadd.f32 %v2131, %v2239
  %2241 = vmatmul.bf16.gmra.mxu0 %v1073
  %v2242 = vpop.f32.mrf.mxu0
  %v2243 = vadd.f32 %v2134, %v2242
  %v2244 = vpop.f32.mrf.mxu0
  %v2245 = vadd.f32 %v2136, %v2244
  %2246 = vmatmul.bf16.gmra.mxu0 %v1082
  %v2247 = vpop.f32.mrf.mxu0
  %v2248 = vadd.f32 %v2139, %v2247
  %v2249 = vpop.f32.mrf.mxu0
  %v2250 = vadd.f32 %v2141, %v2249
  %2251 = vmatmul.bf16.gmra.mxu0 %v1091
  %v2252 = vpop.f32.mrf.mxu0
  %v2253 = vadd.f32 %v2144, %v2252
  %v2254 = vpop.f32.mrf.mxu0
  %v2255 = vadd.f32 %v2146, %v2254
  %2256 = vmatmul.bf16.gmra.mxu0 %v1100
  %v2257 = vpop.f32.mrf.mxu0
  %v2258 = vadd.f32 %v2149, %v2257
  %v2259 = vpop.f32.mrf.mxu0
  %v2260 = vadd.f32 %v2151, %v2259
  %2261 = vdwg.mxu0
  %2262 = vmatpush.bf16.msra.mxu0 %v1620
  %2263 = vmatpush.bf16.msra.mxu0 %v1619
  %2264 = vmatpush.bf16.msra.mxu0 %v1618
  %2265 = vmatpush.bf16.msra.mxu0 %v1617
  %2266 = vmatpush.bf16.msra.mxu0 %v1616
  %2267 = vmatpush.bf16.msra.mxu0 %v1615
  %2268 = vmatpush.bf16.msra.mxu0 %v1614
  %2269 = vmatpush.bf16.msra.mxu0 %v1613
  %2270 = vmatmul.bf16.gmra.mxu0 %v930
  %v2271 = vpop.f32.mrf.mxu0
  %v2272 = vadd.f32 %v2163, %v2271
  %v2273 = vpop.f32.mrf.mxu0
  %v2274 = vadd.f32 %v2165, %v2273
  %2275 = vmatmul.bf16.gmra.mxu0 %v939
  %v2276 = vpop.f32.mrf.mxu0
  %v2277 = vadd.f32 %v2168, %v2276
  %v2278 = vpop.f32.mrf.mxu0
  %v2279 = vadd.f32 %v2170, %v2278
  %2280 = vmatmul.bf16.gmra.mxu0 %v948
  %v2281 = vpop.f32.mrf.mxu0
  %v2282 = vadd.f32 %v2173, %v2281
  %v2283 = vpop.f32.mrf.mxu0
  %v2284 = vadd.f32 %v2175, %v2283
  %2285 = vmatmul.bf16.gmra.mxu0 %v957
  %v2286 = vpop.f32.mrf.mxu0
  %v2287 = vadd.f32 %v2178, %v2286
  %v2288 = vpop.f32.mrf.mxu0
  %v2289 = vadd.f32 %v2180, %v2288
  %2290 = vmatmul.bf16.gmra.mxu0 %v966
  %v2291 = vpop.f32.mrf.mxu0
  %v2292 = vadd.f32 %v2183, %v2291
  %v2293 = vpop.f32.mrf.mxu0
  %v2294 = vadd.f32 %v2185, %v2293
  %2295 = vmatmul.bf16.gmra.mxu0 %v975
  %v2296 = vpop.f32.mrf.mxu0
  %v2297 = vadd.f32 %v2188, %v2296
  %v2298 = vpop.f32.mrf.mxu0
  %v2299 = vadd.f32 %v2190, %v2298
  %2300 = vmatmul.bf16.gmra.mxu0 %v984
  %v2301 = vpop.f32.mrf.mxu0
  %v2302 = vadd.f32 %v2193, %v2301
  %v2303 = vpop.f32.mrf.mxu0
  %v2304 = vadd.f32 %v2195, %v2303
  %2305 = vmatmul.bf16.gmra.mxu0 %v993
  %v2306 = vpop.f32.mrf.mxu0
  %v2307 = vadd.f32 %v2198, %v2306
  %v2308 = vpop.f32.mrf.mxu0
  %v2309 = vadd.f32 %v2200, %v2308
  %2310 = vmatmul.bf16.gmra.mxu0 %v1002
  %v2311 = vpop.f32.mrf.mxu0
  %v2312 = vadd.f32 %v2203, %v2311
  %v2313 = vpop.f32.mrf.mxu0
  %v2314 = vadd.f32 %v2205, %v2313
  %2315 = vmatmul.bf16.gmra.mxu0 %v1011
  %v2316 = vpop.f32.mrf.mxu0
  %v2317 = vadd.f32 %v2208, %v2316
  %v2318 = vpop.f32.mrf.mxu0
  %v2319 = vadd.f32 %v2210, %v2318
  %2320 = vmatmul.bf16.gmra.mxu0 %v1020
  %v2321 = vpop.f32.mrf.mxu0
  %v2322 = vadd.f32 %v2213, %v2321
  %v2323 = vpop.f32.mrf.mxu0
  %v2324 = vadd.f32 %v2215, %v2323
  %2325 = vmatmul.bf16.gmra.mxu0 %v1029
  %v2326 = vpop.f32.mrf.mxu0
  %v2327 = vadd.f32 %v2218, %v2326
  %v2328 = vpop.f32.mrf.mxu0
  %v2329 = vadd.f32 %v2220, %v2328
  %2330 = vmatmul.bf16.gmra.mxu0 %v1038
  %v2331 = vpop.f32.mrf.mxu0
  %v2332 = vadd.f32 %v2223, %v2331
  %v2333 = vpop.f32.mrf.mxu0
  %v2334 = vadd.f32 %v2225, %v2333
  %2335 = vmatmul.bf16.gmra.mxu0 %v1047
  %v2336 = vpop.f32.mrf.mxu0
  %v2337 = vadd.f32 %v2228, %v2336
  %v2338 = vpop.f32.mrf.mxu0
  %v2339 = vadd.f32 %v2230, %v2338
  %2340 = vmatmul.bf16.gmra.mxu0 %v1056
  %v2341 = vpop.f32.mrf.mxu0
  %v2342 = vadd.f32 %v2233, %v2341
  %v2343 = vpop.f32.mrf.mxu0
  %v2344 = vadd.f32 %v2235, %v2343
  %2345 = vmatmul.bf16.gmra.mxu0 %v1065
  %v2346 = vpop.f32.mrf.mxu0
  %v2347 = vadd.f32 %v2238, %v2346
  %v2348 = vpop.f32.mrf.mxu0
  %v2349 = vadd.f32 %v2240, %v2348
  %2350 = vmatmul.bf16.gmra.mxu0 %v1074
  %v2351 = vpop.f32.mrf.mxu0
  %v2352 = vadd.f32 %v2243, %v2351
  %v2353 = vpop.f32.mrf.mxu0
  %v2354 = vadd.f32 %v2245, %v2353
  %2355 = vmatmul.bf16.gmra.mxu0 %v1083
  %v2356 = vpop.f32.mrf.mxu0
  %v2357 = vadd.f32 %v2248, %v2356
  %v2358 = vpop.f32.mrf.mxu0
  %v2359 = vadd.f32 %v2250, %v2358
  %2360 = vmatmul.bf16.gmra.mxu0 %v1092
  %v2361 = vpop.f32.mrf.mxu0
  %v2362 = vadd.f32 %v2253, %v2361
  %v2363 = vpop.f32.mrf.mxu0
  %v2364 = vadd.f32 %v2255, %v2363
  %2365 = vmatmul.bf16.gmra.mxu0 %v1101
  %v2366 = vpop.f32.mrf.mxu0
  %v2367 = vadd.f32 %v2258, %v2366
  %v2368 = vpop.f32.mrf.mxu0
  %v2369 = vadd.f32 %v2260, %v2368
  %2370 = vdwg.mxu0
  %2371 = vmatpush.bf16.msra.mxu0 %v1628
  %2372 = vmatpush.bf16.msra.mxu0 %v1627
  %2373 = vmatpush.bf16.msra.mxu0 %v1626
  %2374 = vmatpush.bf16.msra.mxu0 %v1625
  %2375 = vmatpush.bf16.msra.mxu0 %v1624
  %2376 = vmatpush.bf16.msra.mxu0 %v1623
  %2377 = vmatpush.bf16.msra.mxu0 %v1622
  %2378 = vmatpush.bf16.msra.mxu0 %v1621
  %2379 = vmatmul.bf16.gmra.mxu0 %v931
  %v2380 = vpop.f32.mrf.mxu0
  %v2381 = vadd.f32 %v2272, %v2380
  %v2382 = vpop.f32.mrf.mxu0
  %v2383 = vadd.f32 %v2274, %v2382
  %2384 = vmatmul.bf16.gmra.mxu0 %v940
  %v2385 = vpop.f32.mrf.mxu0
  %v2386 = vadd.f32 %v2277, %v2385
  %v2387 = vpop.f32.mrf.mxu0
  %v2388 = vadd.f32 %v2279, %v2387
  %2389 = vmatmul.bf16.gmra.mxu0 %v949
  %v2390 = vpop.f32.mrf.mxu0
  %v2391 = vadd.f32 %v2282, %v2390
  %v2392 = vpop.f32.mrf.mxu0
  %v2393 = vadd.f32 %v2284, %v2392
  %2394 = vmatmul.bf16.gmra.mxu0 %v958
  %v2395 = vpop.f32.mrf.mxu0
  %v2396 = vadd.f32 %v2287, %v2395
  %v2397 = vpop.f32.mrf.mxu0
  %v2398 = vadd.f32 %v2289, %v2397
  %2399 = vmatmul.bf16.gmra.mxu0 %v967
  %v2400 = vpop.f32.mrf.mxu0
  %v2401 = vadd.f32 %v2292, %v2400
  %v2402 = vpop.f32.mrf.mxu0
  %v2403 = vadd.f32 %v2294, %v2402
  %2404 = vmatmul.bf16.gmra.mxu0 %v976
  %v2405 = vpop.f32.mrf.mxu0
  %v2406 = vadd.f32 %v2297, %v2405
  %v2407 = vpop.f32.mrf.mxu0
  %v2408 = vadd.f32 %v2299, %v2407
  %2409 = vmatmul.bf16.gmra.mxu0 %v985
  %v2410 = vpop.f32.mrf.mxu0
  %v2411 = vadd.f32 %v2302, %v2410
  %v2412 = vpop.f32.mrf.mxu0
  %v2413 = vadd.f32 %v2304, %v2412
  %2414 = vmatmul.bf16.gmra.mxu0 %v994
  %v2415 = vpop.f32.mrf.mxu0
  %v2416 = vadd.f32 %v2307, %v2415
  %v2417 = vpop.f32.mrf.mxu0
  %v2418 = vadd.f32 %v2309, %v2417
  %2419 = vmatmul.bf16.gmra.mxu0 %v1003
  %v2420 = vpop.f32.mrf.mxu0
  %v2421 = vadd.f32 %v2312, %v2420
  %v2422 = vpop.f32.mrf.mxu0
  %v2423 = vadd.f32 %v2314, %v2422
  %2424 = vmatmul.bf16.gmra.mxu0 %v1012
  %v2425 = vpop.f32.mrf.mxu0
  %v2426 = vadd.f32 %v2317, %v2425
  %v2427 = vpop.f32.mrf.mxu0
  %v2428 = vadd.f32 %v2319, %v2427
  %2429 = vmatmul.bf16.gmra.mxu0 %v1021
  %v2430 = vpop.f32.mrf.mxu0
  %v2431 = vadd.f32 %v2322, %v2430
  %v2432 = vpop.f32.mrf.mxu0
  %v2433 = vadd.f32 %v2324, %v2432
  %2434 = vmatmul.bf16.gmra.mxu0 %v1030
  %v2435 = vpop.f32.mrf.mxu0
  %v2436 = vadd.f32 %v2327, %v2435
  %v2437 = vpop.f32.mrf.mxu0
  %v2438 = vadd.f32 %v2329, %v2437
  %2439 = vmatmul.bf16.gmra.mxu0 %v1039
  %v2440 = vpop.f32.mrf.mxu0
  %v2441 = vadd.f32 %v2332, %v2440
  %v2442 = vpop.f32.mrf.mxu0
  %v2443 = vadd.f32 %v2334, %v2442
  %2444 = vmatmul.bf16.gmra.mxu0 %v1048
  %v2445 = vpop.f32.mrf.mxu0
  %v2446 = vadd.f32 %v2337, %v2445
  %v2447 = vpop.f32.mrf.mxu0
  %v2448 = vadd.f32 %v2339, %v2447
  %2449 = vmatmul.bf16.gmra.mxu0 %v1057
  %v2450 = vpop.f32.mrf.mxu0
  %v2451 = vadd.f32 %v2342, %v2450
  %v2452 = vpop.f32.mrf.mxu0
  %v2453 = vadd.f32 %v2344, %v2452
  %2454 = vmatmul.bf16.gmra.mxu0 %v1066
  %v2455 = vpop.f32.mrf.mxu0
  %v2456 = vadd.f32 %v2347, %v2455
  %v2457 = vpop.f32.mrf.mxu0
  %v2458 = vadd.f32 %v2349, %v2457
  %2459 = vmatmul.bf16.gmra.mxu0 %v1075
  %v2460 = vpop.f32.mrf.mxu0
  %v2461 = vadd.f32 %v2352, %v2460
  %v2462 = vpop.f32.mrf.mxu0
  %v2463 = vadd.f32 %v2354, %v2462
  %2464 = vmatmul.bf16.gmra.mxu0 %v1084
  %v2465 = vpop.f32.mrf.mxu0
  %v2466 = vadd.f32 %v2357, %v2465
  %v2467 = vpop.f32.mrf.mxu0
  %v2468 = vadd.f32 %v2359, %v2467
  %2469 = vmatmul.bf16.gmra.mxu0 %v1093
  %v2470 = vpop.f32.mrf.mxu0
  %v2471 = vadd.f32 %v2362, %v2470
  %v2472 = vpop.f32.mrf.mxu0
  %v2473 = vadd.f32 %v2364, %v2472
  %2474 = vmatmul.bf16.gmra.mxu0 %v1102
  %v2475 = vpop.f32.mrf.mxu0
  %v2476 = vadd.f32 %v2367, %v2475
  %v2477 = vpop.f32.mrf.mxu0
  %v2478 = vadd.f32 %v2369, %v2477
  %2479 = vdwg.mxu0
  %2480 = vmatpush.bf16.msra.mxu0 %v1636
  %2481 = vmatpush.bf16.msra.mxu0 %v1635
  %2482 = vmatpush.bf16.msra.mxu0 %v1634
  %2483 = vmatpush.bf16.msra.mxu0 %v1633
  %2484 = vmatpush.bf16.msra.mxu0 %v1632
  %2485 = vmatpush.bf16.msra.mxu0 %v1631
  %2486 = vmatpush.bf16.msra.mxu0 %v1630
  %2487 = vmatpush.bf16.msra.mxu0 %v1629
  %2488 = vmatmul.bf16.gmra.mxu0 %v932
  %v2489 = vpop.f32.mrf.mxu0
  %v2490 = vadd.f32 %v2381, %v2489
  %v2491 = vpop.f32.mrf.mxu0
  %v2492 = vadd.f32 %v2383, %v2491
  %2493 = vmatmul.bf16.gmra.mxu0 %v941
  %v2494 = vpop.f32.mrf.mxu0
  %v2495 = vadd.f32 %v2386, %v2494
  %v2496 = vpop.f32.mrf.mxu0
  %v2497 = vadd.f32 %v2388, %v2496
  %2498 = vmatmul.bf16.gmra.mxu0 %v950
  %v2499 = vpop.f32.mrf.mxu0
  %v2500 = vadd.f32 %v2391, %v2499
  %v2501 = vpop.f32.mrf.mxu0
  %v2502 = vadd.f32 %v2393, %v2501
  %2503 = vmatmul.bf16.gmra.mxu0 %v959
  %v2504 = vpop.f32.mrf.mxu0
  %v2505 = vadd.f32 %v2396, %v2504
  %v2506 = vpop.f32.mrf.mxu0
  %v2507 = vadd.f32 %v2398, %v2506
  %2508 = vmatmul.bf16.gmra.mxu0 %v968
  %v2509 = vpop.f32.mrf.mxu0
  %v2510 = vadd.f32 %v2401, %v2509
  %v2511 = vpop.f32.mrf.mxu0
  %v2512 = vadd.f32 %v2403, %v2511
  %2513 = vmatmul.bf16.gmra.mxu0 %v977
  %v2514 = vpop.f32.mrf.mxu0
  %v2515 = vadd.f32 %v2406, %v2514
  %v2516 = vpop.f32.mrf.mxu0
  %v2517 = vadd.f32 %v2408, %v2516
  %2518 = vmatmul.bf16.gmra.mxu0 %v986
  %v2519 = vpop.f32.mrf.mxu0
  %v2520 = vadd.f32 %v2411, %v2519
  %v2521 = vpop.f32.mrf.mxu0
  %v2522 = vadd.f32 %v2413, %v2521
  %2523 = vmatmul.bf16.gmra.mxu0 %v995
  %v2524 = vpop.f32.mrf.mxu0
  %v2525 = vadd.f32 %v2416, %v2524
  %v2526 = vpop.f32.mrf.mxu0
  %v2527 = vadd.f32 %v2418, %v2526
  %2528 = vmatmul.bf16.gmra.mxu0 %v1004
  %v2529 = vpop.f32.mrf.mxu0
  %v2530 = vadd.f32 %v2421, %v2529
  %v2531 = vpop.f32.mrf.mxu0
  %v2532 = vadd.f32 %v2423, %v2531
  %2533 = vmatmul.bf16.gmra.mxu0 %v1013
  %v2534 = vpop.f32.mrf.mxu0
  %v2535 = vadd.f32 %v2426, %v2534
  %v2536 = vpop.f32.mrf.mxu0
  %v2537 = vadd.f32 %v2428, %v2536
  %2538 = vmatmul.bf16.gmra.mxu0 %v1022
  %v2539 = vpop.f32.mrf.mxu0
  %v2540 = vadd.f32 %v2431, %v2539
  %v2541 = vpop.f32.mrf.mxu0
  %v2542 = vadd.f32 %v2433, %v2541
  %2543 = vmatmul.bf16.gmra.mxu0 %v1031
  %v2544 = vpop.f32.mrf.mxu0
  %v2545 = vadd.f32 %v2436, %v2544
  %v2546 = vpop.f32.mrf.mxu0
  %v2547 = vadd.f32 %v2438, %v2546
  %2548 = vmatmul.bf16.gmra.mxu0 %v1040
  %v2549 = vpop.f32.mrf.mxu0
  %v2550 = vadd.f32 %v2441, %v2549
  %v2551 = vpop.f32.mrf.mxu0
  %v2552 = vadd.f32 %v2443, %v2551
  %2553 = vmatmul.bf16.gmra.mxu0 %v1049
  %v2554 = vpop.f32.mrf.mxu0
  %v2555 = vadd.f32 %v2446, %v2554
  %v2556 = vpop.f32.mrf.mxu0
  %v2557 = vadd.f32 %v2448, %v2556
  %2558 = vmatmul.bf16.gmra.mxu0 %v1058
  %v2559 = vpop.f32.mrf.mxu0
  %v2560 = vadd.f32 %v2451, %v2559
  %v2561 = vpop.f32.mrf.mxu0
  %v2562 = vadd.f32 %v2453, %v2561
  %2563 = vmatmul.bf16.gmra.mxu0 %v1067
  %v2564 = vpop.f32.mrf.mxu0
  %v2565 = vadd.f32 %v2456, %v2564
  %v2566 = vpop.f32.mrf.mxu0
  %v2567 = vadd.f32 %v2458, %v2566
  %2568 = vmatmul.bf16.gmra.mxu0 %v1076
  %v2569 = vpop.f32.mrf.mxu0
  %v2570 = vadd.f32 %v2461, %v2569
  %v2571 = vpop.f32.mrf.mxu0
  %v2572 = vadd.f32 %v2463, %v2571
  %2573 = vmatmul.bf16.gmra.mxu0 %v1085
  %v2574 = vpop.f32.mrf.mxu0
  %v2575 = vadd.f32 %v2466, %v2574
  %v2576 = vpop.f32.mrf.mxu0
  %v2577 = vadd.f32 %v2468, %v2576
  %2578 = vmatmul.bf16.gmra.mxu0 %v1094
  %v2579 = vpop.f32.mrf.mxu0
  %v2580 = vadd.f32 %v2471, %v2579
  %v2581 = vpop.f32.mrf.mxu0
  %v2582 = vadd.f32 %v2473, %v2581
  %2583 = vmatmul.bf16.gmra.mxu0 %v1103
  %v2584 = vpop.f32.mrf.mxu0
  %v2585 = vadd.f32 %v2476, %v2584
  %v2586 = vpop.f32.mrf.mxu0
  %v2587 = vadd.f32 %v2478, %v2586
  %2588 = vdwg.mxu0
  %2589 = vmatpush.bf16.msra.mxu0 %v1644
  %2590 = vmatpush.bf16.msra.mxu0 %v1643
  %2591 = vmatpush.bf16.msra.mxu0 %v1642
  %2592 = vmatpush.bf16.msra.mxu0 %v1641
  %2593 = vmatpush.bf16.msra.mxu0 %v1640
  %2594 = vmatpush.bf16.msra.mxu0 %v1639
  %2595 = vmatpush.bf16.msra.mxu0 %v1638
  %2596 = vmatpush.bf16.msra.mxu0 %v1637
  %2597 = vmatmul.bf16.gmra.mxu0 %v933
  %v2598 = vpop.f32.mrf.mxu0
  %v2599 = vadd.f32 %v2490, %v2598
  %v2600 = vpop.f32.mrf.mxu0
  %v2601 = vadd.f32 %v2492, %v2600
  %2602 = vmatmul.bf16.gmra.mxu0 %v942
  %v2603 = vpop.f32.mrf.mxu0
  %v2604 = vadd.f32 %v2495, %v2603
  %v2605 = vpop.f32.mrf.mxu0
  %v2606 = vadd.f32 %v2497, %v2605
  %2607 = vmatmul.bf16.gmra.mxu0 %v951
  %v2608 = vpop.f32.mrf.mxu0
  %v2609 = vadd.f32 %v2500, %v2608
  %v2610 = vpop.f32.mrf.mxu0
  %v2611 = vadd.f32 %v2502, %v2610
  %2612 = vmatmul.bf16.gmra.mxu0 %v960
  %v2613 = vpop.f32.mrf.mxu0
  %v2614 = vadd.f32 %v2505, %v2613
  %v2615 = vpop.f32.mrf.mxu0
  %v2616 = vadd.f32 %v2507, %v2615
  %2617 = vmatmul.bf16.gmra.mxu0 %v969
  %v2618 = vpop.f32.mrf.mxu0
  %v2619 = vadd.f32 %v2510, %v2618
  %v2620 = vpop.f32.mrf.mxu0
  %v2621 = vadd.f32 %v2512, %v2620
  %2622 = vmatmul.bf16.gmra.mxu0 %v978
  %v2623 = vpop.f32.mrf.mxu0
  %v2624 = vadd.f32 %v2515, %v2623
  %v2625 = vpop.f32.mrf.mxu0
  %v2626 = vadd.f32 %v2517, %v2625
  %2627 = vmatmul.bf16.gmra.mxu0 %v987
  %v2628 = vpop.f32.mrf.mxu0
  %v2629 = vadd.f32 %v2520, %v2628
  %v2630 = vpop.f32.mrf.mxu0
  %v2631 = vadd.f32 %v2522, %v2630
  %2632 = vmatmul.bf16.gmra.mxu0 %v996
  %v2633 = vpop.f32.mrf.mxu0
  %v2634 = vadd.f32 %v2525, %v2633
  %v2635 = vpop.f32.mrf.mxu0
  %v2636 = vadd.f32 %v2527, %v2635
  %2637 = vmatmul.bf16.gmra.mxu0 %v1005
  %v2638 = vpop.f32.mrf.mxu0
  %v2639 = vadd.f32 %v2530, %v2638
  %v2640 = vpop.f32.mrf.mxu0
  %v2641 = vadd.f32 %v2532, %v2640
  %2642 = vmatmul.bf16.gmra.mxu0 %v1014
  %v2643 = vpop.f32.mrf.mxu0
  %v2644 = vadd.f32 %v2535, %v2643
  %v2645 = vpop.f32.mrf.mxu0
  %v2646 = vadd.f32 %v2537, %v2645
  %2647 = vmatmul.bf16.gmra.mxu0 %v1023
  %v2648 = vpop.f32.mrf.mxu0
  %v2649 = vadd.f32 %v2540, %v2648
  %v2650 = vpop.f32.mrf.mxu0
  %v2651 = vadd.f32 %v2542, %v2650
  %2652 = vmatmul.bf16.gmra.mxu0 %v1032
  %v2653 = vpop.f32.mrf.mxu0
  %v2654 = vadd.f32 %v2545, %v2653
  %v2655 = vpop.f32.mrf.mxu0
  %v2656 = vadd.f32 %v2547, %v2655
  %2657 = vmatmul.bf16.gmra.mxu0 %v1041
  %v2658 = vpop.f32.mrf.mxu0
  %v2659 = vadd.f32 %v2550, %v2658
  %v2660 = vpop.f32.mrf.mxu0
  %v2661 = vadd.f32 %v2552, %v2660
  %2662 = vmatmul.bf16.gmra.mxu0 %v1050
  %v2663 = vpop.f32.mrf.mxu0
  %v2664 = vadd.f32 %v2555, %v2663
  %v2665 = vpop.f32.mrf.mxu0
  %v2666 = vadd.f32 %v2557, %v2665
  %2667 = vmatmul.bf16.gmra.mxu0 %v1059
  %v2668 = vpop.f32.mrf.mxu0
  %v2669 = vadd.f32 %v2560, %v2668
  %v2670 = vpop.f32.mrf.mxu0
  %v2671 = vadd.f32 %v2562, %v2670
  %2672 = vmatmul.bf16.gmra.mxu0 %v1068
  %v2673 = vpop.f32.mrf.mxu0
  %v2674 = vadd.f32 %v2565, %v2673
  %v2675 = vpop.f32.mrf.mxu0
  %v2676 = vadd.f32 %v2567, %v2675
  %2677 = vmatmul.bf16.gmra.mxu0 %v1077
  %v2678 = vpop.f32.mrf.mxu0
  %v2679 = vadd.f32 %v2570, %v2678
  %v2680 = vpop.f32.mrf.mxu0
  %v2681 = vadd.f32 %v2572, %v2680
  %2682 = vmatmul.bf16.gmra.mxu0 %v1086
  %v2683 = vpop.f32.mrf.mxu0
  %v2684 = vadd.f32 %v2575, %v2683
  %v2685 = vpop.f32.mrf.mxu0
  %v2686 = vadd.f32 %v2577, %v2685
  %2687 = vmatmul.bf16.gmra.mxu0 %v1095
  %v2688 = vpop.f32.mrf.mxu0
  %v2689 = vadd.f32 %v2580, %v2688
  %v2690 = vpop.f32.mrf.mxu0
  %v2691 = vadd.f32 %v2582, %v2690
  %2692 = vmatmul.bf16.gmra.mxu0 %v1104
  %v2693 = vpop.f32.mrf.mxu0
  %v2694 = vadd.f32 %v2585, %v2693
  %v2695 = vpop.f32.mrf.mxu0
  %v2696 = vadd.f32 %v2587, %v2695
  %2697 = vdwg.mxu0
  %2698 = vadd.xlane.f32.xlu0 %v2599
  %v2699 = vpop.xlane.xlu0 %2698
  %2700 = vadd.xlane.f32.xlu0 %v2601
  %v2701 = vpop.xlane.xlu0 %2700
  %2702 = vadd.xlane.f32.xlu0 %v2604
  %v2703 = vpop.xlane.xlu0 %2702
  %2704 = vadd.xlane.f32.xlu0 %v2606
  %v2705 = vpop.xlane.xlu0 %2704
  %2706 = vadd.xlane.f32.xlu0 %v2609
  %v2707 = vpop.xlane.xlu0 %2706
  %2708 = vadd.xlane.f32.xlu0 %v2611
  %v2709 = vpop.xlane.xlu0 %2708
  %2710 = vadd.xlane.f32.xlu0 %v2614
  %v2711 = vpop.xlane.xlu0 %2710
  %2712 = vadd.xlane.f32.xlu0 %v2616
  %v2713 = vpop.xlane.xlu0 %2712
  %2714 = vadd.xlane.f32.xlu0 %v2619
  %v2715 = vpop.xlane.xlu0 %2714
  %2716 = vadd.xlane.f32.xlu0 %v2621
  %v2717 = vpop.xlane.xlu0 %2716
  %2718 = vadd.xlane.f32.xlu0 %v2624
  %v2719 = vpop.xlane.xlu0 %2718
  %2720 = vadd.xlane.f32.xlu0 %v2626
  %v2721 = vpop.xlane.xlu0 %2720
  %2722 = vadd.xlane.f32.xlu0 %v2629
  %v2723 = vpop.xlane.xlu0 %2722
  %2724 = vadd.xlane.f32.xlu0 %v2631
  %v2725 = vpop.xlane.xlu0 %2724
  %2726 = vadd.xlane.f32.xlu0 %v2634
  %v2727 = vpop.xlane.xlu0 %2726
  %2728 = vadd.xlane.f32.xlu0 %v2636
  %v2729 = vpop.xlane.xlu0 %2728
  %2730 = vadd.xlane.f32.xlu0 %v2639
  %v2731 = vpop.xlane.xlu0 %2730
  %2732 = vadd.xlane.f32.xlu0 %v2641
  %v2733 = vpop.xlane.xlu0 %2732
  %2734 = vadd.xlane.f32.xlu0 %v2644
  %v2735 = vpop.xlane.xlu0 %2734
  %2736 = vadd.xlane.f32.xlu0 %v2646
  %v2737 = vpop.xlane.xlu0 %2736
  %2738 = vadd.xlane.f32.xlu0 %v2649
  %v2739 = vpop.xlane.xlu0 %2738
  %2740 = vadd.xlane.f32.xlu0 %v2651
  %v2741 = vpop.xlane.xlu0 %2740
  %2742 = vadd.xlane.f32.xlu0 %v2654
  %v2743 = vpop.xlane.xlu0 %2742
  %2744 = vadd.xlane.f32.xlu0 %v2656
  %v2745 = vpop.xlane.xlu0 %2744
  %2746 = vadd.xlane.f32.xlu0 %v2659
  %v2747 = vpop.xlane.xlu0 %2746
  %2748 = vadd.xlane.f32.xlu0 %v2661
  %v2749 = vpop.xlane.xlu0 %2748
  %2750 = vadd.xlane.f32.xlu0 %v2664
  %v2751 = vpop.xlane.xlu0 %2750
  %2752 = vadd.xlane.f32.xlu0 %v2666
  %v2753 = vpop.xlane.xlu0 %2752
  %2754 = vadd.xlane.f32.xlu0 %v2669
  %v2755 = vpop.xlane.xlu0 %2754
  %2756 = vadd.xlane.f32.xlu0 %v2671
  %v2757 = vpop.xlane.xlu0 %2756
  %2758 = vadd.xlane.f32.xlu0 %v2674
  %v2759 = vpop.xlane.xlu0 %2758
  %2760 = vadd.xlane.f32.xlu0 %v2676
  %v2761 = vpop.xlane.xlu0 %2760
  %2762 = vadd.xlane.f32.xlu0 %v2679
  %v2763 = vpop.xlane.xlu0 %2762
  %2764 = vadd.xlane.f32.xlu0 %v2681
  %v2765 = vpop.xlane.xlu0 %2764
  %2766 = vadd.xlane.f32.xlu0 %v2684
  %v2767 = vpop.xlane.xlu0 %2766
  %2768 = vadd.xlane.f32.xlu0 %v2686
  %v2769 = vpop.xlane.xlu0 %2768
  %2770 = vadd.xlane.f32.xlu0 %v2689
  %v2771 = vpop.xlane.xlu0 %2770
  %2772 = vadd.xlane.f32.xlu0 %v2691
  %v2773 = vpop.xlane.xlu0 %2772
  %2774 = vadd.xlane.f32.xlu0 %v2694
  %v2775 = vpop.xlane.xlu0 %2774
  %2776 = vadd.xlane.f32.xlu0 %v2696
  %v2777 = vpop.xlane.xlu0 %2776
  %v2778 = vmul.f32 %v2699, 0.020408163
  %v2779 = vmul.f32 %v2701, 0.020408163
  %v2780 = vmul.f32 %v2703, 0.020408163
  %v2781 = vmul.f32 %v2705, 0.020408163
  %v2782 = vmul.f32 %v2707, 0.020408163
  %v2783 = vmul.f32 %v2709, 0.020408163
  %v2784 = vmul.f32 %v2711, 0.020408163
  %v2785 = vmul.f32 %v2713, 0.020408163
  %v2786 = vmul.f32 %v2715, 0.020408163
  %v2787 = vmul.f32 %v2717, 0.020408163
  %v2788 = vmul.f32 %v2719, 0.020408163
  %v2789 = vmul.f32 %v2721, 0.020408163
  %v2790 = vmul.f32 %v2723, 0.020408163
  %v2791 = vmul.f32 %v2725, 0.020408163
  %v2792 = vmul.f32 %v2727, 0.020408163
  %v2793 = vmul.f32 %v2729, 0.020408163
  %v2794 = vmul.f32 %v2731, 0.020408163
  %v2795 = vmul.f32 %v2733, 0.020408163
  %v2796 = vmul.f32 %v2735, 0.020408163
  %v2797 = vmul.f32 %v2737, 0.020408163
  %v2798 = vmul.f32 %v2739, 0.020408163
  %v2799 = vmul.f32 %v2741, 0.020408163
  %v2800 = vmul.f32 %v2743, 0.020408163
  %v2801 = vmul.f32 %v2745, 0.020408163
  %v2802 = vmul.f32 %v2747, 0.020408163
  %v2803 = vmul.f32 %v2749, 0.020408163
  %v2804 = vmul.f32 %v2751, 0.020408163
  %v2805 = vmul.f32 %v2753, 0.020408163
  %v2806 = vmul.f32 %v2755, 0.020408163
  %v2807 = vmul.f32 %v2757, 0.020408163
  %v2808 = vmul.f32 %v2759, 0.020408163
  %v2809 = vmul.f32 %v2761, 0.020408163
  %v2810 = vmul.f32 %v2763, 0.020408163
  %v2811 = vmul.f32 %v2765, 0.020408163
  %v2812 = vmul.f32 %v2767, 0.020408163
  %v2813 = vmul.f32 %v2769, 0.020408163
  %v2814 = vmul.f32 %v2771, 0.020408163
  %v2815 = vmul.f32 %v2773, 0.020408163
  %v2816 = vmul.f32 %v2775, 0.020408163
  %v2817 = vmul.f32 %v2777, 0.020408163
  %v2818 = vsub.f32 %v2599, %v2778
  %v2819 = vsub.f32 %v2601, %v2779
  %v2820 = vsub.f32 %v2604, %v2780
  %v2821 = vsub.f32 %v2606, %v2781
  %v2822 = vsub.f32 %v2609, %v2782
  %v2823 = vsub.f32 %v2611, %v2783
  %v2824 = vsub.f32 %v2614, %v2784
  %v2825 = vsub.f32 %v2616, %v2785
  %v2826 = vsub.f32 %v2619, %v2786
  %v2827 = vsub.f32 %v2621, %v2787
  %v2828 = vsub.f32 %v2624, %v2788
  %v2829 = vsub.f32 %v2626, %v2789
  %v2830 = vsub.f32 %v2629, %v2790
  %v2831 = vsub.f32 %v2631, %v2791
  %v2832 = vsub.f32 %v2634, %v2792
  %v2833 = vsub.f32 %v2636, %v2793
  %v2834 = vsub.f32 %v2639, %v2794
  %v2835 = vsub.f32 %v2641, %v2795
  %v2836 = vsub.f32 %v2644, %v2796
  %v2837 = vsub.f32 %v2646, %v2797
  %v2838 = vsub.f32 %v2649, %v2798
  %v2839 = vsub.f32 %v2651, %v2799
  %v2840 = vsub.f32 %v2654, %v2800
  %v2841 = vsub.f32 %v2656, %v2801
  %v2842 = vsub.f32 %v2659, %v2802
  %v2843 = vsub.f32 %v2661, %v2803
  %v2844 = vsub.f32 %v2664, %v2804
  %v2845 = vsub.f32 %v2666, %v2805
  %v2846 = vsub.f32 %v2669, %v2806
  %v2847 = vsub.f32 %v2671, %v2807
  %v2848 = vsub.f32 %v2674, %v2808
  %v2849 = vsub.f32 %v2676, %v2809
  %v2850 = vsub.f32 %v2679, %v2810
  %v2851 = vsub.f32 %v2681, %v2811
  %v2852 = vsub.f32 %v2684, %v2812
  %v2853 = vsub.f32 %v2686, %v2813
  %v2854 = vsub.f32 %v2689, %v2814
  %v2855 = vsub.f32 %v2691, %v2815
  %v2856 = vsub.f32 %v2694, %v2816
  %v2857 = vsub.f32 %v2696, %v2817
  %v2858 = vlaneseq
  %v2859 = vand.u32 %v2858, 127
  %vm2860 = vcmp.lt.s32.totalorder %v2859, 49
  %v2861 = vsel %vm2860, %v2818, 0.0
  %v2862 = vsel %vm2860, %v2819, 0.0
  %v2863 = vsel %vm2860, %v2820, 0.0
  %v2864 = vsel %vm2860, %v2821, 0.0
  %v2865 = vsel %vm2860, %v2822, 0.0
  %v2866 = vsel %vm2860, %v2823, 0.0
  %v2867 = vsel %vm2860, %v2824, 0.0
  %v2868 = vsel %vm2860, %v2825, 0.0
  %v2869 = vsel %vm2860, %v2826, 0.0
  %v2870 = vsel %vm2860, %v2827, 0.0
  %v2871 = vsel %vm2860, %v2828, 0.0
  %v2872 = vsel %vm2860, %v2829, 0.0
  %v2873 = vsel %vm2860, %v2830, 0.0
  %v2874 = vsel %vm2860, %v2831, 0.0
  %v2875 = vsel %vm2860, %v2832, 0.0
  %v2876 = vsel %vm2860, %v2833, 0.0
  %v2877 = vsel %vm2860, %v2834, 0.0
  %v2878 = vsel %vm2860, %v2835, 0.0
  %v2879 = vsel %vm2860, %v2836, 0.0
  %v2880 = vsel %vm2860, %v2837, 0.0
  %v2881 = vsel %vm2860, %v2838, 0.0
  %v2882 = vsel %vm2860, %v2839, 0.0
  %v2883 = vsel %vm2860, %v2840, 0.0
  %v2884 = vsel %vm2860, %v2841, 0.0
  %v2885 = vsel %vm2860, %v2842, 0.0
  %v2886 = vsel %vm2860, %v2843, 0.0
  %v2887 = vsel %vm2860, %v2844, 0.0
  %v2888 = vsel %vm2860, %v2845, 0.0
  %v2889 = vsel %vm2860, %v2846, 0.0
  %v2890 = vsel %vm2860, %v2847, 0.0
  %v2891 = vsel %vm2860, %v2848, 0.0
  %v2892 = vsel %vm2860, %v2849, 0.0
  %v2893 = vsel %vm2860, %v2850, 0.0
  %v2894 = vsel %vm2860, %v2851, 0.0
  %v2895 = vsel %vm2860, %v2852, 0.0
  %v2896 = vsel %vm2860, %v2853, 0.0
  %v2897 = vsel %vm2860, %v2854, 0.0
  %v2898 = vsel %vm2860, %v2855, 0.0
  %v2899 = vsel %vm2860, %v2856, 0.0
  %v2900 = vsel %vm2860, %v2857, 0.0
  %v2901 = vmul.f32 %v2861, %v2861
  %v2902 = vmul.f32 %v2862, %v2862
  %v2903 = vmul.f32 %v2863, %v2863
  %v2904 = vmul.f32 %v2864, %v2864
  %v2905 = vmul.f32 %v2865, %v2865
  %v2906 = vmul.f32 %v2866, %v2866
  %v2907 = vmul.f32 %v2867, %v2867
  %v2908 = vmul.f32 %v2868, %v2868
  %v2909 = vmul.f32 %v2869, %v2869
  %v2910 = vmul.f32 %v2870, %v2870
  %v2911 = vmul.f32 %v2871, %v2871
  %v2912 = vmul.f32 %v2872, %v2872
  %v2913 = vmul.f32 %v2873, %v2873
  %v2914 = vmul.f32 %v2874, %v2874
  %v2915 = vmul.f32 %v2875, %v2875
  %v2916 = vmul.f32 %v2876, %v2876
  %v2917 = vmul.f32 %v2877, %v2877
  %v2918 = vmul.f32 %v2878, %v2878
  %v2919 = vmul.f32 %v2879, %v2879
  %v2920 = vmul.f32 %v2880, %v2880
  %v2921 = vmul.f32 %v2881, %v2881
  %v2922 = vmul.f32 %v2882, %v2882
  %v2923 = vmul.f32 %v2883, %v2883
  %v2924 = vmul.f32 %v2884, %v2884
  %v2925 = vmul.f32 %v2885, %v2885
  %v2926 = vmul.f32 %v2886, %v2886
  %v2927 = vmul.f32 %v2887, %v2887
  %v2928 = vmul.f32 %v2888, %v2888
  %v2929 = vmul.f32 %v2889, %v2889
  %v2930 = vmul.f32 %v2890, %v2890
  %v2931 = vmul.f32 %v2891, %v2891
  %v2932 = vmul.f32 %v2892, %v2892
  %v2933 = vmul.f32 %v2893, %v2893
  %v2934 = vmul.f32 %v2894, %v2894
  %v2935 = vmul.f32 %v2895, %v2895
  %v2936 = vmul.f32 %v2896, %v2896
  %v2937 = vmul.f32 %v2897, %v2897
  %v2938 = vmul.f32 %v2898, %v2898
  %v2939 = vmul.f32 %v2899, %v2899
  %v2940 = vmul.f32 %v2900, %v2900
  %2941 = vadd.xlane.f32.xlu0 %v2901
  %v2942 = vpop.xlane.xlu0 %2941
  %2943 = vadd.xlane.f32.xlu0 %v2902
  %v2944 = vpop.xlane.xlu0 %2943
  %2945 = vadd.xlane.f32.xlu0 %v2903
  %v2946 = vpop.xlane.xlu0 %2945
  %2947 = vadd.xlane.f32.xlu0 %v2904
  %v2948 = vpop.xlane.xlu0 %2947
  %2949 = vadd.xlane.f32.xlu0 %v2905
  %v2950 = vpop.xlane.xlu0 %2949
  %2951 = vadd.xlane.f32.xlu0 %v2906
  %v2952 = vpop.xlane.xlu0 %2951
  %2953 = vadd.xlane.f32.xlu0 %v2907
  %v2954 = vpop.xlane.xlu0 %2953
  %2955 = vadd.xlane.f32.xlu0 %v2908
  %v2956 = vpop.xlane.xlu0 %2955
  %2957 = vadd.xlane.f32.xlu0 %v2909
  %v2958 = vpop.xlane.xlu0 %2957
  %2959 = vadd.xlane.f32.xlu0 %v2910
  %v2960 = vpop.xlane.xlu0 %2959
  %2961 = vadd.xlane.f32.xlu0 %v2911
  %v2962 = vpop.xlane.xlu0 %2961
  %2963 = vadd.xlane.f32.xlu0 %v2912
  %v2964 = vpop.xlane.xlu0 %2963
  %2965 = vadd.xlane.f32.xlu0 %v2913
  %v2966 = vpop.xlane.xlu0 %2965
  %2967 = vadd.xlane.f32.xlu0 %v2914
  %v2968 = vpop.xlane.xlu0 %2967
  %2969 = vadd.xlane.f32.xlu0 %v2915
  %v2970 = vpop.xlane.xlu0 %2969
  %2971 = vadd.xlane.f32.xlu0 %v2916
  %v2972 = vpop.xlane.xlu0 %2971
  %2973 = vadd.xlane.f32.xlu0 %v2917
  %v2974 = vpop.xlane.xlu0 %2973
  %2975 = vadd.xlane.f32.xlu0 %v2918
  %v2976 = vpop.xlane.xlu0 %2975
  %2977 = vadd.xlane.f32.xlu0 %v2919
  %v2978 = vpop.xlane.xlu0 %2977
  %2979 = vadd.xlane.f32.xlu0 %v2920
  %v2980 = vpop.xlane.xlu0 %2979
  %2981 = vadd.xlane.f32.xlu0 %v2921
  %v2982 = vpop.xlane.xlu0 %2981
  %2983 = vadd.xlane.f32.xlu0 %v2922
  %v2984 = vpop.xlane.xlu0 %2983
  %2985 = vadd.xlane.f32.xlu0 %v2923
  %v2986 = vpop.xlane.xlu0 %2985
  %2987 = vadd.xlane.f32.xlu0 %v2924
  %v2988 = vpop.xlane.xlu0 %2987
  %2989 = vadd.xlane.f32.xlu0 %v2925
  %v2990 = vpop.xlane.xlu0 %2989
  %2991 = vadd.xlane.f32.xlu0 %v2926
  %v2992 = vpop.xlane.xlu0 %2991
  %2993 = vadd.xlane.f32.xlu0 %v2927
  %v2994 = vpop.xlane.xlu0 %2993
  %2995 = vadd.xlane.f32.xlu0 %v2928
  %v2996 = vpop.xlane.xlu0 %2995
  %2997 = vadd.xlane.f32.xlu0 %v2929
  %v2998 = vpop.xlane.xlu0 %2997
  %2999 = vadd.xlane.f32.xlu0 %v2930
  %v3000 = vpop.xlane.xlu0 %2999
  %3001 = vadd.xlane.f32.xlu0 %v2931
  %v3002 = vpop.xlane.xlu0 %3001
  %3003 = vadd.xlane.f32.xlu0 %v2932
  %v3004 = vpop.xlane.xlu0 %3003
  %3005 = vadd.xlane.f32.xlu0 %v2933
  %v3006 = vpop.xlane.xlu0 %3005
  %3007 = vadd.xlane.f32.xlu0 %v2934
  %v3008 = vpop.xlane.xlu0 %3007
  %3009 = vadd.xlane.f32.xlu0 %v2935
  %v3010 = vpop.xlane.xlu0 %3009
  %3011 = vadd.xlane.f32.xlu0 %v2936
  %v3012 = vpop.xlane.xlu0 %3011
  %3013 = vadd.xlane.f32.xlu0 %v2937
  %v3014 = vpop.xlane.xlu0 %3013
  %3015 = vadd.xlane.f32.xlu0 %v2938
  %v3016 = vpop.xlane.xlu0 %3015
  %3017 = vadd.xlane.f32.xlu0 %v2939
  %v3018 = vpop.xlane.xlu0 %3017
  %3019 = vadd.xlane.f32.xlu0 %v2940
  %v3020 = vpop.xlane.xlu0 %3019
  %v3021 = vmul.f32 %v2942, 0.020408163
  %v3022 = vmul.f32 %v2944, 0.020408163
  %v3023 = vmul.f32 %v2946, 0.020408163
  %v3024 = vmul.f32 %v2948, 0.020408163
  %v3025 = vmul.f32 %v2950, 0.020408163
  %v3026 = vmul.f32 %v2952, 0.020408163
  %v3027 = vmul.f32 %v2954, 0.020408163
  %v3028 = vmul.f32 %v2956, 0.020408163
  %v3029 = vmul.f32 %v2958, 0.020408163
  %v3030 = vmul.f32 %v2960, 0.020408163
  %v3031 = vmul.f32 %v2962, 0.020408163
  %v3032 = vmul.f32 %v2964, 0.020408163
  %v3033 = vmul.f32 %v2966, 0.020408163
  %v3034 = vmul.f32 %v2968, 0.020408163
  %v3035 = vmul.f32 %v2970, 0.020408163
  %v3036 = vmul.f32 %v2972, 0.020408163
  %v3037 = vmul.f32 %v2974, 0.020408163
  %v3038 = vmul.f32 %v2976, 0.020408163
  %v3039 = vmul.f32 %v2978, 0.020408163
  %v3040 = vmul.f32 %v2980, 0.020408163
  %v3041 = vmul.f32 %v2982, 0.020408163
  %v3042 = vmul.f32 %v2984, 0.020408163
  %v3043 = vmul.f32 %v2986, 0.020408163
  %v3044 = vmul.f32 %v2988, 0.020408163
  %v3045 = vmul.f32 %v2990, 0.020408163
  %v3046 = vmul.f32 %v2992, 0.020408163
  %v3047 = vmul.f32 %v2994, 0.020408163
  %v3048 = vmul.f32 %v2996, 0.020408163
  %v3049 = vmul.f32 %v2998, 0.020408163
  %v3050 = vmul.f32 %v3000, 0.020408163
  %v3051 = vmul.f32 %v3002, 0.020408163
  %v3052 = vmul.f32 %v3004, 0.020408163
  %v3053 = vmul.f32 %v3006, 0.020408163
  %v3054 = vmul.f32 %v3008, 0.020408163
  %v3055 = vmul.f32 %v3010, 0.020408163
  %v3056 = vmul.f32 %v3012, 0.020408163
  %v3057 = vmul.f32 %v3014, 0.020408163
  %v3058 = vmul.f32 %v3016, 0.020408163
  %v3059 = vmul.f32 %v3018, 0.020408163
  %v3060 = vmul.f32 %v3020, 0.020408163
  %v3061 = vadd.f32 %v3021, 1e-05
  %v3062 = vadd.f32 %v3022, 1e-05
  %v3063 = vadd.f32 %v3023, 1e-05
  %v3064 = vadd.f32 %v3024, 1e-05
  %v3065 = vadd.f32 %v3025, 1e-05
  %v3066 = vadd.f32 %v3026, 1e-05
  %v3067 = vadd.f32 %v3027, 1e-05
  %v3068 = vadd.f32 %v3028, 1e-05
  %v3069 = vadd.f32 %v3029, 1e-05
  %v3070 = vadd.f32 %v3030, 1e-05
  %v3071 = vadd.f32 %v3031, 1e-05
  %v3072 = vadd.f32 %v3032, 1e-05
  %v3073 = vadd.f32 %v3033, 1e-05
  %v3074 = vadd.f32 %v3034, 1e-05
  %v3075 = vadd.f32 %v3035, 1e-05
  %v3076 = vadd.f32 %v3036, 1e-05
  %v3077 = vadd.f32 %v3037, 1e-05
  %v3078 = vadd.f32 %v3038, 1e-05
  %v3079 = vadd.f32 %v3039, 1e-05
  %v3080 = vadd.f32 %v3040, 1e-05
  %v3081 = vadd.f32 %v3041, 1e-05
  %v3082 = vadd.f32 %v3042, 1e-05
  %v3083 = vadd.f32 %v3043, 1e-05
  %v3084 = vadd.f32 %v3044, 1e-05
  %v3085 = vadd.f32 %v3045, 1e-05
  %v3086 = vadd.f32 %v3046, 1e-05
  %v3087 = vadd.f32 %v3047, 1e-05
  %v3088 = vadd.f32 %v3048, 1e-05
  %v3089 = vadd.f32 %v3049, 1e-05
  %v3090 = vadd.f32 %v3050, 1e-05
  %v3091 = vadd.f32 %v3051, 1e-05
  %v3092 = vadd.f32 %v3052, 1e-05
  %v3093 = vadd.f32 %v3053, 1e-05
  %v3094 = vadd.f32 %v3054, 1e-05
  %v3095 = vadd.f32 %v3055, 1e-05
  %v3096 = vadd.f32 %v3056, 1e-05
  %v3097 = vadd.f32 %v3057, 1e-05
  %v3098 = vadd.f32 %v3058, 1e-05
  %v3099 = vadd.f32 %v3059, 1e-05
  %v3100 = vadd.f32 %v3060, 1e-05
  %v3101 = vrsqrt.pop %v3061
  %v3102 = vmul.f32 %v3101, %v3061
  %v3103 = vmul.f32 %v3102, %v3101
  %v3104 = vmul.f32 0.5, %v3103
  %v3105 = vsub.f32 1.5, %v3104
  %v3106 = vmul.f32 %v3101, %v3105
  %vm3107 = vweird.f32 %v3061
  %vm3108 = vweird.f32 %v3101
  %vm3109 = vmor %vm3107, %vm3108
  %v3110 = vsel %vm3109, %v3101, %v3106
  %v3111 = vrsqrt.pop %v3062
  %v3112 = vmul.f32 %v3111, %v3062
  %v3113 = vmul.f32 %v3112, %v3111
  %v3114 = vmul.f32 0.5, %v3113
  %v3115 = vsub.f32 1.5, %v3114
  %v3116 = vmul.f32 %v3111, %v3115
  %vm3117 = vweird.f32 %v3062
  %vm3118 = vweird.f32 %v3111
  %vm3119 = vmor %vm3117, %vm3118
  %v3120 = vsel %vm3119, %v3111, %v3116
  %v3121 = vrsqrt.pop %v3063
  %v3122 = vmul.f32 %v3121, %v3063
  %v3123 = vmul.f32 %v3122, %v3121
  %v3124 = vmul.f32 0.5, %v3123
  %v3125 = vsub.f32 1.5, %v3124
  %v3126 = vmul.f32 %v3121, %v3125
  %vm3127 = vweird.f32 %v3063
  %vm3128 = vweird.f32 %v3121
  %vm3129 = vmor %vm3127, %vm3128
  %v3130 = vsel %vm3129, %v3121, %v3126
  %v3131 = vrsqrt.pop %v3064
  %v3132 = vmul.f32 %v3131, %v3064
  %v3133 = vmul.f32 %v3132, %v3131
  %v3134 = vmul.f32 0.5, %v3133
  %v3135 = vsub.f32 1.5, %v3134
  %v3136 = vmul.f32 %v3131, %v3135
  %vm3137 = vweird.f32 %v3064
  %vm3138 = vweird.f32 %v3131
  %vm3139 = vmor %vm3137, %vm3138
  %v3140 = vsel %vm3139, %v3131, %v3136
  %v3141 = vrsqrt.pop %v3065
  %v3142 = vmul.f32 %v3141, %v3065
  %v3143 = vmul.f32 %v3142, %v3141
  %v3144 = vmul.f32 0.5, %v3143
  %v3145 = vsub.f32 1.5, %v3144
  %v3146 = vmul.f32 %v3141, %v3145
  %vm3147 = vweird.f32 %v3065
  %vm3148 = vweird.f32 %v3141
  %vm3149 = vmor %vm3147, %vm3148
  %v3150 = vsel %vm3149, %v3141, %v3146
  %v3151 = vrsqrt.pop %v3066
  %v3152 = vmul.f32 %v3151, %v3066
  %v3153 = vmul.f32 %v3152, %v3151
  %v3154 = vmul.f32 0.5, %v3153
  %v3155 = vsub.f32 1.5, %v3154
  %v3156 = vmul.f32 %v3151, %v3155
  %vm3157 = vweird.f32 %v3066
  %vm3158 = vweird.f32 %v3151
  %vm3159 = vmor %vm3157, %vm3158
  %v3160 = vsel %vm3159, %v3151, %v3156
  %v3161 = vrsqrt.pop %v3067
  %v3162 = vmul.f32 %v3161, %v3067
  %v3163 = vmul.f32 %v3162, %v3161
  %v3164 = vmul.f32 0.5, %v3163
  %v3165 = vsub.f32 1.5, %v3164
  %v3166 = vmul.f32 %v3161, %v3165
  %vm3167 = vweird.f32 %v3067
  %vm3168 = vweird.f32 %v3161
  %vm3169 = vmor %vm3167, %vm3168
  %v3170 = vsel %vm3169, %v3161, %v3166
  %v3171 = vrsqrt.pop %v3068
  %v3172 = vmul.f32 %v3171, %v3068
  %v3173 = vmul.f32 %v3172, %v3171
  %v3174 = vmul.f32 0.5, %v3173
  %v3175 = vsub.f32 1.5, %v3174
  %v3176 = vmul.f32 %v3171, %v3175
  %vm3177 = vweird.f32 %v3068
  %vm3178 = vweird.f32 %v3171
  %vm3179 = vmor %vm3177, %vm3178
  %v3180 = vsel %vm3179, %v3171, %v3176
  %v3181 = vrsqrt.pop %v3069
  %v3182 = vmul.f32 %v3181, %v3069
  %v3183 = vmul.f32 %v3182, %v3181
  %v3184 = vmul.f32 0.5, %v3183
  %v3185 = vsub.f32 1.5, %v3184
  %v3186 = vmul.f32 %v3181, %v3185
  %vm3187 = vweird.f32 %v3069
  %vm3188 = vweird.f32 %v3181
  %vm3189 = vmor %vm3187, %vm3188
  %v3190 = vsel %vm3189, %v3181, %v3186
  %v3191 = vrsqrt.pop %v3070
  %v3192 = vmul.f32 %v3191, %v3070
  %v3193 = vmul.f32 %v3192, %v3191
  %v3194 = vmul.f32 0.5, %v3193
  %v3195 = vsub.f32 1.5, %v3194
  %v3196 = vmul.f32 %v3191, %v3195
  %vm3197 = vweird.f32 %v3070
  %vm3198 = vweird.f32 %v3191
  %vm3199 = vmor %vm3197, %vm3198
  %v3200 = vsel %vm3199, %v3191, %v3196
  %v3201 = vrsqrt.pop %v3071
  %v3202 = vmul.f32 %v3201, %v3071
  %v3203 = vmul.f32 %v3202, %v3201
  %v3204 = vmul.f32 0.5, %v3203
  %v3205 = vsub.f32 1.5, %v3204
  %v3206 = vmul.f32 %v3201, %v3205
  %vm3207 = vweird.f32 %v3071
  %vm3208 = vweird.f32 %v3201
  %vm3209 = vmor %vm3207, %vm3208
  %v3210 = vsel %vm3209, %v3201, %v3206
  %v3211 = vrsqrt.pop %v3072
  %v3212 = vmul.f32 %v3211, %v3072
  %v3213 = vmul.f32 %v3212, %v3211
  %v3214 = vmul.f32 0.5, %v3213
  %v3215 = vsub.f32 1.5, %v3214
  %v3216 = vmul.f32 %v3211, %v3215
  %vm3217 = vweird.f32 %v3072
  %vm3218 = vweird.f32 %v3211
  %vm3219 = vmor %vm3217, %vm3218
  %v3220 = vsel %vm3219, %v3211, %v3216
  %v3221 = vrsqrt.pop %v3073
  %v3222 = vmul.f32 %v3221, %v3073
  %v3223 = vmul.f32 %v3222, %v3221
  %v3224 = vmul.f32 0.5, %v3223
  %v3225 = vsub.f32 1.5, %v3224
  %v3226 = vmul.f32 %v3221, %v3225
  %vm3227 = vweird.f32 %v3073
  %vm3228 = vweird.f32 %v3221
  %vm3229 = vmor %vm3227, %vm3228
  %v3230 = vsel %vm3229, %v3221, %v3226
  %v3231 = vrsqrt.pop %v3074
  %v3232 = vmul.f32 %v3231, %v3074
  %v3233 = vmul.f32 %v3232, %v3231
  %v3234 = vmul.f32 0.5, %v3233
  %v3235 = vsub.f32 1.5, %v3234
  %v3236 = vmul.f32 %v3231, %v3235
  %vm3237 = vweird.f32 %v3074
  %vm3238 = vweird.f32 %v3231
  %vm3239 = vmor %vm3237, %vm3238
  %v3240 = vsel %vm3239, %v3231, %v3236
  %v3241 = vrsqrt.pop %v3075
  %v3242 = vmul.f32 %v3241, %v3075
  %v3243 = vmul.f32 %v3242, %v3241
  %v3244 = vmul.f32 0.5, %v3243
  %v3245 = vsub.f32 1.5, %v3244
  %v3246 = vmul.f32 %v3241, %v3245
  %vm3247 = vweird.f32 %v3075
  %vm3248 = vweird.f32 %v3241
  %vm3249 = vmor %vm3247, %vm3248
  %v3250 = vsel %vm3249, %v3241, %v3246
  %v3251 = vrsqrt.pop %v3076
  %v3252 = vmul.f32 %v3251, %v3076
  %v3253 = vmul.f32 %v3252, %v3251
  %v3254 = vmul.f32 0.5, %v3253
  %v3255 = vsub.f32 1.5, %v3254
  %v3256 = vmul.f32 %v3251, %v3255
  %vm3257 = vweird.f32 %v3076
  %vm3258 = vweird.f32 %v3251
  %vm3259 = vmor %vm3257, %vm3258
  %v3260 = vsel %vm3259, %v3251, %v3256
  %v3261 = vrsqrt.pop %v3077
  %v3262 = vmul.f32 %v3261, %v3077
  %v3263 = vmul.f32 %v3262, %v3261
  %v3264 = vmul.f32 0.5, %v3263
  %v3265 = vsub.f32 1.5, %v3264
  %v3266 = vmul.f32 %v3261, %v3265
  %vm3267 = vweird.f32 %v3077
  %vm3268 = vweird.f32 %v3261
  %vm3269 = vmor %vm3267, %vm3268
  %v3270 = vsel %vm3269, %v3261, %v3266
  %v3271 = vrsqrt.pop %v3078
  %v3272 = vmul.f32 %v3271, %v3078
  %v3273 = vmul.f32 %v3272, %v3271
  %v3274 = vmul.f32 0.5, %v3273
  %v3275 = vsub.f32 1.5, %v3274
  %v3276 = vmul.f32 %v3271, %v3275
  %vm3277 = vweird.f32 %v3078
  %vm3278 = vweird.f32 %v3271
  %vm3279 = vmor %vm3277, %vm3278
  %v3280 = vsel %vm3279, %v3271, %v3276
  %v3281 = vrsqrt.pop %v3079
  %v3282 = vmul.f32 %v3281, %v3079
  %v3283 = vmul.f32 %v3282, %v3281
  %v3284 = vmul.f32 0.5, %v3283
  %v3285 = vsub.f32 1.5, %v3284
  %v3286 = vmul.f32 %v3281, %v3285
  %vm3287 = vweird.f32 %v3079
  %vm3288 = vweird.f32 %v3281
  %vm3289 = vmor %vm3287, %vm3288
  %v3290 = vsel %vm3289, %v3281, %v3286
  %v3291 = vrsqrt.pop %v3080
  %v3292 = vmul.f32 %v3291, %v3080
  %v3293 = vmul.f32 %v3292, %v3291
  %v3294 = vmul.f32 0.5, %v3293
  %v3295 = vsub.f32 1.5, %v3294
  %v3296 = vmul.f32 %v3291, %v3295
  %vm3297 = vweird.f32 %v3080
  %vm3298 = vweird.f32 %v3291
  %vm3299 = vmor %vm3297, %vm3298
  %v3300 = vsel %vm3299, %v3291, %v3296
  %v3301 = vrsqrt.pop %v3081
  %v3302 = vmul.f32 %v3301, %v3081
  %v3303 = vmul.f32 %v3302, %v3301
  %v3304 = vmul.f32 0.5, %v3303
  %v3305 = vsub.f32 1.5, %v3304
  %v3306 = vmul.f32 %v3301, %v3305
  %vm3307 = vweird.f32 %v3081
  %vm3308 = vweird.f32 %v3301
  %vm3309 = vmor %vm3307, %vm3308
  %v3310 = vsel %vm3309, %v3301, %v3306
  %v3311 = vrsqrt.pop %v3082
  %v3312 = vmul.f32 %v3311, %v3082
  %v3313 = vmul.f32 %v3312, %v3311
  %v3314 = vmul.f32 0.5, %v3313
  %v3315 = vsub.f32 1.5, %v3314
  %v3316 = vmul.f32 %v3311, %v3315
  %vm3317 = vweird.f32 %v3082
  %vm3318 = vweird.f32 %v3311
  %vm3319 = vmor %vm3317, %vm3318
  %v3320 = vsel %vm3319, %v3311, %v3316
  %v3321 = vrsqrt.pop %v3083
  %v3322 = vmul.f32 %v3321, %v3083
  %v3323 = vmul.f32 %v3322, %v3321
  %v3324 = vmul.f32 0.5, %v3323
  %v3325 = vsub.f32 1.5, %v3324
  %v3326 = vmul.f32 %v3321, %v3325
  %vm3327 = vweird.f32 %v3083
  %vm3328 = vweird.f32 %v3321
  %vm3329 = vmor %vm3327, %vm3328
  %v3330 = vsel %vm3329, %v3321, %v3326
  %v3331 = vrsqrt.pop %v3084
  %v3332 = vmul.f32 %v3331, %v3084
  %v3333 = vmul.f32 %v3332, %v3331
  %v3334 = vmul.f32 0.5, %v3333
  %v3335 = vsub.f32 1.5, %v3334
  %v3336 = vmul.f32 %v3331, %v3335
  %vm3337 = vweird.f32 %v3084
  %vm3338 = vweird.f32 %v3331
  %vm3339 = vmor %vm3337, %vm3338
  %v3340 = vsel %vm3339, %v3331, %v3336
  %v3341 = vrsqrt.pop %v3085
  %v3342 = vmul.f32 %v3341, %v3085
  %v3343 = vmul.f32 %v3342, %v3341
  %v3344 = vmul.f32 0.5, %v3343
  %v3345 = vsub.f32 1.5, %v3344
  %v3346 = vmul.f32 %v3341, %v3345
  %vm3347 = vweird.f32 %v3085
  %vm3348 = vweird.f32 %v3341
  %vm3349 = vmor %vm3347, %vm3348
  %v3350 = vsel %vm3349, %v3341, %v3346
  %v3351 = vrsqrt.pop %v3086
  %v3352 = vmul.f32 %v3351, %v3086
  %v3353 = vmul.f32 %v3352, %v3351
  %v3354 = vmul.f32 0.5, %v3353
  %v3355 = vsub.f32 1.5, %v3354
  %v3356 = vmul.f32 %v3351, %v3355
  %vm3357 = vweird.f32 %v3086
  %vm3358 = vweird.f32 %v3351
  %vm3359 = vmor %vm3357, %vm3358
  %v3360 = vsel %vm3359, %v3351, %v3356
  %v3361 = vrsqrt.pop %v3087
  %v3362 = vmul.f32 %v3361, %v3087
  %v3363 = vmul.f32 %v3362, %v3361
  %v3364 = vmul.f32 0.5, %v3363
  %v3365 = vsub.f32 1.5, %v3364
  %v3366 = vmul.f32 %v3361, %v3365
  %vm3367 = vweird.f32 %v3087
  %vm3368 = vweird.f32 %v3361
  %vm3369 = vmor %vm3367, %vm3368
  %v3370 = vsel %vm3369, %v3361, %v3366
  %v3371 = vrsqrt.pop %v3088
  %v3372 = vmul.f32 %v3371, %v3088
  %v3373 = vmul.f32 %v3372, %v3371
  %v3374 = vmul.f32 0.5, %v3373
  %v3375 = vsub.f32 1.5, %v3374
  %v3376 = vmul.f32 %v3371, %v3375
  %vm3377 = vweird.f32 %v3088
  %vm3378 = vweird.f32 %v3371
  %vm3379 = vmor %vm3377, %vm3378
  %v3380 = vsel %vm3379, %v3371, %v3376
  %v3381 = vrsqrt.pop %v3089
  %v3382 = vmul.f32 %v3381, %v3089
  %v3383 = vmul.f32 %v3382, %v3381
  %v3384 = vmul.f32 0.5, %v3383
  %v3385 = vsub.f32 1.5, %v3384
  %v3386 = vmul.f32 %v3381, %v3385
  %vm3387 = vweird.f32 %v3089
  %vm3388 = vweird.f32 %v3381
  %vm3389 = vmor %vm3387, %vm3388
  %v3390 = vsel %vm3389, %v3381, %v3386
  %v3391 = vrsqrt.pop %v3090
  %v3392 = vmul.f32 %v3391, %v3090
  %v3393 = vmul.f32 %v3392, %v3391
  %v3394 = vmul.f32 0.5, %v3393
  %v3395 = vsub.f32 1.5, %v3394
  %v3396 = vmul.f32 %v3391, %v3395
  %vm3397 = vweird.f32 %v3090
  %vm3398 = vweird.f32 %v3391
  %vm3399 = vmor %vm3397, %vm3398
  %v3400 = vsel %vm3399, %v3391, %v3396
  %v3401 = vrsqrt.pop %v3091
  %v3402 = vmul.f32 %v3401, %v3091
  %v3403 = vmul.f32 %v3402, %v3401
  %v3404 = vmul.f32 0.5, %v3403
  %v3405 = vsub.f32 1.5, %v3404
  %v3406 = vmul.f32 %v3401, %v3405
  %vm3407 = vweird.f32 %v3091
  %vm3408 = vweird.f32 %v3401
  %vm3409 = vmor %vm3407, %vm3408
  %v3410 = vsel %vm3409, %v3401, %v3406
  %v3411 = vrsqrt.pop %v3092
  %v3412 = vmul.f32 %v3411, %v3092
  %v3413 = vmul.f32 %v3412, %v3411
  %v3414 = vmul.f32 0.5, %v3413
  %v3415 = vsub.f32 1.5, %v3414
  %v3416 = vmul.f32 %v3411, %v3415
  %vm3417 = vweird.f32 %v3092
  %vm3418 = vweird.f32 %v3411
  %vm3419 = vmor %vm3417, %vm3418
  %v3420 = vsel %vm3419, %v3411, %v3416
  %v3421 = vrsqrt.pop %v3093
  %v3422 = vmul.f32 %v3421, %v3093
  %v3423 = vmul.f32 %v3422, %v3421
  %v3424 = vmul.f32 0.5, %v3423
  %v3425 = vsub.f32 1.5, %v3424
  %v3426 = vmul.f32 %v3421, %v3425
  %vm3427 = vweird.f32 %v3093
  %vm3428 = vweird.f32 %v3421
  %vm3429 = vmor %vm3427, %vm3428
  %v3430 = vsel %vm3429, %v3421, %v3426
  %v3431 = vrsqrt.pop %v3094
  %v3432 = vmul.f32 %v3431, %v3094
  %v3433 = vmul.f32 %v3432, %v3431
  %v3434 = vmul.f32 0.5, %v3433
  %v3435 = vsub.f32 1.5, %v3434
  %v3436 = vmul.f32 %v3431, %v3435
  %vm3437 = vweird.f32 %v3094
  %vm3438 = vweird.f32 %v3431
  %vm3439 = vmor %vm3437, %vm3438
  %v3440 = vsel %vm3439, %v3431, %v3436
  %v3441 = vrsqrt.pop %v3095
  %v3442 = vmul.f32 %v3441, %v3095
  %v3443 = vmul.f32 %v3442, %v3441
  %v3444 = vmul.f32 0.5, %v3443
  %v3445 = vsub.f32 1.5, %v3444
  %v3446 = vmul.f32 %v3441, %v3445
  %vm3447 = vweird.f32 %v3095
  %vm3448 = vweird.f32 %v3441
  %vm3449 = vmor %vm3447, %vm3448
  %v3450 = vsel %vm3449, %v3441, %v3446
  %v3451 = vrsqrt.pop %v3096
  %v3452 = vmul.f32 %v3451, %v3096
  %v3453 = vmul.f32 %v3452, %v3451
  %v3454 = vmul.f32 0.5, %v3453
  %v3455 = vsub.f32 1.5, %v3454
  %v3456 = vmul.f32 %v3451, %v3455
  %vm3457 = vweird.f32 %v3096
  %vm3458 = vweird.f32 %v3451
  %vm3459 = vmor %vm3457, %vm3458
  %v3460 = vsel %vm3459, %v3451, %v3456
  %v3461 = vrsqrt.pop %v3097
  %v3462 = vmul.f32 %v3461, %v3097
  %v3463 = vmul.f32 %v3462, %v3461
  %v3464 = vmul.f32 0.5, %v3463
  %v3465 = vsub.f32 1.5, %v3464
  %v3466 = vmul.f32 %v3461, %v3465
  %vm3467 = vweird.f32 %v3097
  %vm3468 = vweird.f32 %v3461
  %vm3469 = vmor %vm3467, %vm3468
  %v3470 = vsel %vm3469, %v3461, %v3466
  %v3471 = vrsqrt.pop %v3098
  %v3472 = vmul.f32 %v3471, %v3098
  %v3473 = vmul.f32 %v3472, %v3471
  %v3474 = vmul.f32 0.5, %v3473
  %v3475 = vsub.f32 1.5, %v3474
  %v3476 = vmul.f32 %v3471, %v3475
  %vm3477 = vweird.f32 %v3098
  %vm3478 = vweird.f32 %v3471
  %vm3479 = vmor %vm3477, %vm3478
  %v3480 = vsel %vm3479, %v3471, %v3476
  %v3481 = vrsqrt.pop %v3099
  %v3482 = vmul.f32 %v3481, %v3099
  %v3483 = vmul.f32 %v3482, %v3481
  %v3484 = vmul.f32 0.5, %v3483
  %v3485 = vsub.f32 1.5, %v3484
  %v3486 = vmul.f32 %v3481, %v3485
  %vm3487 = vweird.f32 %v3099
  %vm3488 = vweird.f32 %v3481
  %vm3489 = vmor %vm3487, %vm3488
  %v3490 = vsel %vm3489, %v3481, %v3486
  %v3491 = vrsqrt.pop %v3100
  %v3492 = vmul.f32 %v3491, %v3100
  %v3493 = vmul.f32 %v3492, %v3491
  %v3494 = vmul.f32 0.5, %v3493
  %v3495 = vsub.f32 1.5, %v3494
  %v3496 = vmul.f32 %v3491, %v3495
  %vm3497 = vweird.f32 %v3100
  %vm3498 = vweird.f32 %v3491
  %vm3499 = vmor %vm3497, %vm3498
  %v3500 = vsel %vm3499, %v3491, %v3496
  %v3501 = vld [vmem:[%s2] sm:$0xff]
  %v3502 = vld [vmem:[%s2 + $0x8] sm:$0xff]
  %v3503 = vld [vmem:[%s2 + $0x10] sm:$0xff]
  %v3504 = vld [vmem:[%s2 + $0x18] sm:$0xff]
  %v3505 = vld [vmem:[%s2 + $0x20] sm:$0xff]
  %v3506 = vld [vmem:[%s2 + $0x28] sm:$0xff]
  %v3507 = vld [vmem:[%s2 + $0x30] sm:$0xff]
  %v3508 = vld [vmem:[%s2 + $0x38] sm:$0xff]
  %v3509 = vld [vmem:[%s2 + $0x40] sm:$0xff]
  %v3510 = vld [vmem:[%s2 + $0x48] sm:$0xff]
  %v3511 = vld [vmem:[%s2 + $0x50] sm:$0xff]
  %v3512 = vld [vmem:[%s2 + $0x58] sm:$0xff]
  %v3513 = vld [vmem:[%s2 + $0x60] sm:$0xff]
  %v3514 = vld [vmem:[%s2 + $0x68] sm:$0xff]
  %v3515 = vld [vmem:[%s2 + $0x70] sm:$0xff]
  %v3516 = vld [vmem:[%s2 + $0x78] sm:$0xff]
  %v3517 = vld [vmem:[%s2 + $0x80] sm:$0xff]
  %v3518 = vld [vmem:[%s2 + $0x88] sm:$0xff]
  %v3519 = vld [vmem:[%s2 + $0x90] sm:$0xff]
  %v3520 = vld [vmem:[%s2 + $0x98] sm:$0xff]
  %v3521 = vld [vmem:[%s2 + $0xa0] sm:$0xff]
  %v3522 = vld [vmem:[%s2 + $0xa8] sm:$0xff]
  %v3523 = vld [vmem:[%s2 + $0xb0] sm:$0xff]
  %v3524 = vld [vmem:[%s2 + $0xb8] sm:$0xff]
  %v3525 = vld [vmem:[%s2 + $0xc0] sm:$0xff]
  %v3526 = vld [vmem:[%s2 + $0xc8] sm:$0xff]
  %v3527 = vld [vmem:[%s2 + $0xd0] sm:$0xff]
  %v3528 = vld [vmem:[%s2 + $0xd8] sm:$0xff]
  %v3529 = vld [vmem:[%s2 + $0xe0] sm:$0xff]
  %v3530 = vld [vmem:[%s2 + $0xe8] sm:$0xff]
  %v3531 = vld [vmem:[%s2 + $0xf0] sm:$0xff]
  %v3532 = vld [vmem:[%s2 + $0xf8] sm:$0xff]
  %v3533 = vld [vmem:[%s2 + $0x100] sm:$0xff]
  %v3534 = vld [vmem:[%s2 + $0x108] sm:$0xff]
  %v3535 = vld [vmem:[%s2 + $0x110] sm:$0xff]
  %v3536 = vld [vmem:[%s2 + $0x118] sm:$0xff]
  %v3537 = vld [vmem:[%s2 + $0x120] sm:$0xff]
  %v3538 = vld [vmem:[%s2 + $0x128] sm:$0xff]
  %v3539 = vld [vmem:[%s2 + $0x130] sm:$0xff]
  %v3540 = vld [vmem:[%s2 + $0x138] sm:$0xff]
  %v3541 = vmul.f32 %v3110, %v3501
  %v3542 = vmul.f32 %v3120, %v3502
  %v3543 = vmul.f32 %v3130, %v3503
  %v3544 = vmul.f32 %v3140, %v3504
  %v3545 = vmul.f32 %v3150, %v3505
  %v3546 = vmul.f32 %v3160, %v3506
  %v3547 = vmul.f32 %v3170, %v3507
  %v3548 = vmul.f32 %v3180, %v3508
  %v3549 = vmul.f32 %v3190, %v3509
  %v3550 = vmul.f32 %v3200, %v3510
  %v3551 = vmul.f32 %v3210, %v3511
  %v3552 = vmul.f32 %v3220, %v3512
  %v3553 = vmul.f32 %v3230, %v3513
  %v3554 = vmul.f32 %v3240, %v3514
  %v3555 = vmul.f32 %v3250, %v3515
  %v3556 = vmul.f32 %v3260, %v3516
  %v3557 = vmul.f32 %v3270, %v3517
  %v3558 = vmul.f32 %v3280, %v3518
  %v3559 = vmul.f32 %v3290, %v3519
  %v3560 = vmul.f32 %v3300, %v3520
  %v3561 = vmul.f32 %v3310, %v3521
  %v3562 = vmul.f32 %v3320, %v3522
  %v3563 = vmul.f32 %v3330, %v3523
  %v3564 = vmul.f32 %v3340, %v3524
  %v3565 = vmul.f32 %v3350, %v3525
  %v3566 = vmul.f32 %v3360, %v3526
  %v3567 = vmul.f32 %v3370, %v3527
  %v3568 = vmul.f32 %v3380, %v3528
  %v3569 = vmul.f32 %v3390, %v3529
  %v3570 = vmul.f32 %v3400, %v3530
  %v3571 = vmul.f32 %v3410, %v3531
  %v3572 = vmul.f32 %v3420, %v3532
  %v3573 = vmul.f32 %v3430, %v3533
  %v3574 = vmul.f32 %v3440, %v3534
  %v3575 = vmul.f32 %v3450, %v3535
  %v3576 = vmul.f32 %v3460, %v3536
  %v3577 = vmul.f32 %v3470, %v3537
  %v3578 = vmul.f32 %v3480, %v3538
  %v3579 = vmul.f32 %v3490, %v3539
  %v3580 = vmul.f32 %v3500, %v3540
  %3582 = vset.pattern.permute.xlu0 0
  %3583 = vperm.xlu0 %3582, %v3541
  %v3584 = vpop.permute.xlu0 %3583
  %3587 = vset.pattern.permute.xlu0 0
  %3588 = vperm.xlu0 %3587, %v3542
  %v3589 = vpop.permute.xlu0 %3588
  %3592 = vset.pattern.permute.xlu0 0
  %3593 = vperm.xlu0 %3592, %v3543
  %v3594 = vpop.permute.xlu0 %3593
  %3597 = vset.pattern.permute.xlu0 0
  %3598 = vperm.xlu0 %3597, %v3544
  %v3599 = vpop.permute.xlu0 %3598
  %3602 = vset.pattern.permute.xlu0 0
  %3603 = vperm.xlu0 %3602, %v3545
  %v3604 = vpop.permute.xlu0 %3603
  %3607 = vset.pattern.permute.xlu0 0
  %3608 = vperm.xlu0 %3607, %v3546
  %v3609 = vpop.permute.xlu0 %3608
  %3612 = vset.pattern.permute.xlu0 0
  %3613 = vperm.xlu0 %3612, %v3547
  %v3614 = vpop.permute.xlu0 %3613
  %3617 = vset.pattern.permute.xlu0 0
  %3618 = vperm.xlu0 %3617, %v3548
  %v3619 = vpop.permute.xlu0 %3618
  %3622 = vset.pattern.permute.xlu0 0
  %3623 = vperm.xlu0 %3622, %v3549
  %v3624 = vpop.permute.xlu0 %3623
  %3627 = vset.pattern.permute.xlu0 0
  %3628 = vperm.xlu0 %3627, %v3550
  %v3629 = vpop.permute.xlu0 %3628
  %3632 = vset.pattern.permute.xlu0 0
  %3633 = vperm.xlu0 %3632, %v3551
  %v3634 = vpop.permute.xlu0 %3633
  %3637 = vset.pattern.permute.xlu0 0
  %3638 = vperm.xlu0 %3637, %v3552
  %v3639 = vpop.permute.xlu0 %3638
  %3642 = vset.pattern.permute.xlu0 0
  %3643 = vperm.xlu0 %3642, %v3553
  %v3644 = vpop.permute.xlu0 %3643
  %3647 = vset.pattern.permute.xlu0 0
  %3648 = vperm.xlu0 %3647, %v3554
  %v3649 = vpop.permute.xlu0 %3648
  %3652 = vset.pattern.permute.xlu0 0
  %3653 = vperm.xlu0 %3652, %v3555
  %v3654 = vpop.permute.xlu0 %3653
  %3657 = vset.pattern.permute.xlu0 0
  %3658 = vperm.xlu0 %3657, %v3556
  %v3659 = vpop.permute.xlu0 %3658
  %3662 = vset.pattern.permute.xlu0 0
  %3663 = vperm.xlu0 %3662, %v3557
  %v3664 = vpop.permute.xlu0 %3663
  %3667 = vset.pattern.permute.xlu0 0
  %3668 = vperm.xlu0 %3667, %v3558
  %v3669 = vpop.permute.xlu0 %3668
  %3672 = vset.pattern.permute.xlu0 0
  %3673 = vperm.xlu0 %3672, %v3559
  %v3674 = vpop.permute.xlu0 %3673
  %3677 = vset.pattern.permute.xlu0 0
  %3678 = vperm.xlu0 %3677, %v3560
  %v3679 = vpop.permute.xlu0 %3678
  %3682 = vset.pattern.permute.xlu0 0
  %3683 = vperm.xlu0 %3682, %v3561
  %v3684 = vpop.permute.xlu0 %3683
  %3687 = vset.pattern.permute.xlu0 0
  %3688 = vperm.xlu0 %3687, %v3562
  %v3689 = vpop.permute.xlu0 %3688
  %3692 = vset.pattern.permute.xlu0 0
  %3693 = vperm.xlu0 %3692, %v3563
  %v3694 = vpop.permute.xlu0 %3693
  %3697 = vset.pattern.permute.xlu0 0
  %3698 = vperm.xlu0 %3697, %v3564
  %v3699 = vpop.permute.xlu0 %3698
  %3702 = vset.pattern.permute.xlu0 0
  %3703 = vperm.xlu0 %3702, %v3565
  %v3704 = vpop.permute.xlu0 %3703
  %3707 = vset.pattern.permute.xlu0 0
  %3708 = vperm.xlu0 %3707, %v3566
  %v3709 = vpop.permute.xlu0 %3708
  %3712 = vset.pattern.permute.xlu0 0
  %3713 = vperm.xlu0 %3712, %v3567
  %v3714 = vpop.permute.xlu0 %3713
  %3717 = vset.pattern.permute.xlu0 0
  %3718 = vperm.xlu0 %3717, %v3568
  %v3719 = vpop.permute.xlu0 %3718
  %3722 = vset.pattern.permute.xlu0 0
  %3723 = vperm.xlu0 %3722, %v3569
  %v3724 = vpop.permute.xlu0 %3723
  %3727 = vset.pattern.permute.xlu0 0
  %3728 = vperm.xlu0 %3727, %v3570
  %v3729 = vpop.permute.xlu0 %3728
  %3732 = vset.pattern.permute.xlu0 0
  %3733 = vperm.xlu0 %3732, %v3571
  %v3734 = vpop.permute.xlu0 %3733
  %3737 = vset.pattern.permute.xlu0 0
  %3738 = vperm.xlu0 %3737, %v3572
  %v3739 = vpop.permute.xlu0 %3738
  %3742 = vset.pattern.permute.xlu0 0
  %3743 = vperm.xlu0 %3742, %v3573
  %v3744 = vpop.permute.xlu0 %3743
  %3747 = vset.pattern.permute.xlu0 0
  %3748 = vperm.xlu0 %3747, %v3574
  %v3749 = vpop.permute.xlu0 %3748
  %3752 = vset.pattern.permute.xlu0 0
  %3753 = vperm.xlu0 %3752, %v3575
  %v3754 = vpop.permute.xlu0 %3753
  %3757 = vset.pattern.permute.xlu0 0
  %3758 = vperm.xlu0 %3757, %v3576
  %v3759 = vpop.permute.xlu0 %3758
  %3762 = vset.pattern.permute.xlu0 0
  %3763 = vperm.xlu0 %3762, %v3577
  %v3764 = vpop.permute.xlu0 %3763
  %3767 = vset.pattern.permute.xlu0 0
  %3768 = vperm.xlu0 %3767, %v3578
  %v3769 = vpop.permute.xlu0 %3768
  %3772 = vset.pattern.permute.xlu0 0
  %3773 = vperm.xlu0 %3772, %v3579
  %v3774 = vpop.permute.xlu0 %3773
  %3777 = vset.pattern.permute.xlu0 0
  %3778 = vperm.xlu0 %3777, %v3580
  %v3779 = vpop.permute.xlu0 %3778
  %v3781 = vmul.f32 %v2818, %v3584
  %v3782 = vmul.f32 %v2819, %v3589
  %v3783 = vmul.f32 %v2820, %v3594
  %v3784 = vmul.f32 %v2821, %v3599
  %v3785 = vmul.f32 %v2822, %v3604
  %v3786 = vmul.f32 %v2823, %v3609
  %v3787 = vmul.f32 %v2824, %v3614
  %v3788 = vmul.f32 %v2825, %v3619
  %v3789 = vmul.f32 %v2826, %v3624
  %v3790 = vmul.f32 %v2827, %v3629
  %v3791 = vmul.f32 %v2828, %v3634
  %v3792 = vmul.f32 %v2829, %v3639
  %v3793 = vmul.f32 %v2830, %v3644
  %v3794 = vmul.f32 %v2831, %v3649
  %v3795 = vmul.f32 %v2832, %v3654
  %v3796 = vmul.f32 %v2833, %v3659
  %v3797 = vmul.f32 %v2834, %v3664
  %v3798 = vmul.f32 %v2835, %v3669
  %v3799 = vmul.f32 %v2836, %v3674
  %v3800 = vmul.f32 %v2837, %v3679
  %v3801 = vmul.f32 %v2838, %v3684
  %v3802 = vmul.f32 %v2839, %v3689
  %v3803 = vmul.f32 %v2840, %v3694
  %v3804 = vmul.f32 %v2841, %v3699
  %v3805 = vmul.f32 %v2842, %v3704
  %v3806 = vmul.f32 %v2843, %v3709
  %v3807 = vmul.f32 %v2844, %v3714
  %v3808 = vmul.f32 %v2845, %v3719
  %v3809 = vmul.f32 %v2846, %v3724
  %v3810 = vmul.f32 %v2847, %v3729
  %v3811 = vmul.f32 %v2848, %v3734
  %v3812 = vmul.f32 %v2849, %v3739
  %v3813 = vmul.f32 %v2850, %v3744
  %v3814 = vmul.f32 %v2851, %v3749
  %v3815 = vmul.f32 %v2852, %v3754
  %v3816 = vmul.f32 %v2853, %v3759
  %v3817 = vmul.f32 %v2854, %v3764
  %v3818 = vmul.f32 %v2855, %v3769
  %v3819 = vmul.f32 %v2856, %v3774
  %v3820 = vmul.f32 %v2857, %v3779
  %v3821 = vld [vmem:[%s3] sm:$0xff]
  %v3822 = vld [vmem:[%s3 + $0x8] sm:$0xff]
  %v3823 = vld [vmem:[%s3 + $0x10] sm:$0xff]
  %v3824 = vld [vmem:[%s3 + $0x18] sm:$0xff]
  %v3825 = vld [vmem:[%s3 + $0x20] sm:$0xff]
  %v3826 = vld [vmem:[%s3 + $0x28] sm:$0xff]
  %v3827 = vld [vmem:[%s3 + $0x30] sm:$0xff]
  %v3828 = vld [vmem:[%s3 + $0x38] sm:$0xff]
  %v3829 = vld [vmem:[%s3 + $0x40] sm:$0xff]
  %v3830 = vld [vmem:[%s3 + $0x48] sm:$0xff]
  %v3831 = vld [vmem:[%s3 + $0x50] sm:$0xff]
  %v3832 = vld [vmem:[%s3 + $0x58] sm:$0xff]
  %v3833 = vld [vmem:[%s3 + $0x60] sm:$0xff]
  %v3834 = vld [vmem:[%s3 + $0x68] sm:$0xff]
  %v3835 = vld [vmem:[%s3 + $0x70] sm:$0xff]
  %v3836 = vld [vmem:[%s3 + $0x78] sm:$0xff]
  %v3837 = vld [vmem:[%s3 + $0x80] sm:$0xff]
  %v3838 = vld [vmem:[%s3 + $0x88] sm:$0xff]
  %v3839 = vld [vmem:[%s3 + $0x90] sm:$0xff]
  %v3840 = vld [vmem:[%s3 + $0x98] sm:$0xff]
  %v3841 = vld [vmem:[%s3 + $0xa0] sm:$0xff]
  %v3842 = vld [vmem:[%s3 + $0xa8] sm:$0xff]
  %v3843 = vld [vmem:[%s3 + $0xb0] sm:$0xff]
  %v3844 = vld [vmem:[%s3 + $0xb8] sm:$0xff]
  %v3845 = vld [vmem:[%s3 + $0xc0] sm:$0xff]
  %v3846 = vld [vmem:[%s3 + $0xc8] sm:$0xff]
  %v3847 = vld [vmem:[%s3 + $0xd0] sm:$0xff]
  %v3848 = vld [vmem:[%s3 + $0xd8] sm:$0xff]
  %v3849 = vld [vmem:[%s3 + $0xe0] sm:$0xff]
  %v3850 = vld [vmem:[%s3 + $0xe8] sm:$0xff]
  %v3851 = vld [vmem:[%s3 + $0xf0] sm:$0xff]
  %v3852 = vld [vmem:[%s3 + $0xf8] sm:$0xff]
  %v3853 = vld [vmem:[%s3 + $0x100] sm:$0xff]
  %v3854 = vld [vmem:[%s3 + $0x108] sm:$0xff]
  %v3855 = vld [vmem:[%s3 + $0x110] sm:$0xff]
  %v3856 = vld [vmem:[%s3 + $0x118] sm:$0xff]
  %v3857 = vld [vmem:[%s3 + $0x120] sm:$0xff]
  %v3858 = vld [vmem:[%s3 + $0x128] sm:$0xff]
  %v3859 = vld [vmem:[%s3 + $0x130] sm:$0xff]
  %v3860 = vld [vmem:[%s3 + $0x138] sm:$0xff]
  %3862 = vset.pattern.permute.xlu0 0
  %3863 = vperm.xlu0 %3862, %v3821
  %v3864 = vpop.permute.xlu0 %3863
  %3867 = vset.pattern.permute.xlu0 0
  %3868 = vperm.xlu0 %3867, %v3822
  %v3869 = vpop.permute.xlu0 %3868
  %3872 = vset.pattern.permute.xlu0 0
  %3873 = vperm.xlu0 %3872, %v3823
  %v3874 = vpop.permute.xlu0 %3873
  %3877 = vset.pattern.permute.xlu0 0
  %3878 = vperm.xlu0 %3877, %v3824
  %v3879 = vpop.permute.xlu0 %3878
  %3882 = vset.pattern.permute.xlu0 0
  %3883 = vperm.xlu0 %3882, %v3825
  %v3884 = vpop.permute.xlu0 %3883
  %3887 = vset.pattern.permute.xlu0 0
  %3888 = vperm.xlu0 %3887, %v3826
  %v3889 = vpop.permute.xlu0 %3888
  %3892 = vset.pattern.permute.xlu0 0
  %3893 = vperm.xlu0 %3892, %v3827
  %v3894 = vpop.permute.xlu0 %3893
  %3897 = vset.pattern.permute.xlu0 0
  %3898 = vperm.xlu0 %3897, %v3828
  %v3899 = vpop.permute.xlu0 %3898
  %3902 = vset.pattern.permute.xlu0 0
  %3903 = vperm.xlu0 %3902, %v3829
  %v3904 = vpop.permute.xlu0 %3903
  %3907 = vset.pattern.permute.xlu0 0
  %3908 = vperm.xlu0 %3907, %v3830
  %v3909 = vpop.permute.xlu0 %3908
  %3912 = vset.pattern.permute.xlu0 0
  %3913 = vperm.xlu0 %3912, %v3831
  %v3914 = vpop.permute.xlu0 %3913
  %3917 = vset.pattern.permute.xlu0 0
  %3918 = vperm.xlu0 %3917, %v3832
  %v3919 = vpop.permute.xlu0 %3918
  %3922 = vset.pattern.permute.xlu0 0
  %3923 = vperm.xlu0 %3922, %v3833
  %v3924 = vpop.permute.xlu0 %3923
  %3927 = vset.pattern.permute.xlu0 0
  %3928 = vperm.xlu0 %3927, %v3834
  %v3929 = vpop.permute.xlu0 %3928
  %3932 = vset.pattern.permute.xlu0 0
  %3933 = vperm.xlu0 %3932, %v3835
  %v3934 = vpop.permute.xlu0 %3933
  %3937 = vset.pattern.permute.xlu0 0
  %3938 = vperm.xlu0 %3937, %v3836
  %v3939 = vpop.permute.xlu0 %3938
  %3942 = vset.pattern.permute.xlu0 0
  %3943 = vperm.xlu0 %3942, %v3837
  %v3944 = vpop.permute.xlu0 %3943
  %3947 = vset.pattern.permute.xlu0 0
  %3948 = vperm.xlu0 %3947, %v3838
  %v3949 = vpop.permute.xlu0 %3948
  %3952 = vset.pattern.permute.xlu0 0
  %3953 = vperm.xlu0 %3952, %v3839
  %v3954 = vpop.permute.xlu0 %3953
  %3957 = vset.pattern.permute.xlu0 0
  %3958 = vperm.xlu0 %3957, %v3840
  %v3959 = vpop.permute.xlu0 %3958
  %3962 = vset.pattern.permute.xlu0 0
  %3963 = vperm.xlu0 %3962, %v3841
  %v3964 = vpop.permute.xlu0 %3963
  %3967 = vset.pattern.permute.xlu0 0
  %3968 = vperm.xlu0 %3967, %v3842
  %v3969 = vpop.permute.xlu0 %3968
  %3972 = vset.pattern.permute.xlu0 0
  %3973 = vperm.xlu0 %3972, %v3843
  %v3974 = vpop.permute.xlu0 %3973
  %3977 = vset.pattern.permute.xlu0 0
  %3978 = vperm.xlu0 %3977, %v3844
  %v3979 = vpop.permute.xlu0 %3978
  %3982 = vset.pattern.permute.xlu0 0
  %3983 = vperm.xlu0 %3982, %v3845
  %v3984 = vpop.permute.xlu0 %3983
  %3987 = vset.pattern.permute.xlu0 0
  %3988 = vperm.xlu0 %3987, %v3846
  %v3989 = vpop.permute.xlu0 %3988
  %3992 = vset.pattern.permute.xlu0 0
  %3993 = vperm.xlu0 %3992, %v3847
  %v3994 = vpop.permute.xlu0 %3993
  %3997 = vset.pattern.permute.xlu0 0
  %3998 = vperm.xlu0 %3997, %v3848
  %v3999 = vpop.permute.xlu0 %3998
  %4002 = vset.pattern.permute.xlu0 0
  %4003 = vperm.xlu0 %4002, %v3849
  %v4004 = vpop.permute.xlu0 %4003
  %4007 = vset.pattern.permute.xlu0 0
  %4008 = vperm.xlu0 %4007, %v3850
  %v4009 = vpop.permute.xlu0 %4008
  %4012 = vset.pattern.permute.xlu0 0
  %4013 = vperm.xlu0 %4012, %v3851
  %v4014 = vpop.permute.xlu0 %4013
  %4017 = vset.pattern.permute.xlu0 0
  %4018 = vperm.xlu0 %4017, %v3852
  %v4019 = vpop.permute.xlu0 %4018
  %4022 = vset.pattern.permute.xlu0 0
  %4023 = vperm.xlu0 %4022, %v3853
  %v4024 = vpop.permute.xlu0 %4023
  %4027 = vset.pattern.permute.xlu0 0
  %4028 = vperm.xlu0 %4027, %v3854
  %v4029 = vpop.permute.xlu0 %4028
  %4032 = vset.pattern.permute.xlu0 0
  %4033 = vperm.xlu0 %4032, %v3855
  %v4034 = vpop.permute.xlu0 %4033
  %4037 = vset.pattern.permute.xlu0 0
  %4038 = vperm.xlu0 %4037, %v3856
  %v4039 = vpop.permute.xlu0 %4038
  %4042 = vset.pattern.permute.xlu0 0
  %4043 = vperm.xlu0 %4042, %v3857
  %v4044 = vpop.permute.xlu0 %4043
  %4047 = vset.pattern.permute.xlu0 0
  %4048 = vperm.xlu0 %4047, %v3858
  %v4049 = vpop.permute.xlu0 %4048
  %4052 = vset.pattern.permute.xlu0 0
  %4053 = vperm.xlu0 %4052, %v3859
  %v4054 = vpop.permute.xlu0 %4053
  %4057 = vset.pattern.permute.xlu0 0
  %4058 = vperm.xlu0 %4057, %v3860
  %v4059 = vpop.permute.xlu0 %4058
  %v4061 = vadd.f32 %v3781, %v3864
  %v4062 = vadd.f32 %v3782, %v3869
  %v4063 = vadd.f32 %v3783, %v3874
  %v4064 = vadd.f32 %v3784, %v3879
  %v4065 = vadd.f32 %v3785, %v3884
  %v4066 = vadd.f32 %v3786, %v3889
  %v4067 = vadd.f32 %v3787, %v3894
  %v4068 = vadd.f32 %v3788, %v3899
  %v4069 = vadd.f32 %v3789, %v3904
  %v4070 = vadd.f32 %v3790, %v3909
  %v4071 = vadd.f32 %v3791, %v3914
  %v4072 = vadd.f32 %v3792, %v3919
  %v4073 = vadd.f32 %v3793, %v3924
  %v4074 = vadd.f32 %v3794, %v3929
  %v4075 = vadd.f32 %v3795, %v3934
  %v4076 = vadd.f32 %v3796, %v3939
  %v4077 = vadd.f32 %v3797, %v3944
  %v4078 = vadd.f32 %v3798, %v3949
  %v4079 = vadd.f32 %v3799, %v3954
  %v4080 = vadd.f32 %v3800, %v3959
  %v4081 = vadd.f32 %v3801, %v3964
  %v4082 = vadd.f32 %v3802, %v3969
  %v4083 = vadd.f32 %v3803, %v3974
  %v4084 = vadd.f32 %v3804, %v3979
  %v4085 = vadd.f32 %v3805, %v3984
  %v4086 = vadd.f32 %v3806, %v3989
  %v4087 = vadd.f32 %v3807, %v3994
  %v4088 = vadd.f32 %v3808, %v3999
  %v4089 = vadd.f32 %v3809, %v4004
  %v4090 = vadd.f32 %v3810, %v4009
  %v4091 = vadd.f32 %v3811, %v4014
  %v4092 = vadd.f32 %v3812, %v4019
  %v4093 = vadd.f32 %v3813, %v4024
  %v4094 = vadd.f32 %v3814, %v4029
  %v4095 = vadd.f32 %v3815, %v4034
  %v4096 = vadd.f32 %v3816, %v4039
  %v4097 = vadd.f32 %v3817, %v4044
  %v4098 = vadd.f32 %v3818, %v4049
  %v4099 = vadd.f32 %v3819, %v4054
  %v4100 = vadd.f32 %v3820, %v4059
  %v4101 = vld [vmem:[%s4] sm:$0xff]
  %v4102 = vld [vmem:[%s4 + $0x8] sm:$0xf]
  %v4103 = vld [vmem:[%s4 + $0xc] sm:$0xff]
  %v4104 = vld [vmem:[%s4 + $0x14] sm:$0xf]
  %v4105 = vld [vmem:[%s4 + $0x18] sm:$0xff]
  %v4106 = vld [vmem:[%s4 + $0x20] sm:$0xf]
  %v4107 = vld [vmem:[%s4 + $0x24] sm:$0xff]
  %v4108 = vld [vmem:[%s4 + $0x2c] sm:$0xf]
  %v4109 = vld [vmem:[%s4 + $0x30] sm:$0xff]
  %v4110 = vld [vmem:[%s4 + $0x38] sm:$0xf]
  %v4111 = vld [vmem:[%s4 + $0x3c] sm:$0xff]
  %v4112 = vld [vmem:[%s4 + $0x44] sm:$0xf]
  %v4113 = vld [vmem:[%s4 + $0x48] sm:$0xff]
  %v4114 = vld [vmem:[%s4 + $0x50] sm:$0xf]
  %v4115 = vld [vmem:[%s4 + $0x54] sm:$0xff]
  %v4116 = vld [vmem:[%s4 + $0x5c] sm:$0xf]
  %v4117 = vld [vmem:[%s4 + $0x60] sm:$0xff]
  %v4118 = vld [vmem:[%s4 + $0x68] sm:$0xf]
  %v4119 = vld [vmem:[%s4 + $0x6c] sm:$0xff]
  %v4120 = vld [vmem:[%s4 + $0x74] sm:$0xf]
  %v4121 = vld [vmem:[%s4 + $0x78] sm:$0xff]
  %v4122 = vld [vmem:[%s4 + $0x80] sm:$0xf]
  %v4123 = vld [vmem:[%s4 + $0x84] sm:$0xff]
  %v4124 = vld [vmem:[%s4 + $0x8c] sm:$0xf]
  %v4125 = vld [vmem:[%s4 + $0x90] sm:$0xff]
  %v4126 = vld [vmem:[%s4 + $0x98] sm:$0xf]
  %v4127 = vld [vmem:[%s4 + $0x9c] sm:$0xff]
  %v4128 = vld [vmem:[%s4 + $0xa4] sm:$0xf]
  %v4129 = vld [vmem:[%s4 + $0xa8] sm:$0xff]
  %v4130 = vld [vmem:[%s4 + $0xb0] sm:$0xf]
  %v4131 = vld [vmem:[%s4 + $0xb4] sm:$0xff]
  %v4132 = vld [vmem:[%s4 + $0xbc] sm:$0xf]
  %v4133 = vld [vmem:[%s4 + $0xc0] sm:$0xff]
  %v4134 = vld [vmem:[%s4 + $0xc8] sm:$0xf]
  %v4135 = vld [vmem:[%s4 + $0xcc] sm:$0xff]
  %v4136 = vld [vmem:[%s4 + $0xd4] sm:$0xf]
  %v4137 = vld [vmem:[%s4 + $0xd8] sm:$0xff]
  %v4138 = vld [vmem:[%s4 + $0xe0] sm:$0xf]
  %v4139 = vld [vmem:[%s4 + $0xe4] sm:$0xff]
  %v4140 = vld [vmem:[%s4 + $0xec] sm:$0xf]
  %v4141 = vld [vmem:[%s4 + $0xf0] sm:$0xff]
  %v4142 = vld [vmem:[%s4 + $0xf8] sm:$0xf]
  %v4143 = vld [vmem:[%s4 + $0xfc] sm:$0xff]
  %v4144 = vld [vmem:[%s4 + $0x104] sm:$0xf]
  %v4145 = vld [vmem:[%s4 + $0x108] sm:$0xff]
  %v4146 = vld [vmem:[%s4 + $0x110] sm:$0xf]
  %v4147 = vld [vmem:[%s4 + $0x114] sm:$0xff]
  %v4148 = vld [vmem:[%s4 + $0x11c] sm:$0xf]
  %v4149 = vld [vmem:[%s4 + $0x120] sm:$0xff]
  %v4150 = vld [vmem:[%s4 + $0x128] sm:$0xf]
  %v4151 = vld [vmem:[%s4 + $0x12c] sm:$0xff]
  %v4152 = vld [vmem:[%s4 + $0x134] sm:$0xf]
  %v4153 = vld [vmem:[%s4 + $0x138] sm:$0xff]
  %v4154 = vld [vmem:[%s4 + $0x140] sm:$0xf]
  %v4155 = vld [vmem:[%s4 + $0x144] sm:$0xff]
  %v4156 = vld [vmem:[%s4 + $0x14c] sm:$0xf]
  %v4157 = vld [vmem:[%s4 + $0x150] sm:$0xff]
  %v4158 = vld [vmem:[%s4 + $0x158] sm:$0xf]
  %v4159 = vld [vmem:[%s4 + $0x15c] sm:$0xff]
  %v4160 = vld [vmem:[%s4 + $0x164] sm:$0xf]
  %v4161 = vld [vmem:[%s4 + $0x168] sm:$0xff]
  %v4162 = vld [vmem:[%s4 + $0x170] sm:$0xf]
  %v4163 = vld [vmem:[%s4 + $0x174] sm:$0xff]
  %v4164 = vld [vmem:[%s4 + $0x17c] sm:$0xf]
  %v4165 = vld [vmem:[%s4 + $0x180] sm:$0xff]
  %v4166 = vld [vmem:[%s4 + $0x188] sm:$0xf]
  %v4167 = vld [vmem:[%s4 + $0x18c] sm:$0xff]
  %v4168 = vld [vmem:[%s4 + $0x194] sm:$0xf]
  %v4169 = vld [vmem:[%s4 + $0x198] sm:$0xff]
  %v4170 = vld [vmem:[%s4 + $0x1a0] sm:$0xf]
  %v4171 = vld [vmem:[%s4 + $0x1a4] sm:$0xff]
  %v4172 = vld [vmem:[%s4 + $0x1ac] sm:$0xf]
  %v4173 = vld [vmem:[%s4 + $0x1b0] sm:$0xff]
  %v4174 = vld [vmem:[%s4 + $0x1b8] sm:$0xf]
  %v4175 = vld [vmem:[%s4 + $0x1bc] sm:$0xff]
  %v4176 = vld [vmem:[%s4 + $0x1c4] sm:$0xf]
  %v4177 = vld [vmem:[%s4 + $0x1c8] sm:$0xff]
  %v4178 = vld [vmem:[%s4 + $0x1d0] sm:$0xf]
  %v4179 = vld [vmem:[%s4 + $0x1d4] sm:$0xff]
  %v4180 = vld [vmem:[%s4 + $0x1dc] sm:$0xf]
  %v4181 = vld [vmem:[%s4 + $0x1e0] sm:$0xff]
  %v4182 = vld [vmem:[%s4 + $0x1e8] sm:$0xf]
  %v4183 = vld [vmem:[%s4 + $0x1ec] sm:$0xff]
  %v4184 = vld [vmem:[%s4 + $0x1f4] sm:$0xf]
  %v4185 = vld [vmem:[%s4 + $0x1f8] sm:$0xff]
  %v4186 = vld [vmem:[%s4 + $0x200] sm:$0xf]
  %v4187 = vld [vmem:[%s4 + $0x204] sm:$0xff]
  %v4188 = vld [vmem:[%s4 + $0x20c] sm:$0xf]
  %v4189 = vld [vmem:[%s4 + $0x210] sm:$0xff]
  %v4190 = vld [vmem:[%s4 + $0x218] sm:$0xf]
  %v4191 = vld [vmem:[%s4 + $0x21c] sm:$0xff]
  %v4192 = vld [vmem:[%s4 + $0x224] sm:$0xf]
  %v4193 = vld [vmem:[%s4 + $0x228] sm:$0xff]
  %v4194 = vld [vmem:[%s4 + $0x230] sm:$0xf]
  %v4195 = vld [vmem:[%s4 + $0x234] sm:$0xff]
  %v4196 = vld [vmem:[%s4 + $0x23c] sm:$0xf]
  %v4197 = vld [vmem:[%s4 + $0x240] sm:$0xff]
  %v4198 = vld [vmem:[%s4 + $0x248] sm:$0xf]
  %v4199 = vld [vmem:[%s4 + $0x24c] sm:$0xff]
  %v4200 = vld [vmem:[%s4 + $0x254] sm:$0xf]
  %v4201 = vld [vmem:[%s4 + $0x258] sm:$0xff]
  %v4202 = vld [vmem:[%s4 + $0x260] sm:$0xf]
  %v4203 = vld [vmem:[%s4 + $0x264] sm:$0xff]
  %v4204 = vld [vmem:[%s4 + $0x26c] sm:$0xf]
  %v4205 = vld [vmem:[%s4 + $0x270] sm:$0xff]
  %v4206 = vld [vmem:[%s4 + $0x278] sm:$0xf]
  %v4207 = vld [vmem:[%s4 + $0x27c] sm:$0xff]
  %v4208 = vld [vmem:[%s4 + $0x284] sm:$0xf]
  %v4209 = vld [vmem:[%s4 + $0x288] sm:$0xff]
  %v4210 = vld [vmem:[%s4 + $0x290] sm:$0xf]
  %v4211 = vld [vmem:[%s4 + $0x294] sm:$0xff]
  %v4212 = vld [vmem:[%s4 + $0x29c] sm:$0xf]
  %v4213 = vld [vmem:[%s4 + $0x2a0] sm:$0xff]
  %v4214 = vld [vmem:[%s4 + $0x2a8] sm:$0xf]
  %v4215 = vld [vmem:[%s4 + $0x2ac] sm:$0xff]
  %v4216 = vld [vmem:[%s4 + $0x2b4] sm:$0xf]
  %v4217 = vld [vmem:[%s4 + $0x2b8] sm:$0xff]
  %v4218 = vld [vmem:[%s4 + $0x2c0] sm:$0xf]
  %v4219 = vld [vmem:[%s4 + $0x2c4] sm:$0xff]
  %v4220 = vld [vmem:[%s4 + $0x2cc] sm:$0xf]
  %v4221 = vld [vmem:[%s4 + $0x2d0] sm:$0xff]
  %v4222 = vld [vmem:[%s4 + $0x2d8] sm:$0xf]
  %v4223 = vld [vmem:[%s4 + $0x2dc] sm:$0xff]
  %v4224 = vld [vmem:[%s4 + $0x2e4] sm:$0xf]
  %v4225 = vld [vmem:[%s4 + $0x2e8] sm:$0xff]
  %v4226 = vld [vmem:[%s4 + $0x2f0] sm:$0xf]
  %v4227 = vld [vmem:[%s4 + $0x2f4] sm:$0xff]
  %v4228 = vld [vmem:[%s4 + $0x2fc] sm:$0xf]
  %v4229 = vld [vmem:[%s4 + $0x300] sm:$0xff]
  %v4230 = vld [vmem:[%s4 + $0x308] sm:$0xf]
  %v4231 = vld [vmem:[%s4 + $0x30c] sm:$0xff]
  %v4232 = vld [vmem:[%s4 + $0x314] sm:$0xf]
  %v4233 = vld [vmem:[%s4 + $0x318] sm:$0xff]
  %v4234 = vld [vmem:[%s4 + $0x320] sm:$0xf]
  %v4235 = vld [vmem:[%s4 + $0x324] sm:$0xff]
  %v4236 = vld [vmem:[%s4 + $0x32c] sm:$0xf]
  %v4237 = vld [vmem:[%s4 + $0x330] sm:$0xff]
  %v4238 = vld [vmem:[%s4 + $0x338] sm:$0xf]
  %v4239 = vld [vmem:[%s4 + $0x33c] sm:$0xff]
  %v4240 = vld [vmem:[%s4 + $0x344] sm:$0xf]
  %v4241 = vld [vmem:[%s4 + $0x348] sm:$0xff]
  %v4242 = vld [vmem:[%s4 + $0x350] sm:$0xf]
  %v4243 = vld [vmem:[%s4 + $0x354] sm:$0xff]
  %v4244 = vld [vmem:[%s4 + $0x35c] sm:$0xf]
  %v4245 = vld [vmem:[%s4 + $0x360] sm:$0xff]
  %v4246 = vld [vmem:[%s4 + $0x368] sm:$0xf]
  %v4247 = vld [vmem:[%s4 + $0x36c] sm:$0xff]
  %v4248 = vld [vmem:[%s4 + $0x374] sm:$0xf]
  %v4249 = vld [vmem:[%s4 + $0x378] sm:$0xff]
  %v4250 = vld [vmem:[%s4 + $0x380] sm:$0xf]
  %v4251 = vld [vmem:[%s4 + $0x384] sm:$0xff]
  %v4252 = vld [vmem:[%s4 + $0x38c] sm:$0xf]
  %v4253 = vld [vmem:[%s4 + $0x390] sm:$0xff]
  %v4254 = vld [vmem:[%s4 + $0x398] sm:$0xf]
  %v4255 = vld [vmem:[%s4 + $0x39c] sm:$0xff]
  %v4256 = vld [vmem:[%s4 + $0x3a4] sm:$0xf]
  %v4257 = vld [vmem:[%s4 + $0x3a8] sm:$0xff]
  %v4258 = vld [vmem:[%s4 + $0x3b0] sm:$0xf]
  %v4259 = vld [vmem:[%s4 + $0x3b4] sm:$0xff]
  %v4260 = vld [vmem:[%s4 + $0x3bc] sm:$0xf]
  %v4261 = vld [vmem:[%s4 + $0x3c0] sm:$0xff]
  %v4262 = vld [vmem:[%s4 + $0x3c8] sm:$0xf]
  %v4263 = vld [vmem:[%s4 + $0x3cc] sm:$0xff]
  %v4264 = vld [vmem:[%s4 + $0x3d4] sm:$0xf]
  %v4265 = vld [vmem:[%s4 + $0x3d8] sm:$0xff]
  %v4266 = vld [vmem:[%s4 + $0x3e0] sm:$0xf]
  %v4267 = vld [vmem:[%s4 + $0x3e4] sm:$0xff]
  %v4268 = vld [vmem:[%s4 + $0x3ec] sm:$0xf]
  %v4269 = vld [vmem:[%s4 + $0x3f0] sm:$0xff]
  %v4270 = vld [vmem:[%s4 + $0x3f8] sm:$0xf]
  %v4271 = vld [vmem:[%s4 + $0x3fc] sm:$0xff]
  %v4272 = vld [vmem:[%s4 + $0x404] sm:$0xf]
  %v4273 = vld [vmem:[%s4 + $0x408] sm:$0xff]
  %v4274 = vld [vmem:[%s4 + $0x410] sm:$0xf]
  %v4275 = vld [vmem:[%s4 + $0x414] sm:$0xff]
  %v4276 = vld [vmem:[%s4 + $0x41c] sm:$0xf]
  %v4277 = vld [vmem:[%s4 + $0x420] sm:$0xff]
  %v4278 = vld [vmem:[%s4 + $0x428] sm:$0xf]
  %v4279 = vld [vmem:[%s4 + $0x42c] sm:$0xff]
  %v4280 = vld [vmem:[%s4 + $0x434] sm:$0xf]
  %v4281 = vld [vmem:[%s4 + $0x438] sm:$0xff]
  %v4282 = vld [vmem:[%s4 + $0x440] sm:$0xf]
  %v4283 = vld [vmem:[%s4 + $0x444] sm:$0xff]
  %v4284 = vld [vmem:[%s4 + $0x44c] sm:$0xf]
  %v4285 = vld [vmem:[%s4 + $0x450] sm:$0xff]
  %v4286 = vld [vmem:[%s4 + $0x458] sm:$0xf]
  %v4287 = vld [vmem:[%s4 + $0x45c] sm:$0xff]
  %v4288 = vld [vmem:[%s4 + $0x464] sm:$0xf]
  %v4289 = vld [vmem:[%s4 + $0x468] sm:$0xff]
  %v4290 = vld [vmem:[%s4 + $0x470] sm:$0xf]
  %v4291 = vld [vmem:[%s4 + $0x474] sm:$0xff]
  %v4292 = vld [vmem:[%s4 + $0x47c] sm:$0xf]
  %v4293 = vld [vmem:[%s4 + $0x480] sm:$0xff]
  %v4294 = vld [vmem:[%s4 + $0x488] sm:$0xf]
  %v4295 = vld [vmem:[%s4 + $0x48c] sm:$0xff]
  %v4296 = vld [vmem:[%s4 + $0x494] sm:$0xf]
  %v4297 = vld [vmem:[%s4 + $0x498] sm:$0xff]
  %v4298 = vld [vmem:[%s4 + $0x4a0] sm:$0xf]
  %v4299 = vld [vmem:[%s4 + $0x4a4] sm:$0xff]
  %v4300 = vld [vmem:[%s4 + $0x4ac] sm:$0xf]
  %v4301 = vld [vmem:[%s4 + $0x4b0] sm:$0xff]
  %v4302 = vld [vmem:[%s4 + $0x4b8] sm:$0xf]
  %v4303 = vld [vmem:[%s4 + $0x4bc] sm:$0xff]
  %v4304 = vld [vmem:[%s4 + $0x4c4] sm:$0xf]
  %v4305 = vld [vmem:[%s4 + $0x4c8] sm:$0xff]
  %v4306 = vld [vmem:[%s4 + $0x4d0] sm:$0xf]
  %v4307 = vld [vmem:[%s4 + $0x4d4] sm:$0xff]
  %v4308 = vld [vmem:[%s4 + $0x4dc] sm:$0xf]
  %v4309 = vld [vmem:[%s4 + $0x4e0] sm:$0xff]
  %v4310 = vld [vmem:[%s4 + $0x4e8] sm:$0xf]
  %v4311 = vld [vmem:[%s4 + $0x4ec] sm:$0xff]
  %v4312 = vld [vmem:[%s4 + $0x4f4] sm:$0xf]
  %v4313 = vld [vmem:[%s4 + $0x4f8] sm:$0xff]
  %v4314 = vld [vmem:[%s4 + $0x500] sm:$0xf]
  %v4315 = vld [vmem:[%s4 + $0x504] sm:$0xff]
  %v4316 = vld [vmem:[%s4 + $0x50c] sm:$0xf]
  %v4317 = vld [vmem:[%s4 + $0x510] sm:$0xff]
  %v4318 = vld [vmem:[%s4 + $0x518] sm:$0xf]
  %v4319 = vld [vmem:[%s4 + $0x51c] sm:$0xff]
  %v4320 = vld [vmem:[%s4 + $0x524] sm:$0xf]
  %v4321 = vld [vmem:[%s4 + $0x528] sm:$0xff]
  %v4322 = vld [vmem:[%s4 + $0x530] sm:$0xf]
  %v4323 = vld [vmem:[%s4 + $0x534] sm:$0xff]
  %v4324 = vld [vmem:[%s4 + $0x53c] sm:$0xf]
  %v4325 = vld [vmem:[%s4 + $0x540] sm:$0xff]
  %v4326 = vld [vmem:[%s4 + $0x548] sm:$0xf]
  %v4327 = vld [vmem:[%s4 + $0x54c] sm:$0xff]
  %v4328 = vld [vmem:[%s4 + $0x554] sm:$0xf]
  %v4329 = vld [vmem:[%s4 + $0x558] sm:$0xff]
  %v4330 = vld [vmem:[%s4 + $0x560] sm:$0xf]
  %v4331 = vld [vmem:[%s4 + $0x564] sm:$0xff]
  %v4332 = vld [vmem:[%s4 + $0x56c] sm:$0xf]
  %v4333 = vld [vmem:[%s4 + $0x570] sm:$0xff]
  %v4334 = vld [vmem:[%s4 + $0x578] sm:$0xf]
  %v4335 = vld [vmem:[%s4 + $0x57c] sm:$0xff]
  %v4336 = vld [vmem:[%s4 + $0x584] sm:$0xf]
  %v4337 = vld [vmem:[%s4 + $0x588] sm:$0xff]
  %v4338 = vld [vmem:[%s4 + $0x590] sm:$0xf]
  %v4339 = vld [vmem:[%s4 + $0x594] sm:$0xff]
  %v4340 = vld [vmem:[%s4 + $0x59c] sm:$0xf]
  %v4341 = vld [vmem:[%s4 + $0x5a0] sm:$0xff]
  %v4342 = vld [vmem:[%s4 + $0x5a8] sm:$0xf]
  %v4343 = vld [vmem:[%s4 + $0x5ac] sm:$0xff]
  %v4344 = vld [vmem:[%s4 + $0x5b4] sm:$0xf]
  %v4345 = vld [vmem:[%s4 + $0x5b8] sm:$0xff]
  %v4346 = vld [vmem:[%s4 + $0x5c0] sm:$0xf]
  %v4347 = vld [vmem:[%s4 + $0x5c4] sm:$0xff]
  %v4348 = vld [vmem:[%s4 + $0x5cc] sm:$0xf]
  %v4349 = vld [vmem:[%s4 + $0x5d0] sm:$0xff]
  %v4350 = vld [vmem:[%s4 + $0x5d8] sm:$0xf]
  %v4351 = vld [vmem:[%s4 + $0x5dc] sm:$0xff]
  %v4352 = vld [vmem:[%s4 + $0x5e4] sm:$0xf]
  %v4353 = vld [vmem:[%s4 + $0x5e8] sm:$0xff]
  %v4354 = vld [vmem:[%s4 + $0x5f0] sm:$0xf]
  %v4355 = vld [vmem:[%s4 + $0x5f4] sm:$0xff]
  %v4356 = vld [vmem:[%s4 + $0x5fc] sm:$0xf]
  %v4357 = vld [vmem:[%s4 + $0x600] sm:$0xff]
  %v4358 = vld [vmem:[%s4 + $0x608] sm:$0xf]
  %v4359 = vld [vmem:[%s4 + $0x60c] sm:$0xff]
  %v4360 = vld [vmem:[%s4 + $0x614] sm:$0xf]
  %v4361 = vld [vmem:[%s4 + $0x618] sm:$0xff]
  %v4362 = vld [vmem:[%s4 + $0x620] sm:$0xf]
  %v4363 = vld [vmem:[%s4 + $0x624] sm:$0xff]
  %v4364 = vld [vmem:[%s4 + $0x62c] sm:$0xf]
  %v4365 = vld [vmem:[%s4 + $0x630] sm:$0xff]
  %v4366 = vld [vmem:[%s4 + $0x638] sm:$0xf]
  %v4367 = vld [vmem:[%s4 + $0x63c] sm:$0xff]
  %v4368 = vld [vmem:[%s4 + $0x644] sm:$0xf]
  %v4369 = vld [vmem:[%s4 + $0x648] sm:$0xff]
  %v4370 = vld [vmem:[%s4 + $0x650] sm:$0xf]
  %v4371 = vld [vmem:[%s4 + $0x654] sm:$0xff]
  %v4372 = vld [vmem:[%s4 + $0x65c] sm:$0xf]
  %v4373 = vld [vmem:[%s4 + $0x660] sm:$0xff]
  %v4374 = vld [vmem:[%s4 + $0x668] sm:$0xf]
  %v4375 = vld [vmem:[%s4 + $0x66c] sm:$0xff]
  %v4376 = vld [vmem:[%s4 + $0x674] sm:$0xf]
  %v4377 = vld [vmem:[%s4 + $0x678] sm:$0xff]
  %v4378 = vld [vmem:[%s4 + $0x680] sm:$0xf]
  %v4379 = vld [vmem:[%s4 + $0x684] sm:$0xff]
  %v4380 = vld [vmem:[%s4 + $0x68c] sm:$0xf]
  %v4381 = vld [vmem:[%s4 + $0x690] sm:$0xff]
  %v4382 = vld [vmem:[%s4 + $0x698] sm:$0xf]
  %v4383 = vld [vmem:[%s4 + $0x69c] sm:$0xff]
  %v4384 = vld [vmem:[%s4 + $0x6a4] sm:$0xf]
  %v4385 = vld [vmem:[%s4 + $0x6a8] sm:$0xff]
  %v4386 = vld [vmem:[%s4 + $0x6b0] sm:$0xf]
  %v4387 = vld [vmem:[%s4 + $0x6b4] sm:$0xff]
  %v4388 = vld [vmem:[%s4 + $0x6bc] sm:$0xf]
  %v4389 = vld [vmem:[%s4 + $0x6c0] sm:$0xff]
  %v4390 = vld [vmem:[%s4 + $0x6c8] sm:$0xf]
  %v4391 = vld [vmem:[%s4 + $0x6cc] sm:$0xff]
  %v4392 = vld [vmem:[%s4 + $0x6d4] sm:$0xf]
  %v4393 = vld [vmem:[%s4 + $0x6d8] sm:$0xff]
  %v4394 = vld [vmem:[%s4 + $0x6e0] sm:$0xf]
  %v4395 = vld [vmem:[%s4 + $0x6e4] sm:$0xff]
  %v4396 = vld [vmem:[%s4 + $0x6ec] sm:$0xf]
  %v4397 = vld [vmem:[%s4 + $0x6f0] sm:$0xff]
  %v4398 = vld [vmem:[%s4 + $0x6f8] sm:$0xf]
  %v4399 = vld [vmem:[%s4 + $0x6fc] sm:$0xff]
  %v4400 = vld [vmem:[%s4 + $0x704] sm:$0xf]
  %v4401 = vld [vmem:[%s4 + $0x708] sm:$0xff]
  %v4402 = vld [vmem:[%s4 + $0x710] sm:$0xf]
  %v4403 = vld [vmem:[%s4 + $0x714] sm:$0xff]
  %v4404 = vld [vmem:[%s4 + $0x71c] sm:$0xf]
  %v4405 = vld [vmem:[%s4 + $0x720] sm:$0xff]
  %v4406 = vld [vmem:[%s4 + $0x728] sm:$0xf]
  %v4407 = vld [vmem:[%s4 + $0x72c] sm:$0xff]
  %v4408 = vld [vmem:[%s4 + $0x734] sm:$0xf]
  %v4409 = vld [vmem:[%s4 + $0x738] sm:$0xff]
  %v4410 = vld [vmem:[%s4 + $0x740] sm:$0xf]
  %v4411 = vld [vmem:[%s4 + $0x744] sm:$0xff]
  %v4412 = vld [vmem:[%s4 + $0x74c] sm:$0xf]
  %v4413 = vld [vmem:[%s4 + $0x750] sm:$0xff]
  %v4414 = vld [vmem:[%s4 + $0x758] sm:$0xf]
  %v4415 = vld [vmem:[%s4 + $0x75c] sm:$0xff]
  %v4416 = vld [vmem:[%s4 + $0x764] sm:$0xf]
  %v4417 = vld [vmem:[%s4 + $0x768] sm:$0xff]
  %v4418 = vld [vmem:[%s4 + $0x770] sm:$0xf]
  %v4419 = vld [vmem:[%s4 + $0x774] sm:$0xff]
  %v4420 = vld [vmem:[%s4 + $0x77c] sm:$0xf]
  %v4421 = vpack.c.bf16 %v4062, %v4061
  %v4422 = vpack.c.bf16 %v4064, %v4063
  %v4423 = vpack.c.bf16 %v4066, %v4065
  %v4424 = vpack.c.bf16 %v4068, %v4067
  %v4425 = vpack.c.bf16 %v4070, %v4069
  %v4426 = vpack.c.bf16 %v4072, %v4071
  %v4427 = vpack.c.bf16 %v4074, %v4073
  %v4428 = vpack.c.bf16 %v4076, %v4075
  %v4429 = vpack.c.bf16 %v4078, %v4077
  %v4430 = vpack.c.bf16 %v4080, %v4079
  %v4431 = vpack.c.bf16 %v4082, %v4081
  %v4432 = vpack.c.bf16 %v4084, %v4083
  %v4433 = vpack.c.bf16 %v4086, %v4085
  %v4434 = vpack.c.bf16 %v4088, %v4087
  %v4435 = vpack.c.bf16 %v4090, %v4089
  %v4436 = vpack.c.bf16 %v4092, %v4091
  %v4437 = vpack.c.bf16 %v4094, %v4093
  %v4438 = vpack.c.bf16 %v4096, %v4095
  %v4439 = vpack.c.bf16 %v4098, %v4097
  %v4440 = vpack.c.bf16 %v4100, %v4099
  %v4761 = vunpack.c.l.b16 %v4101
  %v4762 = vunpack.c.h.b16 %v4101
  %v4763 = vunpack.c.l.b16 %v4102
  %v4764 = vunpack.c.l.b16 %v4103
  %v4765 = vunpack.c.h.b16 %v4103
  %v4766 = vunpack.c.l.b16 %v4104
  %v4767 = vunpack.c.l.b16 %v4105
  %v4768 = vunpack.c.h.b16 %v4105
  %v4769 = vunpack.c.l.b16 %v4106
  %v4770 = vunpack.c.l.b16 %v4107
  %v4771 = vunpack.c.h.b16 %v4107
  %v4772 = vunpack.c.l.b16 %v4108
  %v4773 = vunpack.c.l.b16 %v4109
  %v4774 = vunpack.c.h.b16 %v4109
  %v4775 = vunpack.c.l.b16 %v4110
  %v4776 = vunpack.c.l.b16 %v4111
  %v4777 = vunpack.c.h.b16 %v4111
  %v4778 = vunpack.c.l.b16 %v4112
  %v4779 = vunpack.c.l.b16 %v4113
  %v4780 = vunpack.c.h.b16 %v4113
  %v4781 = vunpack.c.l.b16 %v4114
  %v4782 = vunpack.c.l.b16 %v4115
  %v4783 = vunpack.c.h.b16 %v4115
  %v4784 = vunpack.c.l.b16 %v4116
  %v4785 = vunpack.c.l.b16 %v4117
  %v4786 = vunpack.c.h.b16 %v4117
  %v4787 = vunpack.c.l.b16 %v4118
  %v4788 = vunpack.c.l.b16 %v4119
  %v4789 = vunpack.c.h.b16 %v4119
  %v4790 = vunpack.c.l.b16 %v4120
  %v4791 = vunpack.c.l.b16 %v4121
  %v4792 = vunpack.c.h.b16 %v4121
  %v4793 = vunpack.c.l.b16 %v4122
  %v4794 = vunpack.c.l.b16 %v4123
  %v4795 = vunpack.c.h.b16 %v4123
  %v4796 = vunpack.c.l.b16 %v4124
  %v4797 = vunpack.c.l.b16 %v4125
  %v4798 = vunpack.c.h.b16 %v4125
  %v4799 = vunpack.c.l.b16 %v4126
  %v4800 = vunpack.c.l.b16 %v4127
  %v4801 = vunpack.c.h.b16 %v4127
  %v4802 = vunpack.c.l.b16 %v4128
  %v4803 = vunpack.c.l.b16 %v4129
  %v4804 = vunpack.c.h.b16 %v4129
  %v4805 = vunpack.c.l.b16 %v4130
  %v4806 = vunpack.c.l.b16 %v4131
  %v4807 = vunpack.c.h.b16 %v4131
  %v4808 = vunpack.c.l.b16 %v4132
  %v4809 = vunpack.c.l.b16 %v4133
  %v4810 = vunpack.c.h.b16 %v4133
  %v4811 = vunpack.c.l.b16 %v4134
  %v4812 = vunpack.c.l.b16 %v4135
  %v4813 = vunpack.c.h.b16 %v4135
  %v4814 = vunpack.c.l.b16 %v4136
  %v4815 = vunpack.c.l.b16 %v4137
  %v4816 = vunpack.c.h.b16 %v4137
  %v4817 = vunpack.c.l.b16 %v4138
  %v4818 = vunpack.c.l.b16 %v4139
  %v4819 = vunpack.c.h.b16 %v4139
  %v4820 = vunpack.c.l.b16 %v4140
  %v4821 = vunpack.c.l.b16 %v4141
  %v4822 = vunpack.c.h.b16 %v4141
  %v4823 = vunpack.c.l.b16 %v4142
  %v4824 = vunpack.c.l.b16 %v4143
  %v4825 = vunpack.c.h.b16 %v4143
  %v4826 = vunpack.c.l.b16 %v4144
  %v4827 = vunpack.c.l.b16 %v4145
  %v4828 = vunpack.c.h.b16 %v4145
  %v4829 = vunpack.c.l.b16 %v4146
  %v4830 = vunpack.c.l.b16 %v4147
  %v4831 = vunpack.c.h.b16 %v4147
  %v4832 = vunpack.c.l.b16 %v4148
  %v4833 = vunpack.c.l.b16 %v4149
  %v4834 = vunpack.c.h.b16 %v4149
  %v4835 = vunpack.c.l.b16 %v4150
  %v4836 = vunpack.c.l.b16 %v4151
  %v4837 = vunpack.c.h.b16 %v4151
  %v4838 = vunpack.c.l.b16 %v4152
  %v4839 = vunpack.c.l.b16 %v4153
  %v4840 = vunpack.c.h.b16 %v4153
  %v4841 = vunpack.c.l.b16 %v4154
  %v4842 = vunpack.c.l.b16 %v4155
  %v4843 = vunpack.c.h.b16 %v4155
  %v4844 = vunpack.c.l.b16 %v4156
  %v4845 = vunpack.c.l.b16 %v4157
  %v4846 = vunpack.c.h.b16 %v4157
  %v4847 = vunpack.c.l.b16 %v4158
  %v4848 = vunpack.c.l.b16 %v4159
  %v4849 = vunpack.c.h.b16 %v4159
  %v4850 = vunpack.c.l.b16 %v4160
  %v4851 = vunpack.c.l.b16 %v4161
  %v4852 = vunpack.c.h.b16 %v4161
  %v4853 = vunpack.c.l.b16 %v4162
  %v4854 = vunpack.c.l.b16 %v4163
  %v4855 = vunpack.c.h.b16 %v4163
  %v4856 = vunpack.c.l.b16 %v4164
  %v4857 = vunpack.c.l.b16 %v4165
  %v4858 = vunpack.c.h.b16 %v4165
  %v4859 = vunpack.c.l.b16 %v4166
  %v4860 = vunpack.c.l.b16 %v4167
  %v4861 = vunpack.c.h.b16 %v4167
  %v4862 = vunpack.c.l.b16 %v4168
  %v4863 = vunpack.c.l.b16 %v4169
  %v4864 = vunpack.c.h.b16 %v4169
  %v4865 = vunpack.c.l.b16 %v4170
  %v4866 = vunpack.c.l.b16 %v4171
  %v4867 = vunpack.c.h.b16 %v4171
  %v4868 = vunpack.c.l.b16 %v4172
  %v4869 = vunpack.c.l.b16 %v4173
  %v4870 = vunpack.c.h.b16 %v4173
  %v4871 = vunpack.c.l.b16 %v4174
  %v4872 = vunpack.c.l.b16 %v4175
  %v4873 = vunpack.c.h.b16 %v4175
  %v4874 = vunpack.c.l.b16 %v4176
  %v4875 = vunpack.c.l.b16 %v4177
  %v4876 = vunpack.c.h.b16 %v4177
  %v4877 = vunpack.c.l.b16 %v4178
  %v4878 = vunpack.c.l.b16 %v4179
  %v4879 = vunpack.c.h.b16 %v4179
  %v4880 = vunpack.c.l.b16 %v4180
  %v4881 = vunpack.c.l.b16 %v4181
  %v4882 = vunpack.c.h.b16 %v4181
  %v4883 = vunpack.c.l.b16 %v4182
  %v4884 = vunpack.c.l.b16 %v4183
  %v4885 = vunpack.c.h.b16 %v4183
  %v4886 = vunpack.c.l.b16 %v4184
  %v4887 = vunpack.c.l.b16 %v4185
  %v4888 = vunpack.c.h.b16 %v4185
  %v4889 = vunpack.c.l.b16 %v4186
  %v4890 = vunpack.c.l.b16 %v4187
  %v4891 = vunpack.c.h.b16 %v4187
  %v4892 = vunpack.c.l.b16 %v4188
  %v4893 = vunpack.c.l.b16 %v4189
  %v4894 = vunpack.c.h.b16 %v4189
  %v4895 = vunpack.c.l.b16 %v4190
  %v4896 = vunpack.c.l.b16 %v4191
  %v4897 = vunpack.c.h.b16 %v4191
  %v4898 = vunpack.c.l.b16 %v4192
  %v4899 = vunpack.c.l.b16 %v4193
  %v4900 = vunpack.c.h.b16 %v4193
  %v4901 = vunpack.c.l.b16 %v4194
  %v4902 = vunpack.c.l.b16 %v4195
  %v4903 = vunpack.c.h.b16 %v4195
  %v4904 = vunpack.c.l.b16 %v4196
  %v4905 = vunpack.c.l.b16 %v4197
  %v4906 = vunpack.c.h.b16 %v4197
  %v4907 = vunpack.c.l.b16 %v4198
  %v4908 = vunpack.c.l.b16 %v4199
  %v4909 = vunpack.c.h.b16 %v4199
  %v4910 = vunpack.c.l.b16 %v4200
  %v4911 = vunpack.c.l.b16 %v4201
  %v4912 = vunpack.c.h.b16 %v4201
  %v4913 = vunpack.c.l.b16 %v4202
  %v4914 = vunpack.c.l.b16 %v4203
  %v4915 = vunpack.c.h.b16 %v4203
  %v4916 = vunpack.c.l.b16 %v4204
  %v4917 = vunpack.c.l.b16 %v4205
  %v4918 = vunpack.c.h.b16 %v4205
  %v4919 = vunpack.c.l.b16 %v4206
  %v4920 = vunpack.c.l.b16 %v4207
  %v4921 = vunpack.c.h.b16 %v4207
  %v4922 = vunpack.c.l.b16 %v4208
  %v4923 = vunpack.c.l.b16 %v4209
  %v4924 = vunpack.c.h.b16 %v4209
  %v4925 = vunpack.c.l.b16 %v4210
  %v4926 = vunpack.c.l.b16 %v4211
  %v4927 = vunpack.c.h.b16 %v4211
  %v4928 = vunpack.c.l.b16 %v4212
  %v4929 = vunpack.c.l.b16 %v4213
  %v4930 = vunpack.c.h.b16 %v4213
  %v4931 = vunpack.c.l.b16 %v4214
  %v4932 = vunpack.c.l.b16 %v4215
  %v4933 = vunpack.c.h.b16 %v4215
  %v4934 = vunpack.c.l.b16 %v4216
  %v4935 = vunpack.c.l.b16 %v4217
  %v4936 = vunpack.c.h.b16 %v4217
  %v4937 = vunpack.c.l.b16 %v4218
  %v4938 = vunpack.c.l.b16 %v4219
  %v4939 = vunpack.c.h.b16 %v4219
  %v4940 = vunpack.c.l.b16 %v4220
  %v4941 = vunpack.c.l.b16 %v4221
  %v4942 = vunpack.c.h.b16 %v4221
  %v4943 = vunpack.c.l.b16 %v4222
  %v4944 = vunpack.c.l.b16 %v4223
  %v4945 = vunpack.c.h.b16 %v4223
  %v4946 = vunpack.c.l.b16 %v4224
  %v4947 = vunpack.c.l.b16 %v4225
  %v4948 = vunpack.c.h.b16 %v4225
  %v4949 = vunpack.c.l.b16 %v4226
  %v4950 = vunpack.c.l.b16 %v4227
  %v4951 = vunpack.c.h.b16 %v4227
  %v4952 = vunpack.c.l.b16 %v4228
  %v4953 = vunpack.c.l.b16 %v4229
  %v4954 = vunpack.c.h.b16 %v4229
  %v4955 = vunpack.c.l.b16 %v4230
  %v4956 = vunpack.c.l.b16 %v4231
  %v4957 = vunpack.c.h.b16 %v4231
  %v4958 = vunpack.c.l.b16 %v4232
  %v4959 = vunpack.c.l.b16 %v4233
  %v4960 = vunpack.c.h.b16 %v4233
  %v4961 = vunpack.c.l.b16 %v4234
  %v4962 = vunpack.c.l.b16 %v4235
  %v4963 = vunpack.c.h.b16 %v4235
  %v4964 = vunpack.c.l.b16 %v4236
  %v4965 = vunpack.c.l.b16 %v4237
  %v4966 = vunpack.c.h.b16 %v4237
  %v4967 = vunpack.c.l.b16 %v4238
  %v4968 = vunpack.c.l.b16 %v4239
  %v4969 = vunpack.c.h.b16 %v4239
  %v4970 = vunpack.c.l.b16 %v4240
  %v4971 = vunpack.c.l.b16 %v4241
  %v4972 = vunpack.c.h.b16 %v4241
  %v4973 = vunpack.c.l.b16 %v4242
  %v4974 = vunpack.c.l.b16 %v4243
  %v4975 = vunpack.c.h.b16 %v4243
  %v4976 = vunpack.c.l.b16 %v4244
  %v4977 = vunpack.c.l.b16 %v4245
  %v4978 = vunpack.c.h.b16 %v4245
  %v4979 = vunpack.c.l.b16 %v4246
  %v4980 = vunpack.c.l.b16 %v4247
  %v4981 = vunpack.c.h.b16 %v4247
  %v4982 = vunpack.c.l.b16 %v4248
  %v4983 = vunpack.c.l.b16 %v4249
  %v4984 = vunpack.c.h.b16 %v4249
  %v4985 = vunpack.c.l.b16 %v4250
  %v4986 = vunpack.c.l.b16 %v4251
  %v4987 = vunpack.c.h.b16 %v4251
  %v4988 = vunpack.c.l.b16 %v4252
  %v4989 = vunpack.c.l.b16 %v4253
  %v4990 = vunpack.c.h.b16 %v4253
  %v4991 = vunpack.c.l.b16 %v4254
  %v4992 = vunpack.c.l.b16 %v4255
  %v4993 = vunpack.c.h.b16 %v4255
  %v4994 = vunpack.c.l.b16 %v4256
  %v4995 = vunpack.c.l.b16 %v4257
  %v4996 = vunpack.c.h.b16 %v4257
  %v4997 = vunpack.c.l.b16 %v4258
  %v4998 = vunpack.c.l.b16 %v4259
  %v4999 = vunpack.c.h.b16 %v4259
  %v5000 = vunpack.c.l.b16 %v4260
  %v5001 = vunpack.c.l.b16 %v4261
  %v5002 = vunpack.c.h.b16 %v4261
  %v5003 = vunpack.c.l.b16 %v4262
  %v5004 = vunpack.c.l.b16 %v4263
  %v5005 = vunpack.c.h.b16 %v4263
  %v5006 = vunpack.c.l.b16 %v4264
  %v5007 = vunpack.c.l.b16 %v4265
  %v5008 = vunpack.c.h.b16 %v4265
  %v5009 = vunpack.c.l.b16 %v4266
  %v5010 = vunpack.c.l.b16 %v4267
  %v5011 = vunpack.c.h.b16 %v4267
  %v5012 = vunpack.c.l.b16 %v4268
  %v5013 = vunpack.c.l.b16 %v4269
  %v5014 = vunpack.c.h.b16 %v4269
  %v5015 = vunpack.c.l.b16 %v4270
  %v5016 = vunpack.c.l.b16 %v4271
  %v5017 = vunpack.c.h.b16 %v4271
  %v5018 = vunpack.c.l.b16 %v4272
  %v5019 = vunpack.c.l.b16 %v4273
  %v5020 = vunpack.c.h.b16 %v4273
  %v5021 = vunpack.c.l.b16 %v4274
  %v5022 = vunpack.c.l.b16 %v4275
  %v5023 = vunpack.c.h.b16 %v4275
  %v5024 = vunpack.c.l.b16 %v4276
  %v5025 = vunpack.c.l.b16 %v4277
  %v5026 = vunpack.c.h.b16 %v4277
  %v5027 = vunpack.c.l.b16 %v4278
  %v5028 = vunpack.c.l.b16 %v4279
  %v5029 = vunpack.c.h.b16 %v4279
  %v5030 = vunpack.c.l.b16 %v4280
  %v5031 = vunpack.c.l.b16 %v4281
  %v5032 = vunpack.c.h.b16 %v4281
  %v5033 = vunpack.c.l.b16 %v4282
  %v5034 = vunpack.c.l.b16 %v4283
  %v5035 = vunpack.c.h.b16 %v4283
  %v5036 = vunpack.c.l.b16 %v4284
  %v5037 = vunpack.c.l.b16 %v4285
  %v5038 = vunpack.c.h.b16 %v4285
  %v5039 = vunpack.c.l.b16 %v4286
  %v5040 = vunpack.c.l.b16 %v4287
  %v5041 = vunpack.c.h.b16 %v4287
  %v5042 = vunpack.c.l.b16 %v4288
  %v5043 = vunpack.c.l.b16 %v4289
  %v5044 = vunpack.c.h.b16 %v4289
  %v5045 = vunpack.c.l.b16 %v4290
  %v5046 = vunpack.c.l.b16 %v4291
  %v5047 = vunpack.c.h.b16 %v4291
  %v5048 = vunpack.c.l.b16 %v4292
  %v5049 = vunpack.c.l.b16 %v4293
  %v5050 = vunpack.c.h.b16 %v4293
  %v5051 = vunpack.c.l.b16 %v4294
  %v5052 = vunpack.c.l.b16 %v4295
  %v5053 = vunpack.c.h.b16 %v4295
  %v5054 = vunpack.c.l.b16 %v4296
  %v5055 = vunpack.c.l.b16 %v4297
  %v5056 = vunpack.c.h.b16 %v4297
  %v5057 = vunpack.c.l.b16 %v4298
  %v5058 = vunpack.c.l.b16 %v4299
  %v5059 = vunpack.c.h.b16 %v4299
  %v5060 = vunpack.c.l.b16 %v4300
  %v5061 = vunpack.c.l.b16 %v4301
  %v5062 = vunpack.c.h.b16 %v4301
  %v5063 = vunpack.c.l.b16 %v4302
  %v5064 = vunpack.c.l.b16 %v4303
  %v5065 = vunpack.c.h.b16 %v4303
  %v5066 = vunpack.c.l.b16 %v4304
  %v5067 = vunpack.c.l.b16 %v4305
  %v5068 = vunpack.c.h.b16 %v4305
  %v5069 = vunpack.c.l.b16 %v4306
  %v5070 = vunpack.c.l.b16 %v4307
  %v5071 = vunpack.c.h.b16 %v4307
  %v5072 = vunpack.c.l.b16 %v4308
  %v5073 = vunpack.c.l.b16 %v4309
  %v5074 = vunpack.c.h.b16 %v4309
  %v5075 = vunpack.c.l.b16 %v4310
  %v5076 = vunpack.c.l.b16 %v4311
  %v5077 = vunpack.c.h.b16 %v4311
  %v5078 = vunpack.c.l.b16 %v4312
  %v5079 = vunpack.c.l.b16 %v4313
  %v5080 = vunpack.c.h.b16 %v4313
  %v5081 = vunpack.c.l.b16 %v4314
  %v5082 = vunpack.c.l.b16 %v4315
  %v5083 = vunpack.c.h.b16 %v4315
  %v5084 = vunpack.c.l.b16 %v4316
  %v5085 = vunpack.c.l.b16 %v4317
  %v5086 = vunpack.c.h.b16 %v4317
  %v5087 = vunpack.c.l.b16 %v4318
  %v5088 = vunpack.c.l.b16 %v4319
  %v5089 = vunpack.c.h.b16 %v4319
  %v5090 = vunpack.c.l.b16 %v4320
  %v5091 = vunpack.c.l.b16 %v4321
  %v5092 = vunpack.c.h.b16 %v4321
  %v5093 = vunpack.c.l.b16 %v4322
  %v5094 = vunpack.c.l.b16 %v4323
  %v5095 = vunpack.c.h.b16 %v4323
  %v5096 = vunpack.c.l.b16 %v4324
  %v5097 = vunpack.c.l.b16 %v4325
  %v5098 = vunpack.c.h.b16 %v4325
  %v5099 = vunpack.c.l.b16 %v4326
  %v5100 = vunpack.c.l.b16 %v4327
  %v5101 = vunpack.c.h.b16 %v4327
  %v5102 = vunpack.c.l.b16 %v4328
  %v5103 = vunpack.c.l.b16 %v4329
  %v5104 = vunpack.c.h.b16 %v4329
  %v5105 = vunpack.c.l.b16 %v4330
  %v5106 = vunpack.c.l.b16 %v4331
  %v5107 = vunpack.c.h.b16 %v4331
  %v5108 = vunpack.c.l.b16 %v4332
  %v5109 = vunpack.c.l.b16 %v4333
  %v5110 = vunpack.c.h.b16 %v4333
  %v5111 = vunpack.c.l.b16 %v4334
  %v5112 = vunpack.c.l.b16 %v4335
  %v5113 = vunpack.c.h.b16 %v4335
  %v5114 = vunpack.c.l.b16 %v4336
  %v5115 = vunpack.c.l.b16 %v4337
  %v5116 = vunpack.c.h.b16 %v4337
  %v5117 = vunpack.c.l.b16 %v4338
  %v5118 = vunpack.c.l.b16 %v4339
  %v5119 = vunpack.c.h.b16 %v4339
  %v5120 = vunpack.c.l.b16 %v4340
  %v5121 = vunpack.c.l.b16 %v4341
  %v5122 = vunpack.c.h.b16 %v4341
  %v5123 = vunpack.c.l.b16 %v4342
  %v5124 = vunpack.c.l.b16 %v4343
  %v5125 = vunpack.c.h.b16 %v4343
  %v5126 = vunpack.c.l.b16 %v4344
  %v5127 = vunpack.c.l.b16 %v4345
  %v5128 = vunpack.c.h.b16 %v4345
  %v5129 = vunpack.c.l.b16 %v4346
  %v5130 = vunpack.c.l.b16 %v4347
  %v5131 = vunpack.c.h.b16 %v4347
  %v5132 = vunpack.c.l.b16 %v4348
  %v5133 = vunpack.c.l.b16 %v4349
  %v5134 = vunpack.c.h.b16 %v4349
  %v5135 = vunpack.c.l.b16 %v4350
  %v5136 = vunpack.c.l.b16 %v4351
  %v5137 = vunpack.c.h.b16 %v4351
  %v5138 = vunpack.c.l.b16 %v4352
  %v5139 = vunpack.c.l.b16 %v4353
  %v5140 = vunpack.c.h.b16 %v4353
  %v5141 = vunpack.c.l.b16 %v4354
  %v5142 = vunpack.c.l.b16 %v4355
  %v5143 = vunpack.c.h.b16 %v4355
  %v5144 = vunpack.c.l.b16 %v4356
  %v5145 = vunpack.c.l.b16 %v4357
  %v5146 = vunpack.c.h.b16 %v4357
  %v5147 = vunpack.c.l.b16 %v4358
  %v5148 = vunpack.c.l.b16 %v4359
  %v5149 = vunpack.c.h.b16 %v4359
  %v5150 = vunpack.c.l.b16 %v4360
  %v5151 = vunpack.c.l.b16 %v4361
  %v5152 = vunpack.c.h.b16 %v4361
  %v5153 = vunpack.c.l.b16 %v4362
  %v5154 = vunpack.c.l.b16 %v4363
  %v5155 = vunpack.c.h.b16 %v4363
  %v5156 = vunpack.c.l.b16 %v4364
  %v5157 = vunpack.c.l.b16 %v4365
  %v5158 = vunpack.c.h.b16 %v4365
  %v5159 = vunpack.c.l.b16 %v4366
  %v5160 = vunpack.c.l.b16 %v4367
  %v5161 = vunpack.c.h.b16 %v4367
  %v5162 = vunpack.c.l.b16 %v4368
  %v5163 = vunpack.c.l.b16 %v4369
  %v5164 = vunpack.c.h.b16 %v4369
  %v5165 = vunpack.c.l.b16 %v4370
  %v5166 = vunpack.c.l.b16 %v4371
  %v5167 = vunpack.c.h.b16 %v4371
  %v5168 = vunpack.c.l.b16 %v4372
  %v5169 = vunpack.c.l.b16 %v4373
  %v5170 = vunpack.c.h.b16 %v4373
  %v5171 = vunpack.c.l.b16 %v4374
  %v5172 = vunpack.c.l.b16 %v4375
  %v5173 = vunpack.c.h.b16 %v4375
  %v5174 = vunpack.c.l.b16 %v4376
  %v5175 = vunpack.c.l.b16 %v4377
  %v5176 = vunpack.c.h.b16 %v4377
  %v5177 = vunpack.c.l.b16 %v4378
  %v5178 = vunpack.c.l.b16 %v4379
  %v5179 = vunpack.c.h.b16 %v4379
  %v5180 = vunpack.c.l.b16 %v4380
  %v5181 = vunpack.c.l.b16 %v4381
  %v5182 = vunpack.c.h.b16 %v4381
  %v5183 = vunpack.c.l.b16 %v4382
  %v5184 = vunpack.c.l.b16 %v4383
  %v5185 = vunpack.c.h.b16 %v4383
  %v5186 = vunpack.c.l.b16 %v4384
  %v5187 = vunpack.c.l.b16 %v4385
  %v5188 = vunpack.c.h.b16 %v4385
  %v5189 = vunpack.c.l.b16 %v4386
  %v5190 = vunpack.c.l.b16 %v4387
  %v5191 = vunpack.c.h.b16 %v4387
  %v5192 = vunpack.c.l.b16 %v4388
  %v5193 = vunpack.c.l.b16 %v4389
  %v5194 = vunpack.c.h.b16 %v4389
  %v5195 = vunpack.c.l.b16 %v4390
  %v5196 = vunpack.c.l.b16 %v4391
  %v5197 = vunpack.c.h.b16 %v4391
  %v5198 = vunpack.c.l.b16 %v4392
  %v5199 = vunpack.c.l.b16 %v4393
  %v5200 = vunpack.c.h.b16 %v4393
  %v5201 = vunpack.c.l.b16 %v4394
  %v5202 = vunpack.c.l.b16 %v4395
  %v5203 = vunpack.c.h.b16 %v4395
  %v5204 = vunpack.c.l.b16 %v4396
  %v5205 = vunpack.c.l.b16 %v4397
  %v5206 = vunpack.c.h.b16 %v4397
  %v5207 = vunpack.c.l.b16 %v4398
  %v5208 = vunpack.c.l.b16 %v4399
  %v5209 = vunpack.c.h.b16 %v4399
  %v5210 = vunpack.c.l.b16 %v4400
  %v5211 = vunpack.c.l.b16 %v4401
  %v5212 = vunpack.c.h.b16 %v4401
  %v5213 = vunpack.c.l.b16 %v4402
  %v5214 = vunpack.c.l.b16 %v4403
  %v5215 = vunpack.c.h.b16 %v4403
  %v5216 = vunpack.c.l.b16 %v4404
  %v5217 = vunpack.c.l.b16 %v4405
  %v5218 = vunpack.c.h.b16 %v4405
  %v5219 = vunpack.c.l.b16 %v4406
  %v5220 = vunpack.c.l.b16 %v4407
  %v5221 = vunpack.c.h.b16 %v4407
  %v5222 = vunpack.c.l.b16 %v4408
  %v5223 = vunpack.c.l.b16 %v4409
  %v5224 = vunpack.c.h.b16 %v4409
  %v5225 = vunpack.c.l.b16 %v4410
  %v5226 = vunpack.c.l.b16 %v4411
  %v5227 = vunpack.c.h.b16 %v4411
  %v5228 = vunpack.c.l.b16 %v4412
  %v5229 = vunpack.c.l.b16 %v4413
  %v5230 = vunpack.c.h.b16 %v4413
  %v5231 = vunpack.c.l.b16 %v4414
  %v5232 = vunpack.c.l.b16 %v4415
  %v5233 = vunpack.c.h.b16 %v4415
  %v5234 = vunpack.c.l.b16 %v4416
  %v5235 = vunpack.c.l.b16 %v4417
  %v5236 = vunpack.c.h.b16 %v4417
  %v5237 = vunpack.c.l.b16 %v4418
  %v5238 = vunpack.c.l.b16 %v4419
  %v5239 = vunpack.c.h.b16 %v4419
  %v5240 = vunpack.c.l.b16 %v4420
  %v5241 = vpack.c.b16 %v4764, %v4761
  %v5242 = vpack.c.b16 %v4765, %v4762
  %v5243 = vpack.c.b16 %v4766, %v4763
  %v5244 = vpack.c.b16 %v4770, %v4767
  %v5245 = vpack.c.b16 %v4771, %v4768
  %v5246 = vpack.c.b16 %v4772, %v4769
  %v5247 = vpack.c.b16 %v4776, %v4773
  %v5248 = vpack.c.b16 %v4777, %v4774
  %v5249 = vpack.c.b16 %v4778, %v4775
  %v5250 = vpack.c.b16 %v4782, %v4779
  %v5251 = vpack.c.b16 %v4783, %v4780
  %v5252 = vpack.c.b16 %v4784, %v4781
  %v5253 = vpack.c.b16 %v4788, %v4785
  %v5254 = vpack.c.b16 %v4789, %v4786
  %v5255 = vpack.c.b16 %v4790, %v4787
  %v5256 = vpack.c.b16 %v4794, %v4791
  %v5257 = vpack.c.b16 %v4795, %v4792
  %v5258 = vpack.c.b16 %v4796, %v4793
  %v5259 = vpack.c.b16 %v4800, %v4797
  %v5260 = vpack.c.b16 %v4801, %v4798
  %v5261 = vpack.c.b16 %v4802, %v4799
  %v5262 = vpack.c.b16 %v4806, %v4803
  %v5263 = vpack.c.b16 %v4807, %v4804
  %v5264 = vpack.c.b16 %v4808, %v4805
  %v5265 = vpack.c.b16 %v4812, %v4809
  %v5266 = vpack.c.b16 %v4813, %v4810
  %v5267 = vpack.c.b16 %v4814, %v4811
  %v5268 = vpack.c.b16 %v4818, %v4815
  %v5269 = vpack.c.b16 %v4819, %v4816
  %v5270 = vpack.c.b16 %v4820, %v4817
  %v5271 = vpack.c.b16 %v4824, %v4821
  %v5272 = vpack.c.b16 %v4825, %v4822
  %v5273 = vpack.c.b16 %v4826, %v4823
  %v5274 = vpack.c.b16 %v4830, %v4827
  %v5275 = vpack.c.b16 %v4831, %v4828
  %v5276 = vpack.c.b16 %v4832, %v4829
  %v5277 = vpack.c.b16 %v4836, %v4833
  %v5278 = vpack.c.b16 %v4837, %v4834
  %v5279 = vpack.c.b16 %v4838, %v4835
  %v5280 = vpack.c.b16 %v4842, %v4839
  %v5281 = vpack.c.b16 %v4843, %v4840
  %v5282 = vpack.c.b16 %v4844, %v4841
  %v5283 = vpack.c.b16 %v4848, %v4845
  %v5284 = vpack.c.b16 %v4849, %v4846
  %v5285 = vpack.c.b16 %v4850, %v4847
  %v5286 = vpack.c.b16 %v4854, %v4851
  %v5287 = vpack.c.b16 %v4855, %v4852
  %v5288 = vpack.c.b16 %v4856, %v4853
  %v5289 = vpack.c.b16 %v4860, %v4857
  %v5290 = vpack.c.b16 %v4861, %v4858
  %v5291 = vpack.c.b16 %v4862, %v4859
  %v5292 = vpack.c.b16 %v4866, %v4863
  %v5293 = vpack.c.b16 %v4867, %v4864
  %v5294 = vpack.c.b16 %v4868, %v4865
  %v5295 = vpack.c.b16 %v4872, %v4869
  %v5296 = vpack.c.b16 %v4873, %v4870
  %v5297 = vpack.c.b16 %v4874, %v4871
  %v5298 = vpack.c.b16 %v4878, %v4875
  %v5299 = vpack.c.b16 %v4879, %v4876
  %v5300 = vpack.c.b16 %v4880, %v4877
  %v5301 = vpack.c.b16 %v4884, %v4881
  %v5302 = vpack.c.b16 %v4885, %v4882
  %v5303 = vpack.c.b16 %v4886, %v4883
  %v5304 = vpack.c.b16 %v4890, %v4887
  %v5305 = vpack.c.b16 %v4891, %v4888
  %v5306 = vpack.c.b16 %v4892, %v4889
  %v5307 = vpack.c.b16 %v4896, %v4893
  %v5308 = vpack.c.b16 %v4897, %v4894
  %v5309 = vpack.c.b16 %v4898, %v4895
  %v5310 = vpack.c.b16 %v4902, %v4899
  %v5311 = vpack.c.b16 %v4903, %v4900
  %v5312 = vpack.c.b16 %v4904, %v4901
  %v5313 = vpack.c.b16 %v4908, %v4905
  %v5314 = vpack.c.b16 %v4909, %v4906
  %v5315 = vpack.c.b16 %v4910, %v4907
  %v5316 = vpack.c.b16 %v4914, %v4911
  %v5317 = vpack.c.b16 %v4915, %v4912
  %v5318 = vpack.c.b16 %v4916, %v4913
  %v5319 = vpack.c.b16 %v4920, %v4917
  %v5320 = vpack.c.b16 %v4921, %v4918
  %v5321 = vpack.c.b16 %v4922, %v4919
  %v5322 = vpack.c.b16 %v4926, %v4923
  %v5323 = vpack.c.b16 %v4927, %v4924
  %v5324 = vpack.c.b16 %v4928, %v4925
  %v5325 = vpack.c.b16 %v4932, %v4929
  %v5326 = vpack.c.b16 %v4933, %v4930
  %v5327 = vpack.c.b16 %v4934, %v4931
  %v5328 = vpack.c.b16 %v4938, %v4935
  %v5329 = vpack.c.b16 %v4939, %v4936
  %v5330 = vpack.c.b16 %v4940, %v4937
  %v5331 = vpack.c.b16 %v4944, %v4941
  %v5332 = vpack.c.b16 %v4945, %v4942
  %v5333 = vpack.c.b16 %v4946, %v4943
  %v5334 = vpack.c.b16 %v4950, %v4947
  %v5335 = vpack.c.b16 %v4951, %v4948
  %v5336 = vpack.c.b16 %v4952, %v4949
  %v5337 = vpack.c.b16 %v4956, %v4953
  %v5338 = vpack.c.b16 %v4957, %v4954
  %v5339 = vpack.c.b16 %v4958, %v4955
  %v5340 = vpack.c.b16 %v4962, %v4959
  %v5341 = vpack.c.b16 %v4963, %v4960
  %v5342 = vpack.c.b16 %v4964, %v4961
  %v5343 = vpack.c.b16 %v4968, %v4965
  %v5344 = vpack.c.b16 %v4969, %v4966
  %v5345 = vpack.c.b16 %v4970, %v4967
  %v5346 = vpack.c.b16 %v4974, %v4971
  %v5347 = vpack.c.b16 %v4975, %v4972
  %v5348 = vpack.c.b16 %v4976, %v4973
  %v5349 = vpack.c.b16 %v4980, %v4977
  %v5350 = vpack.c.b16 %v4981, %v4978
  %v5351 = vpack.c.b16 %v4982, %v4979
  %v5352 = vpack.c.b16 %v4986, %v4983
  %v5353 = vpack.c.b16 %v4987, %v4984
  %v5354 = vpack.c.b16 %v4988, %v4985
  %v5355 = vpack.c.b16 %v4992, %v4989
  %v5356 = vpack.c.b16 %v4993, %v4990
  %v5357 = vpack.c.b16 %v4994, %v4991
  %v5358 = vpack.c.b16 %v4998, %v4995
  %v5359 = vpack.c.b16 %v4999, %v4996
  %v5360 = vpack.c.b16 %v5000, %v4997
  %v5361 = vpack.c.b16 %v5004, %v5001
  %v5362 = vpack.c.b16 %v5005, %v5002
  %v5363 = vpack.c.b16 %v5006, %v5003
  %v5364 = vpack.c.b16 %v5010, %v5007
  %v5365 = vpack.c.b16 %v5011, %v5008
  %v5366 = vpack.c.b16 %v5012, %v5009
  %v5367 = vpack.c.b16 %v5016, %v5013
  %v5368 = vpack.c.b16 %v5017, %v5014
  %v5369 = vpack.c.b16 %v5018, %v5015
  %v5370 = vpack.c.b16 %v5022, %v5019
  %v5371 = vpack.c.b16 %v5023, %v5020
  %v5372 = vpack.c.b16 %v5024, %v5021
  %v5373 = vpack.c.b16 %v5028, %v5025
  %v5374 = vpack.c.b16 %v5029, %v5026
  %v5375 = vpack.c.b16 %v5030, %v5027
  %v5376 = vpack.c.b16 %v5034, %v5031
  %v5377 = vpack.c.b16 %v5035, %v5032
  %v5378 = vpack.c.b16 %v5036, %v5033
  %v5379 = vpack.c.b16 %v5040, %v5037
  %v5380 = vpack.c.b16 %v5041, %v5038
  %v5381 = vpack.c.b16 %v5042, %v5039
  %v5382 = vpack.c.b16 %v5046, %v5043
  %v5383 = vpack.c.b16 %v5047, %v5044
  %v5384 = vpack.c.b16 %v5048, %v5045
  %v5385 = vpack.c.b16 %v5052, %v5049
  %v5386 = vpack.c.b16 %v5053, %v5050
  %v5387 = vpack.c.b16 %v5054, %v5051
  %v5388 = vpack.c.b16 %v5058, %v5055
  %v5389 = vpack.c.b16 %v5059, %v5056
  %v5390 = vpack.c.b16 %v5060, %v5057
  %v5391 = vpack.c.b16 %v5064, %v5061
  %v5392 = vpack.c.b16 %v5065, %v5062
  %v5393 = vpack.c.b16 %v5066, %v5063
  %v5394 = vpack.c.b16 %v5070, %v5067
  %v5395 = vpack.c.b16 %v5071, %v5068
  %v5396 = vpack.c.b16 %v5072, %v5069
  %v5397 = vpack.c.b16 %v5076, %v5073
  %v5398 = vpack.c.b16 %v5077, %v5074
  %v5399 = vpack.c.b16 %v5078, %v5075
  %v5400 = vpack.c.b16 %v5082, %v5079
  %v5401 = vpack.c.b16 %v5083, %v5080
  %v5402 = vpack.c.b16 %v5084, %v5081
  %v5403 = vpack.c.b16 %v5088, %v5085
  %v5404 = vpack.c.b16 %v5089, %v5086
  %v5405 = vpack.c.b16 %v5090, %v5087
  %v5406 = vpack.c.b16 %v5094, %v5091
  %v5407 = vpack.c.b16 %v5095, %v5092
  %v5408 = vpack.c.b16 %v5096, %v5093
  %v5409 = vpack.c.b16 %v5100, %v5097
  %v5410 = vpack.c.b16 %v5101, %v5098
  %v5411 = vpack.c.b16 %v5102, %v5099
  %v5412 = vpack.c.b16 %v5106, %v5103
  %v5413 = vpack.c.b16 %v5107, %v5104
  %v5414 = vpack.c.b16 %v5108, %v5105
  %v5415 = vpack.c.b16 %v5112, %v5109
  %v5416 = vpack.c.b16 %v5113, %v5110
  %v5417 = vpack.c.b16 %v5114, %v5111
  %v5418 = vpack.c.b16 %v5118, %v5115
  %v5419 = vpack.c.b16 %v5119, %v5116
  %v5420 = vpack.c.b16 %v5120, %v5117
  %v5421 = vpack.c.b16 %v5124, %v5121
  %v5422 = vpack.c.b16 %v5125, %v5122
  %v5423 = vpack.c.b16 %v5126, %v5123
  %v5424 = vpack.c.b16 %v5130, %v5127
  %v5425 = vpack.c.b16 %v5131, %v5128
  %v5426 = vpack.c.b16 %v5132, %v5129
  %v5427 = vpack.c.b16 %v5136, %v5133
  %v5428 = vpack.c.b16 %v5137, %v5134
  %v5429 = vpack.c.b16 %v5138, %v5135
  %v5430 = vpack.c.b16 %v5142, %v5139
  %v5431 = vpack.c.b16 %v5143, %v5140
  %v5432 = vpack.c.b16 %v5144, %v5141
  %v5433 = vpack.c.b16 %v5148, %v5145
  %v5434 = vpack.c.b16 %v5149, %v5146
  %v5435 = vpack.c.b16 %v5150, %v5147
  %v5436 = vpack.c.b16 %v5154, %v5151
  %v5437 = vpack.c.b16 %v5155, %v5152
  %v5438 = vpack.c.b16 %v5156, %v5153
  %v5439 = vpack.c.b16 %v5160, %v5157
  %v5440 = vpack.c.b16 %v5161, %v5158
  %v5441 = vpack.c.b16 %v5162, %v5159
  %v5442 = vpack.c.b16 %v5166, %v5163
  %v5443 = vpack.c.b16 %v5167, %v5164
  %v5444 = vpack.c.b16 %v5168, %v5165
  %v5445 = vpack.c.b16 %v5172, %v5169
  %v5446 = vpack.c.b16 %v5173, %v5170
  %v5447 = vpack.c.b16 %v5174, %v5171
  %v5448 = vpack.c.b16 %v5178, %v5175
  %v5449 = vpack.c.b16 %v5179, %v5176
  %v5450 = vpack.c.b16 %v5180, %v5177
  %v5451 = vpack.c.b16 %v5184, %v5181
  %v5452 = vpack.c.b16 %v5185, %v5182
  %v5453 = vpack.c.b16 %v5186, %v5183
  %v5454 = vpack.c.b16 %v5190, %v5187
  %v5455 = vpack.c.b16 %v5191, %v5188
  %v5456 = vpack.c.b16 %v5192, %v5189
  %v5457 = vpack.c.b16 %v5196, %v5193
  %v5458 = vpack.c.b16 %v5197, %v5194
  %v5459 = vpack.c.b16 %v5198, %v5195
  %v5460 = vpack.c.b16 %v5202, %v5199
  %v5461 = vpack.c.b16 %v5203, %v5200
  %v5462 = vpack.c.b16 %v5204, %v5201
  %v5463 = vpack.c.b16 %v5208, %v5205
  %v5464 = vpack.c.b16 %v5209, %v5206
  %v5465 = vpack.c.b16 %v5210, %v5207
  %v5466 = vpack.c.b16 %v5214, %v5211
  %v5467 = vpack.c.b16 %v5215, %v5212
  %v5468 = vpack.c.b16 %v5216, %v5213
  %v5469 = vpack.c.b16 %v5220, %v5217
  %v5470 = vpack.c.b16 %v5221, %v5218
  %v5471 = vpack.c.b16 %v5222, %v5219
  %v5472 = vpack.c.b16 %v5226, %v5223
  %v5473 = vpack.c.b16 %v5227, %v5224
  %v5474 = vpack.c.b16 %v5228, %v5225
  %v5475 = vpack.c.b16 %v5232, %v5229
  %v5476 = vpack.c.b16 %v5233, %v5230
  %v5477 = vpack.c.b16 %v5234, %v5231
  %v5478 = vpack.c.b16 %v5238, %v5235
  %v5479 = vpack.c.b16 %v5239, %v5236
  %v5480 = vpack.c.b16 %v5240, %v5237
  %vm5641 = vcmask 523264
  %v5643 = vsel %vm5641, %v5243, 0
  %v5646 = vsel %vm5641, %v5246, 0
  %v5649 = vsel %vm5641, %v5249, 0
  %v5652 = vsel %vm5641, %v5252, 0
  %v5655 = vsel %vm5641, %v5255, 0
  %v5658 = vsel %vm5641, %v5258, 0
  %v5661 = vsel %vm5641, %v5261, 0
  %v5664 = vsel %vm5641, %v5264, 0
  %v5667 = vsel %vm5641, %v5267, 0
  %v5670 = vsel %vm5641, %v5270, 0
  %v5673 = vsel %vm5641, %v5273, 0
  %v5676 = vsel %vm5641, %v5276, 0
  %v5679 = vsel %vm5641, %v5279, 0
  %v5682 = vsel %vm5641, %v5282, 0
  %v5685 = vsel %vm5641, %v5285, 0
  %v5688 = vsel %vm5641, %v5288, 0
  %v5691 = vsel %vm5641, %v5291, 0
  %v5694 = vsel %vm5641, %v5294, 0
  %v5697 = vsel %vm5641, %v5297, 0
  %v5700 = vsel %vm5641, %v5300, 0
  %v5703 = vsel %vm5641, %v5303, 0
  %v5706 = vsel %vm5641, %v5306, 0
  %v5709 = vsel %vm5641, %v5309, 0
  %v5712 = vsel %vm5641, %v5312, 0
  %v5715 = vsel %vm5641, %v5315, 0
  %v5718 = vsel %vm5641, %v5318, 0
  %v5721 = vsel %vm5641, %v5321, 0
  %v5724 = vsel %vm5641, %v5324, 0
  %v5727 = vsel %vm5641, %v5327, 0
  %v5730 = vsel %vm5641, %v5330, 0
  %v5733 = vsel %vm5641, %v5333, 0
  %v5736 = vsel %vm5641, %v5336, 0
  %v5739 = vsel %vm5641, %v5339, 0
  %v5742 = vsel %vm5641, %v5342, 0
  %v5745 = vsel %vm5641, %v5345, 0
  %v5748 = vsel %vm5641, %v5348, 0
  %v5751 = vsel %vm5641, %v5351, 0
  %v5754 = vsel %vm5641, %v5354, 0
  %v5757 = vsel %vm5641, %v5357, 0
  %v5760 = vsel %vm5641, %v5360, 0
  %v5763 = vsel %vm5641, %v5363, 0
  %v5766 = vsel %vm5641, %v5366, 0
  %v5769 = vsel %vm5641, %v5369, 0
  %v5772 = vsel %vm5641, %v5372, 0
  %v5775 = vsel %vm5641, %v5375, 0
  %v5778 = vsel %vm5641, %v5378, 0
  %v5781 = vsel %vm5641, %v5381, 0
  %v5784 = vsel %vm5641, %v5384, 0
  %v5787 = vsel %vm5641, %v5387, 0
  %v5790 = vsel %vm5641, %v5390, 0
  %v5793 = vsel %vm5641, %v5393, 0
  %v5796 = vsel %vm5641, %v5396, 0
  %v5799 = vsel %vm5641, %v5399, 0
  %v5802 = vsel %vm5641, %v5402, 0
  %v5805 = vsel %vm5641, %v5405, 0
  %v5808 = vsel %vm5641, %v5408, 0
  %v5811 = vsel %vm5641, %v5411, 0
  %v5814 = vsel %vm5641, %v5414, 0
  %v5817 = vsel %vm5641, %v5417, 0
  %v5820 = vsel %vm5641, %v5420, 0
  %v5823 = vsel %vm5641, %v5423, 0
  %v5826 = vsel %vm5641, %v5426, 0
  %v5829 = vsel %vm5641, %v5429, 0
  %v5832 = vsel %vm5641, %v5432, 0
  %v5835 = vsel %vm5641, %v5435, 0
  %v5838 = vsel %vm5641, %v5438, 0
  %v5841 = vsel %vm5641, %v5441, 0
  %v5844 = vsel %vm5641, %v5444, 0
  %v5847 = vsel %vm5641, %v5447, 0
  %v5850 = vsel %vm5641, %v5450, 0
  %v5853 = vsel %vm5641, %v5453, 0
  %v5856 = vsel %vm5641, %v5456, 0
  %v5859 = vsel %vm5641, %v5459, 0
  %v5862 = vsel %vm5641, %v5462, 0
  %v5865 = vsel %vm5641, %v5465, 0
  %v5868 = vsel %vm5641, %v5468, 0
  %v5871 = vsel %vm5641, %v5471, 0
  %v5874 = vsel %vm5641, %v5474, 0
  %v5877 = vsel %vm5641, %v5477, 0
  %v5880 = vsel %vm5641, %v5480, 0
  %5882 = vmatpush.bf16.msra.mxu0 %v4428
  %5883 = vmatpush.bf16.msra.mxu0 %v4427
  %5884 = vmatpush.bf16.msra.mxu0 %v4426
  %5885 = vmatpush.bf16.msra.mxu0 %v4425
  %5886 = vmatpush.bf16.msra.mxu0 %v4424
  %5887 = vmatpush.bf16.msra.mxu0 %v4423
  %5888 = vmatpush.bf16.msra.mxu0 %v4422
  %5889 = vmatpush.bf16.msra.mxu0 %v4421
  %5890 = vmatmul.bf16.gmra.mxu0 %v5241
  %v5891 = vpop.f32.mrf.mxu0
  %v5892 = vadd.f32 0.0, %v5891
  %v5893 = vpop.f32.mrf.mxu0
  %v5894 = vadd.f32 0.0, %v5893
  %5895 = vmatmul.bf16.gmra.mxu0 %v5244
  %v5896 = vpop.f32.mrf.mxu0
  %v5897 = vadd.f32 0.0, %v5896
  %v5898 = vpop.f32.mrf.mxu0
  %v5899 = vadd.f32 0.0, %v5898
  %5900 = vmatmul.bf16.gmra.mxu0 %v5247
  %v5901 = vpop.f32.mrf.mxu0
  %v5902 = vadd.f32 0.0, %v5901
  %v5903 = vpop.f32.mrf.mxu0
  %v5904 = vadd.f32 0.0, %v5903
  %5905 = vmatmul.bf16.gmra.mxu0 %v5250
  %v5906 = vpop.f32.mrf.mxu0
  %v5907 = vadd.f32 0.0, %v5906
  %v5908 = vpop.f32.mrf.mxu0
  %v5909 = vadd.f32 0.0, %v5908
  %5910 = vmatmul.bf16.gmra.mxu0 %v5253
  %v5911 = vpop.f32.mrf.mxu0
  %v5912 = vadd.f32 0.0, %v5911
  %v5913 = vpop.f32.mrf.mxu0
  %v5914 = vadd.f32 0.0, %v5913
  %5915 = vmatmul.bf16.gmra.mxu0 %v5256
  %v5916 = vpop.f32.mrf.mxu0
  %v5917 = vadd.f32 0.0, %v5916
  %v5918 = vpop.f32.mrf.mxu0
  %v5919 = vadd.f32 0.0, %v5918
  %5920 = vmatmul.bf16.gmra.mxu0 %v5259
  %v5921 = vpop.f32.mrf.mxu0
  %v5922 = vadd.f32 0.0, %v5921
  %v5923 = vpop.f32.mrf.mxu0
  %v5924 = vadd.f32 0.0, %v5923
  %5925 = vmatmul.bf16.gmra.mxu0 %v5262
  %v5926 = vpop.f32.mrf.mxu0
  %v5927 = vadd.f32 0.0, %v5926
  %v5928 = vpop.f32.mrf.mxu0
  %v5929 = vadd.f32 0.0, %v5928
  %5930 = vmatmul.bf16.gmra.mxu0 %v5265
  %v5931 = vpop.f32.mrf.mxu0
  %v5932 = vadd.f32 0.0, %v5931
  %v5933 = vpop.f32.mrf.mxu0
  %v5934 = vadd.f32 0.0, %v5933
  %5935 = vmatmul.bf16.gmra.mxu0 %v5268
  %v5936 = vpop.f32.mrf.mxu0
  %v5937 = vadd.f32 0.0, %v5936
  %v5938 = vpop.f32.mrf.mxu0
  %v5939 = vadd.f32 0.0, %v5938
  %5940 = vmatmul.bf16.gmra.mxu0 %v5271
  %v5941 = vpop.f32.mrf.mxu0
  %v5942 = vadd.f32 0.0, %v5941
  %v5943 = vpop.f32.mrf.mxu0
  %v5944 = vadd.f32 0.0, %v5943
  %5945 = vmatmul.bf16.gmra.mxu0 %v5274
  %v5946 = vpop.f32.mrf.mxu0
  %v5947 = vadd.f32 0.0, %v5946
  %v5948 = vpop.f32.mrf.mxu0
  %v5949 = vadd.f32 0.0, %v5948
  %5950 = vmatmul.bf16.gmra.mxu0 %v5277
  %v5951 = vpop.f32.mrf.mxu0
  %v5952 = vadd.f32 0.0, %v5951
  %v5953 = vpop.f32.mrf.mxu0
  %v5954 = vadd.f32 0.0, %v5953
  %5955 = vmatmul.bf16.gmra.mxu0 %v5280
  %v5956 = vpop.f32.mrf.mxu0
  %v5957 = vadd.f32 0.0, %v5956
  %v5958 = vpop.f32.mrf.mxu0
  %v5959 = vadd.f32 0.0, %v5958
  %5960 = vmatmul.bf16.gmra.mxu0 %v5283
  %v5961 = vpop.f32.mrf.mxu0
  %v5962 = vadd.f32 0.0, %v5961
  %v5963 = vpop.f32.mrf.mxu0
  %v5964 = vadd.f32 0.0, %v5963
  %5965 = vmatmul.bf16.gmra.mxu0 %v5286
  %v5966 = vpop.f32.mrf.mxu0
  %v5967 = vadd.f32 0.0, %v5966
  %v5968 = vpop.f32.mrf.mxu0
  %v5969 = vadd.f32 0.0, %v5968
  %5970 = vmatmul.bf16.gmra.mxu0 %v5289
  %v5971 = vpop.f32.mrf.mxu0
  %v5972 = vadd.f32 0.0, %v5971
  %v5973 = vpop.f32.mrf.mxu0
  %v5974 = vadd.f32 0.0, %v5973
  %5975 = vmatmul.bf16.gmra.mxu0 %v5292
  %v5976 = vpop.f32.mrf.mxu0
  %v5977 = vadd.f32 0.0, %v5976
  %v5978 = vpop.f32.mrf.mxu0
  %v5979 = vadd.f32 0.0, %v5978
  %5980 = vmatmul.bf16.gmra.mxu0 %v5295
  %v5981 = vpop.f32.mrf.mxu0
  %v5982 = vadd.f32 0.0, %v5981
  %v5983 = vpop.f32.mrf.mxu0
  %v5984 = vadd.f32 0.0, %v5983
  %5985 = vmatmul.bf16.gmra.mxu0 %v5298
  %v5986 = vpop.f32.mrf.mxu0
  %v5987 = vadd.f32 0.0, %v5986
  %v5988 = vpop.f32.mrf.mxu0
  %v5989 = vadd.f32 0.0, %v5988
  %5990 = vmatmul.bf16.gmra.mxu0 %v5301
  %v5991 = vpop.f32.mrf.mxu0
  %v5992 = vadd.f32 0.0, %v5991
  %v5993 = vpop.f32.mrf.mxu0
  %v5994 = vadd.f32 0.0, %v5993
  %5995 = vmatmul.bf16.gmra.mxu0 %v5304
  %v5996 = vpop.f32.mrf.mxu0
  %v5997 = vadd.f32 0.0, %v5996
  %v5998 = vpop.f32.mrf.mxu0
  %v5999 = vadd.f32 0.0, %v5998
  %6000 = vmatmul.bf16.gmra.mxu0 %v5307
  %v6001 = vpop.f32.mrf.mxu0
  %v6002 = vadd.f32 0.0, %v6001
  %v6003 = vpop.f32.mrf.mxu0
  %v6004 = vadd.f32 0.0, %v6003
  %6005 = vmatmul.bf16.gmra.mxu0 %v5310
  %v6006 = vpop.f32.mrf.mxu0
  %v6007 = vadd.f32 0.0, %v6006
  %v6008 = vpop.f32.mrf.mxu0
  %v6009 = vadd.f32 0.0, %v6008
  %6010 = vmatmul.bf16.gmra.mxu0 %v5313
  %v6011 = vpop.f32.mrf.mxu0
  %v6012 = vadd.f32 0.0, %v6011
  %v6013 = vpop.f32.mrf.mxu0
  %v6014 = vadd.f32 0.0, %v6013
  %6015 = vmatmul.bf16.gmra.mxu0 %v5316
  %v6016 = vpop.f32.mrf.mxu0
  %v6017 = vadd.f32 0.0, %v6016
  %v6018 = vpop.f32.mrf.mxu0
  %v6019 = vadd.f32 0.0, %v6018
  %6020 = vmatmul.bf16.gmra.mxu0 %v5319
  %v6021 = vpop.f32.mrf.mxu0
  %v6022 = vadd.f32 0.0, %v6021
  %v6023 = vpop.f32.mrf.mxu0
  %v6024 = vadd.f32 0.0, %v6023
  %6025 = vmatmul.bf16.gmra.mxu0 %v5322
  %v6026 = vpop.f32.mrf.mxu0
  %v6027 = vadd.f32 0.0, %v6026
  %v6028 = vpop.f32.mrf.mxu0
  %v6029 = vadd.f32 0.0, %v6028
  %6030 = vmatmul.bf16.gmra.mxu0 %v5325
  %v6031 = vpop.f32.mrf.mxu0
  %v6032 = vadd.f32 0.0, %v6031
  %v6033 = vpop.f32.mrf.mxu0
  %v6034 = vadd.f32 0.0, %v6033
  %6035 = vmatmul.bf16.gmra.mxu0 %v5328
  %v6036 = vpop.f32.mrf.mxu0
  %v6037 = vadd.f32 0.0, %v6036
  %v6038 = vpop.f32.mrf.mxu0
  %v6039 = vadd.f32 0.0, %v6038
  %6040 = vmatmul.bf16.gmra.mxu0 %v5331
  %v6041 = vpop.f32.mrf.mxu0
  %v6042 = vadd.f32 0.0, %v6041
  %v6043 = vpop.f32.mrf.mxu0
  %v6044 = vadd.f32 0.0, %v6043
  %6045 = vmatmul.bf16.gmra.mxu0 %v5334
  %v6046 = vpop.f32.mrf.mxu0
  %v6047 = vadd.f32 0.0, %v6046
  %v6048 = vpop.f32.mrf.mxu0
  %v6049 = vadd.f32 0.0, %v6048
  %6050 = vmatmul.bf16.gmra.mxu0 %v5337
  %v6051 = vpop.f32.mrf.mxu0
  %v6052 = vadd.f32 0.0, %v6051
  %v6053 = vpop.f32.mrf.mxu0
  %v6054 = vadd.f32 0.0, %v6053
  %6055 = vmatmul.bf16.gmra.mxu0 %v5340
  %v6056 = vpop.f32.mrf.mxu0
  %v6057 = vadd.f32 0.0, %v6056
  %v6058 = vpop.f32.mrf.mxu0
  %v6059 = vadd.f32 0.0, %v6058
  %6060 = vmatmul.bf16.gmra.mxu0 %v5343
  %v6061 = vpop.f32.mrf.mxu0
  %v6062 = vadd.f32 0.0, %v6061
  %v6063 = vpop.f32.mrf.mxu0
  %v6064 = vadd.f32 0.0, %v6063
  %6065 = vmatmul.bf16.gmra.mxu0 %v5346
  %v6066 = vpop.f32.mrf.mxu0
  %v6067 = vadd.f32 0.0, %v6066
  %v6068 = vpop.f32.mrf.mxu0
  %v6069 = vadd.f32 0.0, %v6068
  %6070 = vmatmul.bf16.gmra.mxu0 %v5349
  %v6071 = vpop.f32.mrf.mxu0
  %v6072 = vadd.f32 0.0, %v6071
  %v6073 = vpop.f32.mrf.mxu0
  %v6074 = vadd.f32 0.0, %v6073
  %6075 = vmatmul.bf16.gmra.mxu0 %v5352
  %v6076 = vpop.f32.mrf.mxu0
  %v6077 = vadd.f32 0.0, %v6076
  %v6078 = vpop.f32.mrf.mxu0
  %v6079 = vadd.f32 0.0, %v6078
  %6080 = vmatmul.bf16.gmra.mxu0 %v5355
  %v6081 = vpop.f32.mrf.mxu0
  %v6082 = vadd.f32 0.0, %v6081
  %v6083 = vpop.f32.mrf.mxu0
  %v6084 = vadd.f32 0.0, %v6083
  %6085 = vmatmul.bf16.gmra.mxu0 %v5358
  %v6086 = vpop.f32.mrf.mxu0
  %v6087 = vadd.f32 0.0, %v6086
  %v6088 = vpop.f32.mrf.mxu0
  %v6089 = vadd.f32 0.0, %v6088
  %6090 = vmatmul.bf16.gmra.mxu0 %v5361
  %v6091 = vpop.f32.mrf.mxu0
  %v6092 = vadd.f32 0.0, %v6091
  %v6093 = vpop.f32.mrf.mxu0
  %v6094 = vadd.f32 0.0, %v6093
  %6095 = vmatmul.bf16.gmra.mxu0 %v5364
  %v6096 = vpop.f32.mrf.mxu0
  %v6097 = vadd.f32 0.0, %v6096
  %v6098 = vpop.f32.mrf.mxu0
  %v6099 = vadd.f32 0.0, %v6098
  %6100 = vmatmul.bf16.gmra.mxu0 %v5367
  %v6101 = vpop.f32.mrf.mxu0
  %v6102 = vadd.f32 0.0, %v6101
  %v6103 = vpop.f32.mrf.mxu0
  %v6104 = vadd.f32 0.0, %v6103
  %6105 = vmatmul.bf16.gmra.mxu0 %v5370
  %v6106 = vpop.f32.mrf.mxu0
  %v6107 = vadd.f32 0.0, %v6106
  %v6108 = vpop.f32.mrf.mxu0
  %v6109 = vadd.f32 0.0, %v6108
  %6110 = vmatmul.bf16.gmra.mxu0 %v5373
  %v6111 = vpop.f32.mrf.mxu0
  %v6112 = vadd.f32 0.0, %v6111
  %v6113 = vpop.f32.mrf.mxu0
  %v6114 = vadd.f32 0.0, %v6113
  %6115 = vmatmul.bf16.gmra.mxu0 %v5376
  %v6116 = vpop.f32.mrf.mxu0
  %v6117 = vadd.f32 0.0, %v6116
  %v6118 = vpop.f32.mrf.mxu0
  %v6119 = vadd.f32 0.0, %v6118
  %6120 = vmatmul.bf16.gmra.mxu0 %v5379
  %v6121 = vpop.f32.mrf.mxu0
  %v6122 = vadd.f32 0.0, %v6121
  %v6123 = vpop.f32.mrf.mxu0
  %v6124 = vadd.f32 0.0, %v6123
  %6125 = vmatmul.bf16.gmra.mxu0 %v5382
  %v6126 = vpop.f32.mrf.mxu0
  %v6127 = vadd.f32 0.0, %v6126
  %v6128 = vpop.f32.mrf.mxu0
  %v6129 = vadd.f32 0.0, %v6128
  %6130 = vmatmul.bf16.gmra.mxu0 %v5385
  %v6131 = vpop.f32.mrf.mxu0
  %v6132 = vadd.f32 0.0, %v6131
  %v6133 = vpop.f32.mrf.mxu0
  %v6134 = vadd.f32 0.0, %v6133
  %6135 = vmatmul.bf16.gmra.mxu0 %v5388
  %v6136 = vpop.f32.mrf.mxu0
  %v6137 = vadd.f32 0.0, %v6136
  %v6138 = vpop.f32.mrf.mxu0
  %v6139 = vadd.f32 0.0, %v6138
  %6140 = vmatmul.bf16.gmra.mxu0 %v5391
  %v6141 = vpop.f32.mrf.mxu0
  %v6142 = vadd.f32 0.0, %v6141
  %v6143 = vpop.f32.mrf.mxu0
  %v6144 = vadd.f32 0.0, %v6143
  %6145 = vmatmul.bf16.gmra.mxu0 %v5394
  %v6146 = vpop.f32.mrf.mxu0
  %v6147 = vadd.f32 0.0, %v6146
  %v6148 = vpop.f32.mrf.mxu0
  %v6149 = vadd.f32 0.0, %v6148
  %6150 = vmatmul.bf16.gmra.mxu0 %v5397
  %v6151 = vpop.f32.mrf.mxu0
  %v6152 = vadd.f32 0.0, %v6151
  %v6153 = vpop.f32.mrf.mxu0
  %v6154 = vadd.f32 0.0, %v6153
  %6155 = vmatmul.bf16.gmra.mxu0 %v5400
  %v6156 = vpop.f32.mrf.mxu0
  %v6157 = vadd.f32 0.0, %v6156
  %v6158 = vpop.f32.mrf.mxu0
  %v6159 = vadd.f32 0.0, %v6158
  %6160 = vmatmul.bf16.gmra.mxu0 %v5403
  %v6161 = vpop.f32.mrf.mxu0
  %v6162 = vadd.f32 0.0, %v6161
  %v6163 = vpop.f32.mrf.mxu0
  %v6164 = vadd.f32 0.0, %v6163
  %6165 = vmatmul.bf16.gmra.mxu0 %v5406
  %v6166 = vpop.f32.mrf.mxu0
  %v6167 = vadd.f32 0.0, %v6166
  %v6168 = vpop.f32.mrf.mxu0
  %v6169 = vadd.f32 0.0, %v6168
  %6170 = vmatmul.bf16.gmra.mxu0 %v5409
  %v6171 = vpop.f32.mrf.mxu0
  %v6172 = vadd.f32 0.0, %v6171
  %v6173 = vpop.f32.mrf.mxu0
  %v6174 = vadd.f32 0.0, %v6173
  %6175 = vmatmul.bf16.gmra.mxu0 %v5412
  %v6176 = vpop.f32.mrf.mxu0
  %v6177 = vadd.f32 0.0, %v6176
  %v6178 = vpop.f32.mrf.mxu0
  %v6179 = vadd.f32 0.0, %v6178
  %6180 = vmatmul.bf16.gmra.mxu0 %v5415
  %v6181 = vpop.f32.mrf.mxu0
  %v6182 = vadd.f32 0.0, %v6181
  %v6183 = vpop.f32.mrf.mxu0
  %v6184 = vadd.f32 0.0, %v6183
  %6185 = vmatmul.bf16.gmra.mxu0 %v5418
  %v6186 = vpop.f32.mrf.mxu0
  %v6187 = vadd.f32 0.0, %v6186
  %v6188 = vpop.f32.mrf.mxu0
  %v6189 = vadd.f32 0.0, %v6188
  %6190 = vmatmul.bf16.gmra.mxu0 %v5421
  %v6191 = vpop.f32.mrf.mxu0
  %v6192 = vadd.f32 0.0, %v6191
  %v6193 = vpop.f32.mrf.mxu0
  %v6194 = vadd.f32 0.0, %v6193
  %6195 = vmatmul.bf16.gmra.mxu0 %v5424
  %v6196 = vpop.f32.mrf.mxu0
  %v6197 = vadd.f32 0.0, %v6196
  %v6198 = vpop.f32.mrf.mxu0
  %v6199 = vadd.f32 0.0, %v6198
  %6200 = vmatmul.bf16.gmra.mxu0 %v5427
  %v6201 = vpop.f32.mrf.mxu0
  %v6202 = vadd.f32 0.0, %v6201
  %v6203 = vpop.f32.mrf.mxu0
  %v6204 = vadd.f32 0.0, %v6203
  %6205 = vmatmul.bf16.gmra.mxu0 %v5430
  %v6206 = vpop.f32.mrf.mxu0
  %v6207 = vadd.f32 0.0, %v6206
  %v6208 = vpop.f32.mrf.mxu0
  %v6209 = vadd.f32 0.0, %v6208
  %6210 = vmatmul.bf16.gmra.mxu0 %v5433
  %v6211 = vpop.f32.mrf.mxu0
  %v6212 = vadd.f32 0.0, %v6211
  %v6213 = vpop.f32.mrf.mxu0
  %v6214 = vadd.f32 0.0, %v6213
  %6215 = vmatmul.bf16.gmra.mxu0 %v5436
  %v6216 = vpop.f32.mrf.mxu0
  %v6217 = vadd.f32 0.0, %v6216
  %v6218 = vpop.f32.mrf.mxu0
  %v6219 = vadd.f32 0.0, %v6218
  %6220 = vmatmul.bf16.gmra.mxu0 %v5439
  %v6221 = vpop.f32.mrf.mxu0
  %v6222 = vadd.f32 0.0, %v6221
  %v6223 = vpop.f32.mrf.mxu0
  %v6224 = vadd.f32 0.0, %v6223
  %6225 = vmatmul.bf16.gmra.mxu0 %v5442
  %v6226 = vpop.f32.mrf.mxu0
  %v6227 = vadd.f32 0.0, %v6226
  %v6228 = vpop.f32.mrf.mxu0
  %v6229 = vadd.f32 0.0, %v6228
  %6230 = vmatmul.bf16.gmra.mxu0 %v5445
  %v6231 = vpop.f32.mrf.mxu0
  %v6232 = vadd.f32 0.0, %v6231
  %v6233 = vpop.f32.mrf.mxu0
  %v6234 = vadd.f32 0.0, %v6233
  %6235 = vmatmul.bf16.gmra.mxu0 %v5448
  %v6236 = vpop.f32.mrf.mxu0
  %v6237 = vadd.f32 0.0, %v6236
  %v6238 = vpop.f32.mrf.mxu0
  %v6239 = vadd.f32 0.0, %v6238
  %6240 = vmatmul.bf16.gmra.mxu0 %v5451
  %v6241 = vpop.f32.mrf.mxu0
  %v6242 = vadd.f32 0.0, %v6241
  %v6243 = vpop.f32.mrf.mxu0
  %v6244 = vadd.f32 0.0, %v6243
  %6245 = vmatmul.bf16.gmra.mxu0 %v5454
  %v6246 = vpop.f32.mrf.mxu0
  %v6247 = vadd.f32 0.0, %v6246
  %v6248 = vpop.f32.mrf.mxu0
  %v6249 = vadd.f32 0.0, %v6248
  %6250 = vmatmul.bf16.gmra.mxu0 %v5457
  %v6251 = vpop.f32.mrf.mxu0
  %v6252 = vadd.f32 0.0, %v6251
  %v6253 = vpop.f32.mrf.mxu0
  %v6254 = vadd.f32 0.0, %v6253
  %6255 = vmatmul.bf16.gmra.mxu0 %v5460
  %v6256 = vpop.f32.mrf.mxu0
  %v6257 = vadd.f32 0.0, %v6256
  %v6258 = vpop.f32.mrf.mxu0
  %v6259 = vadd.f32 0.0, %v6258
  %6260 = vmatmul.bf16.gmra.mxu0 %v5463
  %v6261 = vpop.f32.mrf.mxu0
  %v6262 = vadd.f32 0.0, %v6261
  %v6263 = vpop.f32.mrf.mxu0
  %v6264 = vadd.f32 0.0, %v6263
  %6265 = vmatmul.bf16.gmra.mxu0 %v5466
  %v6266 = vpop.f32.mrf.mxu0
  %v6267 = vadd.f32 0.0, %v6266
  %v6268 = vpop.f32.mrf.mxu0
  %v6269 = vadd.f32 0.0, %v6268
  %6270 = vmatmul.bf16.gmra.mxu0 %v5469
  %v6271 = vpop.f32.mrf.mxu0
  %v6272 = vadd.f32 0.0, %v6271
  %v6273 = vpop.f32.mrf.mxu0
  %v6274 = vadd.f32 0.0, %v6273
  %6275 = vmatmul.bf16.gmra.mxu0 %v5472
  %v6276 = vpop.f32.mrf.mxu0
  %v6277 = vadd.f32 0.0, %v6276
  %v6278 = vpop.f32.mrf.mxu0
  %v6279 = vadd.f32 0.0, %v6278
  %6280 = vmatmul.bf16.gmra.mxu0 %v5475
  %v6281 = vpop.f32.mrf.mxu0
  %v6282 = vadd.f32 0.0, %v6281
  %v6283 = vpop.f32.mrf.mxu0
  %v6284 = vadd.f32 0.0, %v6283
  %6285 = vmatmul.bf16.gmra.mxu0 %v5478
  %v6286 = vpop.f32.mrf.mxu0
  %v6287 = vadd.f32 0.0, %v6286
  %v6288 = vpop.f32.mrf.mxu0
  %v6289 = vadd.f32 0.0, %v6288
  %6290 = vdwg.mxu0
  %6291 = vmatpush.bf16.msra.mxu0 %v4436
  %6292 = vmatpush.bf16.msra.mxu0 %v4435
  %6293 = vmatpush.bf16.msra.mxu0 %v4434
  %6294 = vmatpush.bf16.msra.mxu0 %v4433
  %6295 = vmatpush.bf16.msra.mxu0 %v4432
  %6296 = vmatpush.bf16.msra.mxu0 %v4431
  %6297 = vmatpush.bf16.msra.mxu0 %v4430
  %6298 = vmatpush.bf16.msra.mxu0 %v4429
  %6299 = vmatmul.bf16.gmra.mxu0 %v5242
  %v6300 = vpop.f32.mrf.mxu0
  %v6301 = vadd.f32 %v5892, %v6300
  %v6302 = vpop.f32.mrf.mxu0
  %v6303 = vadd.f32 %v5894, %v6302
  %6304 = vmatmul.bf16.gmra.mxu0 %v5245
  %v6305 = vpop.f32.mrf.mxu0
  %v6306 = vadd.f32 %v5897, %v6305
  %v6307 = vpop.f32.mrf.mxu0
  %v6308 = vadd.f32 %v5899, %v6307
  %6309 = vmatmul.bf16.gmra.mxu0 %v5248
  %v6310 = vpop.f32.mrf.mxu0
  %v6311 = vadd.f32 %v5902, %v6310
  %v6312 = vpop.f32.mrf.mxu0
  %v6313 = vadd.f32 %v5904, %v6312
  %6314 = vmatmul.bf16.gmra.mxu0 %v5251
  %v6315 = vpop.f32.mrf.mxu0
  %v6316 = vadd.f32 %v5907, %v6315
  %v6317 = vpop.f32.mrf.mxu0
  %v6318 = vadd.f32 %v5909, %v6317
  %6319 = vmatmul.bf16.gmra.mxu0 %v5254
  %v6320 = vpop.f32.mrf.mxu0
  %v6321 = vadd.f32 %v5912, %v6320
  %v6322 = vpop.f32.mrf.mxu0
  %v6323 = vadd.f32 %v5914, %v6322
  %6324 = vmatmul.bf16.gmra.mxu0 %v5257
  %v6325 = vpop.f32.mrf.mxu0
  %v6326 = vadd.f32 %v5917, %v6325
  %v6327 = vpop.f32.mrf.mxu0
  %v6328 = vadd.f32 %v5919, %v6327
  %6329 = vmatmul.bf16.gmra.mxu0 %v5260
  %v6330 = vpop.f32.mrf.mxu0
  %v6331 = vadd.f32 %v5922, %v6330
  %v6332 = vpop.f32.mrf.mxu0
  %v6333 = vadd.f32 %v5924, %v6332
  %6334 = vmatmul.bf16.gmra.mxu0 %v5263
  %v6335 = vpop.f32.mrf.mxu0
  %v6336 = vadd.f32 %v5927, %v6335
  %v6337 = vpop.f32.mrf.mxu0
  %v6338 = vadd.f32 %v5929, %v6337
  %6339 = vmatmul.bf16.gmra.mxu0 %v5266
  %v6340 = vpop.f32.mrf.mxu0
  %v6341 = vadd.f32 %v5932, %v6340
  %v6342 = vpop.f32.mrf.mxu0
  %v6343 = vadd.f32 %v5934, %v6342
  %6344 = vmatmul.bf16.gmra.mxu0 %v5269
  %v6345 = vpop.f32.mrf.mxu0
  %v6346 = vadd.f32 %v5937, %v6345
  %v6347 = vpop.f32.mrf.mxu0
  %v6348 = vadd.f32 %v5939, %v6347
  %6349 = vmatmul.bf16.gmra.mxu0 %v5272
  %v6350 = vpop.f32.mrf.mxu0
  %v6351 = vadd.f32 %v5942, %v6350
  %v6352 = vpop.f32.mrf.mxu0
  %v6353 = vadd.f32 %v5944, %v6352
  %6354 = vmatmul.bf16.gmra.mxu0 %v5275
  %v6355 = vpop.f32.mrf.mxu0
  %v6356 = vadd.f32 %v5947, %v6355
  %v6357 = vpop.f32.mrf.mxu0
  %v6358 = vadd.f32 %v5949, %v6357
  %6359 = vmatmul.bf16.gmra.mxu0 %v5278
  %v6360 = vpop.f32.mrf.mxu0
  %v6361 = vadd.f32 %v5952, %v6360
  %v6362 = vpop.f32.mrf.mxu0
  %v6363 = vadd.f32 %v5954, %v6362
  %6364 = vmatmul.bf16.gmra.mxu0 %v5281
  %v6365 = vpop.f32.mrf.mxu0
  %v6366 = vadd.f32 %v5957, %v6365
  %v6367 = vpop.f32.mrf.mxu0
  %v6368 = vadd.f32 %v5959, %v6367
  %6369 = vmatmul.bf16.gmra.mxu0 %v5284
  %v6370 = vpop.f32.mrf.mxu0
  %v6371 = vadd.f32 %v5962, %v6370
  %v6372 = vpop.f32.mrf.mxu0
  %v6373 = vadd.f32 %v5964, %v6372
  %6374 = vmatmul.bf16.gmra.mxu0 %v5287
  %v6375 = vpop.f32.mrf.mxu0
  %v6376 = vadd.f32 %v5967, %v6375
  %v6377 = vpop.f32.mrf.mxu0
  %v6378 = vadd.f32 %v5969, %v6377
  %6379 = vmatmul.bf16.gmra.mxu0 %v5290
  %v6380 = vpop.f32.mrf.mxu0
  %v6381 = vadd.f32 %v5972, %v6380
  %v6382 = vpop.f32.mrf.mxu0
  %v6383 = vadd.f32 %v5974, %v6382
  %6384 = vmatmul.bf16.gmra.mxu0 %v5293
  %v6385 = vpop.f32.mrf.mxu0
  %v6386 = vadd.f32 %v5977, %v6385
  %v6387 = vpop.f32.mrf.mxu0
  %v6388 = vadd.f32 %v5979, %v6387
  %6389 = vmatmul.bf16.gmra.mxu0 %v5296
  %v6390 = vpop.f32.mrf.mxu0
  %v6391 = vadd.f32 %v5982, %v6390
  %v6392 = vpop.f32.mrf.mxu0
  %v6393 = vadd.f32 %v5984, %v6392
  %6394 = vmatmul.bf16.gmra.mxu0 %v5299
  %v6395 = vpop.f32.mrf.mxu0
  %v6396 = vadd.f32 %v5987, %v6395
  %v6397 = vpop.f32.mrf.mxu0
  %v6398 = vadd.f32 %v5989, %v6397
  %6399 = vmatmul.bf16.gmra.mxu0 %v5302
  %v6400 = vpop.f32.mrf.mxu0
  %v6401 = vadd.f32 %v5992, %v6400
  %v6402 = vpop.f32.mrf.mxu0
  %v6403 = vadd.f32 %v5994, %v6402
  %6404 = vmatmul.bf16.gmra.mxu0 %v5305
  %v6405 = vpop.f32.mrf.mxu0
  %v6406 = vadd.f32 %v5997, %v6405
  %v6407 = vpop.f32.mrf.mxu0
  %v6408 = vadd.f32 %v5999, %v6407
  %6409 = vmatmul.bf16.gmra.mxu0 %v5308
  %v6410 = vpop.f32.mrf.mxu0
  %v6411 = vadd.f32 %v6002, %v6410
  %v6412 = vpop.f32.mrf.mxu0
  %v6413 = vadd.f32 %v6004, %v6412
  %6414 = vmatmul.bf16.gmra.mxu0 %v5311
  %v6415 = vpop.f32.mrf.mxu0
  %v6416 = vadd.f32 %v6007, %v6415
  %v6417 = vpop.f32.mrf.mxu0
  %v6418 = vadd.f32 %v6009, %v6417
  %6419 = vmatmul.bf16.gmra.mxu0 %v5314
  %v6420 = vpop.f32.mrf.mxu0
  %v6421 = vadd.f32 %v6012, %v6420
  %v6422 = vpop.f32.mrf.mxu0
  %v6423 = vadd.f32 %v6014, %v6422
  %6424 = vmatmul.bf16.gmra.mxu0 %v5317
  %v6425 = vpop.f32.mrf.mxu0
  %v6426 = vadd.f32 %v6017, %v6425
  %v6427 = vpop.f32.mrf.mxu0
  %v6428 = vadd.f32 %v6019, %v6427
  %6429 = vmatmul.bf16.gmra.mxu0 %v5320
  %v6430 = vpop.f32.mrf.mxu0
  %v6431 = vadd.f32 %v6022, %v6430
  %v6432 = vpop.f32.mrf.mxu0
  %v6433 = vadd.f32 %v6024, %v6432
  %6434 = vmatmul.bf16.gmra.mxu0 %v5323
  %v6435 = vpop.f32.mrf.mxu0
  %v6436 = vadd.f32 %v6027, %v6435
  %v6437 = vpop.f32.mrf.mxu0
  %v6438 = vadd.f32 %v6029, %v6437
  %6439 = vmatmul.bf16.gmra.mxu0 %v5326
  %v6440 = vpop.f32.mrf.mxu0
  %v6441 = vadd.f32 %v6032, %v6440
  %v6442 = vpop.f32.mrf.mxu0
  %v6443 = vadd.f32 %v6034, %v6442
  %6444 = vmatmul.bf16.gmra.mxu0 %v5329
  %v6445 = vpop.f32.mrf.mxu0
  %v6446 = vadd.f32 %v6037, %v6445
  %v6447 = vpop.f32.mrf.mxu0
  %v6448 = vadd.f32 %v6039, %v6447
  %6449 = vmatmul.bf16.gmra.mxu0 %v5332
  %v6450 = vpop.f32.mrf.mxu0
  %v6451 = vadd.f32 %v6042, %v6450
  %v6452 = vpop.f32.mrf.mxu0
  %v6453 = vadd.f32 %v6044, %v6452
  %6454 = vmatmul.bf16.gmra.mxu0 %v5335
  %v6455 = vpop.f32.mrf.mxu0
  %v6456 = vadd.f32 %v6047, %v6455
  %v6457 = vpop.f32.mrf.mxu0
  %v6458 = vadd.f32 %v6049, %v6457
  %6459 = vmatmul.bf16.gmra.mxu0 %v5338
  %v6460 = vpop.f32.mrf.mxu0
  %v6461 = vadd.f32 %v6052, %v6460
  %v6462 = vpop.f32.mrf.mxu0
  %v6463 = vadd.f32 %v6054, %v6462
  %6464 = vmatmul.bf16.gmra.mxu0 %v5341
  %v6465 = vpop.f32.mrf.mxu0
  %v6466 = vadd.f32 %v6057, %v6465
  %v6467 = vpop.f32.mrf.mxu0
  %v6468 = vadd.f32 %v6059, %v6467
  %6469 = vmatmul.bf16.gmra.mxu0 %v5344
  %v6470 = vpop.f32.mrf.mxu0
  %v6471 = vadd.f32 %v6062, %v6470
  %v6472 = vpop.f32.mrf.mxu0
  %v6473 = vadd.f32 %v6064, %v6472
  %6474 = vmatmul.bf16.gmra.mxu0 %v5347
  %v6475 = vpop.f32.mrf.mxu0
  %v6476 = vadd.f32 %v6067, %v6475
  %v6477 = vpop.f32.mrf.mxu0
  %v6478 = vadd.f32 %v6069, %v6477
  %6479 = vmatmul.bf16.gmra.mxu0 %v5350
  %v6480 = vpop.f32.mrf.mxu0
  %v6481 = vadd.f32 %v6072, %v6480
  %v6482 = vpop.f32.mrf.mxu0
  %v6483 = vadd.f32 %v6074, %v6482
  %6484 = vmatmul.bf16.gmra.mxu0 %v5353
  %v6485 = vpop.f32.mrf.mxu0
  %v6486 = vadd.f32 %v6077, %v6485
  %v6487 = vpop.f32.mrf.mxu0
  %v6488 = vadd.f32 %v6079, %v6487
  %6489 = vmatmul.bf16.gmra.mxu0 %v5356
  %v6490 = vpop.f32.mrf.mxu0
  %v6491 = vadd.f32 %v6082, %v6490
  %v6492 = vpop.f32.mrf.mxu0
  %v6493 = vadd.f32 %v6084, %v6492
  %6494 = vmatmul.bf16.gmra.mxu0 %v5359
  %v6495 = vpop.f32.mrf.mxu0
  %v6496 = vadd.f32 %v6087, %v6495
  %v6497 = vpop.f32.mrf.mxu0
  %v6498 = vadd.f32 %v6089, %v6497
  %6499 = vmatmul.bf16.gmra.mxu0 %v5362
  %v6500 = vpop.f32.mrf.mxu0
  %v6501 = vadd.f32 %v6092, %v6500
  %v6502 = vpop.f32.mrf.mxu0
  %v6503 = vadd.f32 %v6094, %v6502
  %6504 = vmatmul.bf16.gmra.mxu0 %v5365
  %v6505 = vpop.f32.mrf.mxu0
  %v6506 = vadd.f32 %v6097, %v6505
  %v6507 = vpop.f32.mrf.mxu0
  %v6508 = vadd.f32 %v6099, %v6507
  %6509 = vmatmul.bf16.gmra.mxu0 %v5368
  %v6510 = vpop.f32.mrf.mxu0
  %v6511 = vadd.f32 %v6102, %v6510
  %v6512 = vpop.f32.mrf.mxu0
  %v6513 = vadd.f32 %v6104, %v6512
  %6514 = vmatmul.bf16.gmra.mxu0 %v5371
  %v6515 = vpop.f32.mrf.mxu0
  %v6516 = vadd.f32 %v6107, %v6515
  %v6517 = vpop.f32.mrf.mxu0
  %v6518 = vadd.f32 %v6109, %v6517
  %6519 = vmatmul.bf16.gmra.mxu0 %v5374
  %v6520 = vpop.f32.mrf.mxu0
  %v6521 = vadd.f32 %v6112, %v6520
  %v6522 = vpop.f32.mrf.mxu0
  %v6523 = vadd.f32 %v6114, %v6522
  %6524 = vmatmul.bf16.gmra.mxu0 %v5377
  %v6525 = vpop.f32.mrf.mxu0
  %v6526 = vadd.f32 %v6117, %v6525
  %v6527 = vpop.f32.mrf.mxu0
  %v6528 = vadd.f32 %v6119, %v6527
  %6529 = vmatmul.bf16.gmra.mxu0 %v5380
  %v6530 = vpop.f32.mrf.mxu0
  %v6531 = vadd.f32 %v6122, %v6530
  %v6532 = vpop.f32.mrf.mxu0
  %v6533 = vadd.f32 %v6124, %v6532
  %6534 = vmatmul.bf16.gmra.mxu0 %v5383
  %v6535 = vpop.f32.mrf.mxu0
  %v6536 = vadd.f32 %v6127, %v6535
  %v6537 = vpop.f32.mrf.mxu0
  %v6538 = vadd.f32 %v6129, %v6537
  %6539 = vmatmul.bf16.gmra.mxu0 %v5386
  %v6540 = vpop.f32.mrf.mxu0
  %v6541 = vadd.f32 %v6132, %v6540
  %v6542 = vpop.f32.mrf.mxu0
  %v6543 = vadd.f32 %v6134, %v6542
  %6544 = vmatmul.bf16.gmra.mxu0 %v5389
  %v6545 = vpop.f32.mrf.mxu0
  %v6546 = vadd.f32 %v6137, %v6545
  %v6547 = vpop.f32.mrf.mxu0
  %v6548 = vadd.f32 %v6139, %v6547
  %6549 = vmatmul.bf16.gmra.mxu0 %v5392
  %v6550 = vpop.f32.mrf.mxu0
  %v6551 = vadd.f32 %v6142, %v6550
  %v6552 = vpop.f32.mrf.mxu0
  %v6553 = vadd.f32 %v6144, %v6552
  %6554 = vmatmul.bf16.gmra.mxu0 %v5395
  %v6555 = vpop.f32.mrf.mxu0
  %v6556 = vadd.f32 %v6147, %v6555
  %v6557 = vpop.f32.mrf.mxu0
  %v6558 = vadd.f32 %v6149, %v6557
  %6559 = vmatmul.bf16.gmra.mxu0 %v5398
  %v6560 = vpop.f32.mrf.mxu0
  %v6561 = vadd.f32 %v6152, %v6560
  %v6562 = vpop.f32.mrf.mxu0
  %v6563 = vadd.f32 %v6154, %v6562
  %6564 = vmatmul.bf16.gmra.mxu0 %v5401
  %v6565 = vpop.f32.mrf.mxu0
  %v6566 = vadd.f32 %v6157, %v6565
  %v6567 = vpop.f32.mrf.mxu0
  %v6568 = vadd.f32 %v6159, %v6567
  %6569 = vmatmul.bf16.gmra.mxu0 %v5404
  %v6570 = vpop.f32.mrf.mxu0
  %v6571 = vadd.f32 %v6162, %v6570
  %v6572 = vpop.f32.mrf.mxu0
  %v6573 = vadd.f32 %v6164, %v6572
  %6574 = vmatmul.bf16.gmra.mxu0 %v5407
  %v6575 = vpop.f32.mrf.mxu0
  %v6576 = vadd.f32 %v6167, %v6575
  %v6577 = vpop.f32.mrf.mxu0
  %v6578 = vadd.f32 %v6169, %v6577
  %6579 = vmatmul.bf16.gmra.mxu0 %v5410
  %v6580 = vpop.f32.mrf.mxu0
  %v6581 = vadd.f32 %v6172, %v6580
  %v6582 = vpop.f32.mrf.mxu0
  %v6583 = vadd.f32 %v6174, %v6582
  %6584 = vmatmul.bf16.gmra.mxu0 %v5413
  %v6585 = vpop.f32.mrf.mxu0
  %v6586 = vadd.f32 %v6177, %v6585
  %v6587 = vpop.f32.mrf.mxu0
  %v6588 = vadd.f32 %v6179, %v6587
  %6589 = vmatmul.bf16.gmra.mxu0 %v5416
  %v6590 = vpop.f32.mrf.mxu0
  %v6591 = vadd.f32 %v6182, %v6590
  %v6592 = vpop.f32.mrf.mxu0
  %v6593 = vadd.f32 %v6184, %v6592
  %6594 = vmatmul.bf16.gmra.mxu0 %v5419
  %v6595 = vpop.f32.mrf.mxu0
  %v6596 = vadd.f32 %v6187, %v6595
  %v6597 = vpop.f32.mrf.mxu0
  %v6598 = vadd.f32 %v6189, %v6597
  %6599 = vmatmul.bf16.gmra.mxu0 %v5422
  %v6600 = vpop.f32.mrf.mxu0
  %v6601 = vadd.f32 %v6192, %v6600
  %v6602 = vpop.f32.mrf.mxu0
  %v6603 = vadd.f32 %v6194, %v6602
  %6604 = vmatmul.bf16.gmra.mxu0 %v5425
  %v6605 = vpop.f32.mrf.mxu0
  %v6606 = vadd.f32 %v6197, %v6605
  %v6607 = vpop.f32.mrf.mxu0
  %v6608 = vadd.f32 %v6199, %v6607
  %6609 = vmatmul.bf16.gmra.mxu0 %v5428
  %v6610 = vpop.f32.mrf.mxu0
  %v6611 = vadd.f32 %v6202, %v6610
  %v6612 = vpop.f32.mrf.mxu0
  %v6613 = vadd.f32 %v6204, %v6612
  %6614 = vmatmul.bf16.gmra.mxu0 %v5431
  %v6615 = vpop.f32.mrf.mxu0
  %v6616 = vadd.f32 %v6207, %v6615
  %v6617 = vpop.f32.mrf.mxu0
  %v6618 = vadd.f32 %v6209, %v6617
  %6619 = vmatmul.bf16.gmra.mxu0 %v5434
  %v6620 = vpop.f32.mrf.mxu0
  %v6621 = vadd.f32 %v6212, %v6620
  %v6622 = vpop.f32.mrf.mxu0
  %v6623 = vadd.f32 %v6214, %v6622
  %6624 = vmatmul.bf16.gmra.mxu0 %v5437
  %v6625 = vpop.f32.mrf.mxu0
  %v6626 = vadd.f32 %v6217, %v6625
  %v6627 = vpop.f32.mrf.mxu0
  %v6628 = vadd.f32 %v6219, %v6627
  %6629 = vmatmul.bf16.gmra.mxu0 %v5440
  %v6630 = vpop.f32.mrf.mxu0
  %v6631 = vadd.f32 %v6222, %v6630
  %v6632 = vpop.f32.mrf.mxu0
  %v6633 = vadd.f32 %v6224, %v6632
  %6634 = vmatmul.bf16.gmra.mxu0 %v5443
  %v6635 = vpop.f32.mrf.mxu0
  %v6636 = vadd.f32 %v6227, %v6635
  %v6637 = vpop.f32.mrf.mxu0
  %v6638 = vadd.f32 %v6229, %v6637
  %6639 = vmatmul.bf16.gmra.mxu0 %v5446
  %v6640 = vpop.f32.mrf.mxu0
  %v6641 = vadd.f32 %v6232, %v6640
  %v6642 = vpop.f32.mrf.mxu0
  %v6643 = vadd.f32 %v6234, %v6642
  %6644 = vmatmul.bf16.gmra.mxu0 %v5449
  %v6645 = vpop.f32.mrf.mxu0
  %v6646 = vadd.f32 %v6237, %v6645
  %v6647 = vpop.f32.mrf.mxu0
  %v6648 = vadd.f32 %v6239, %v6647
  %6649 = vmatmul.bf16.gmra.mxu0 %v5452
  %v6650 = vpop.f32.mrf.mxu0
  %v6651 = vadd.f32 %v6242, %v6650
  %v6652 = vpop.f32.mrf.mxu0
  %v6653 = vadd.f32 %v6244, %v6652
  %6654 = vmatmul.bf16.gmra.mxu0 %v5455
  %v6655 = vpop.f32.mrf.mxu0
  %v6656 = vadd.f32 %v6247, %v6655
  %v6657 = vpop.f32.mrf.mxu0
  %v6658 = vadd.f32 %v6249, %v6657
  %6659 = vmatmul.bf16.gmra.mxu0 %v5458
  %v6660 = vpop.f32.mrf.mxu0
  %v6661 = vadd.f32 %v6252, %v6660
  %v6662 = vpop.f32.mrf.mxu0
  %v6663 = vadd.f32 %v6254, %v6662
  %6664 = vmatmul.bf16.gmra.mxu0 %v5461
  %v6665 = vpop.f32.mrf.mxu0
  %v6666 = vadd.f32 %v6257, %v6665
  %v6667 = vpop.f32.mrf.mxu0
  %v6668 = vadd.f32 %v6259, %v6667
  %6669 = vmatmul.bf16.gmra.mxu0 %v5464
  %v6670 = vpop.f32.mrf.mxu0
  %v6671 = vadd.f32 %v6262, %v6670
  %v6672 = vpop.f32.mrf.mxu0
  %v6673 = vadd.f32 %v6264, %v6672
  %6674 = vmatmul.bf16.gmra.mxu0 %v5467
  %v6675 = vpop.f32.mrf.mxu0
  %v6676 = vadd.f32 %v6267, %v6675
  %v6677 = vpop.f32.mrf.mxu0
  %v6678 = vadd.f32 %v6269, %v6677
  %6679 = vmatmul.bf16.gmra.mxu0 %v5470
  %v6680 = vpop.f32.mrf.mxu0
  %v6681 = vadd.f32 %v6272, %v6680
  %v6682 = vpop.f32.mrf.mxu0
  %v6683 = vadd.f32 %v6274, %v6682
  %6684 = vmatmul.bf16.gmra.mxu0 %v5473
  %v6685 = vpop.f32.mrf.mxu0
  %v6686 = vadd.f32 %v6277, %v6685
  %v6687 = vpop.f32.mrf.mxu0
  %v6688 = vadd.f32 %v6279, %v6687
  %6689 = vmatmul.bf16.gmra.mxu0 %v5476
  %v6690 = vpop.f32.mrf.mxu0
  %v6691 = vadd.f32 %v6282, %v6690
  %v6692 = vpop.f32.mrf.mxu0
  %v6693 = vadd.f32 %v6284, %v6692
  %6694 = vmatmul.bf16.gmra.mxu0 %v5479
  %v6695 = vpop.f32.mrf.mxu0
  %v6696 = vadd.f32 %v6287, %v6695
  %v6697 = vpop.f32.mrf.mxu0
  %v6698 = vadd.f32 %v6289, %v6697
  %6699 = vdwg.mxu0
  %6700 = vmatpush.bf16.msra.mxu0 0
  %6701 = vmatpush.bf16.msra.mxu0 0
  %6702 = vmatpush.bf16.msra.mxu0 0
  %6703 = vmatpush.bf16.msra.mxu0 0
  %6704 = vmatpush.bf16.msra.mxu0 %v4440
  %6705 = vmatpush.bf16.msra.mxu0 %v4439
  %6706 = vmatpush.bf16.msra.mxu0 %v4438
  %6707 = vmatpush.bf16.msra.mxu0 %v4437
  %6708 = vmatmul.bf16.gmra.mxu0 %v5643
  %v6709 = vpop.f32.mrf.mxu0
  %v6710 = vadd.f32 %v6301, %v6709
  %v6711 = vpop.f32.mrf.mxu0
  %v6712 = vadd.f32 %v6303, %v6711
  %6713 = vmatmul.bf16.gmra.mxu0 %v5646
  %v6714 = vpop.f32.mrf.mxu0
  %v6715 = vadd.f32 %v6306, %v6714
  %v6716 = vpop.f32.mrf.mxu0
  %v6717 = vadd.f32 %v6308, %v6716
  %6718 = vmatmul.bf16.gmra.mxu0 %v5649
  %v6719 = vpop.f32.mrf.mxu0
  %v6720 = vadd.f32 %v6311, %v6719
  %v6721 = vpop.f32.mrf.mxu0
  %v6722 = vadd.f32 %v6313, %v6721
  %6723 = vmatmul.bf16.gmra.mxu0 %v5652
  %v6724 = vpop.f32.mrf.mxu0
  %v6725 = vadd.f32 %v6316, %v6724
  %v6726 = vpop.f32.mrf.mxu0
  %v6727 = vadd.f32 %v6318, %v6726
  %6728 = vmatmul.bf16.gmra.mxu0 %v5655
  %v6729 = vpop.f32.mrf.mxu0
  %v6730 = vadd.f32 %v6321, %v6729
  %v6731 = vpop.f32.mrf.mxu0
  %v6732 = vadd.f32 %v6323, %v6731
  %6733 = vmatmul.bf16.gmra.mxu0 %v5658
  %v6734 = vpop.f32.mrf.mxu0
  %v6735 = vadd.f32 %v6326, %v6734
  %v6736 = vpop.f32.mrf.mxu0
  %v6737 = vadd.f32 %v6328, %v6736
  %6738 = vmatmul.bf16.gmra.mxu0 %v5661
  %v6739 = vpop.f32.mrf.mxu0
  %v6740 = vadd.f32 %v6331, %v6739
  %v6741 = vpop.f32.mrf.mxu0
  %v6742 = vadd.f32 %v6333, %v6741
  %6743 = vmatmul.bf16.gmra.mxu0 %v5664
  %v6744 = vpop.f32.mrf.mxu0
  %v6745 = vadd.f32 %v6336, %v6744
  %v6746 = vpop.f32.mrf.mxu0
  %v6747 = vadd.f32 %v6338, %v6746
  %6748 = vmatmul.bf16.gmra.mxu0 %v5667
  %v6749 = vpop.f32.mrf.mxu0
  %v6750 = vadd.f32 %v6341, %v6749
  %v6751 = vpop.f32.mrf.mxu0
  %v6752 = vadd.f32 %v6343, %v6751
  %6753 = vmatmul.bf16.gmra.mxu0 %v5670
  %v6754 = vpop.f32.mrf.mxu0
  %v6755 = vadd.f32 %v6346, %v6754
  %v6756 = vpop.f32.mrf.mxu0
  %v6757 = vadd.f32 %v6348, %v6756
  %6758 = vmatmul.bf16.gmra.mxu0 %v5673
  %v6759 = vpop.f32.mrf.mxu0
  %v6760 = vadd.f32 %v6351, %v6759
  %v6761 = vpop.f32.mrf.mxu0
  %v6762 = vadd.f32 %v6353, %v6761
  %6763 = vmatmul.bf16.gmra.mxu0 %v5676
  %v6764 = vpop.f32.mrf.mxu0
  %v6765 = vadd.f32 %v6356, %v6764
  %v6766 = vpop.f32.mrf.mxu0
  %v6767 = vadd.f32 %v6358, %v6766
  %6768 = vmatmul.bf16.gmra.mxu0 %v5679
  %v6769 = vpop.f32.mrf.mxu0
  %v6770 = vadd.f32 %v6361, %v6769
  %v6771 = vpop.f32.mrf.mxu0
  %v6772 = vadd.f32 %v6363, %v6771
  %6773 = vmatmul.bf16.gmra.mxu0 %v5682
  %v6774 = vpop.f32.mrf.mxu0
  %v6775 = vadd.f32 %v6366, %v6774
  %v6776 = vpop.f32.mrf.mxu0
  %v6777 = vadd.f32 %v6368, %v6776
  %6778 = vmatmul.bf16.gmra.mxu0 %v5685
  %v6779 = vpop.f32.mrf.mxu0
  %v6780 = vadd.f32 %v6371, %v6779
  %v6781 = vpop.f32.mrf.mxu0
  %v6782 = vadd.f32 %v6373, %v6781
  %6783 = vmatmul.bf16.gmra.mxu0 %v5688
  %v6784 = vpop.f32.mrf.mxu0
  %v6785 = vadd.f32 %v6376, %v6784
  %v6786 = vpop.f32.mrf.mxu0
  %v6787 = vadd.f32 %v6378, %v6786
  %6788 = vmatmul.bf16.gmra.mxu0 %v5691
  %v6789 = vpop.f32.mrf.mxu0
  %v6790 = vadd.f32 %v6381, %v6789
  %v6791 = vpop.f32.mrf.mxu0
  %v6792 = vadd.f32 %v6383, %v6791
  %6793 = vmatmul.bf16.gmra.mxu0 %v5694
  %v6794 = vpop.f32.mrf.mxu0
  %v6795 = vadd.f32 %v6386, %v6794
  %v6796 = vpop.f32.mrf.mxu0
  %v6797 = vadd.f32 %v6388, %v6796
  %6798 = vmatmul.bf16.gmra.mxu0 %v5697
  %v6799 = vpop.f32.mrf.mxu0
  %v6800 = vadd.f32 %v6391, %v6799
  %v6801 = vpop.f32.mrf.mxu0
  %v6802 = vadd.f32 %v6393, %v6801
  %6803 = vmatmul.bf16.gmra.mxu0 %v5700
  %v6804 = vpop.f32.mrf.mxu0
  %v6805 = vadd.f32 %v6396, %v6804
  %v6806 = vpop.f32.mrf.mxu0
  %v6807 = vadd.f32 %v6398, %v6806
  %6808 = vmatmul.bf16.gmra.mxu0 %v5703
  %v6809 = vpop.f32.mrf.mxu0
  %v6810 = vadd.f32 %v6401, %v6809
  %v6811 = vpop.f32.mrf.mxu0
  %v6812 = vadd.f32 %v6403, %v6811
  %6813 = vmatmul.bf16.gmra.mxu0 %v5706
  %v6814 = vpop.f32.mrf.mxu0
  %v6815 = vadd.f32 %v6406, %v6814
  %v6816 = vpop.f32.mrf.mxu0
  %v6817 = vadd.f32 %v6408, %v6816
  %6818 = vmatmul.bf16.gmra.mxu0 %v5709
  %v6819 = vpop.f32.mrf.mxu0
  %v6820 = vadd.f32 %v6411, %v6819
  %v6821 = vpop.f32.mrf.mxu0
  %v6822 = vadd.f32 %v6413, %v6821
  %6823 = vmatmul.bf16.gmra.mxu0 %v5712
  %v6824 = vpop.f32.mrf.mxu0
  %v6825 = vadd.f32 %v6416, %v6824
  %v6826 = vpop.f32.mrf.mxu0
  %v6827 = vadd.f32 %v6418, %v6826
  %6828 = vmatmul.bf16.gmra.mxu0 %v5715
  %v6829 = vpop.f32.mrf.mxu0
  %v6830 = vadd.f32 %v6421, %v6829
  %v6831 = vpop.f32.mrf.mxu0
  %v6832 = vadd.f32 %v6423, %v6831
  %6833 = vmatmul.bf16.gmra.mxu0 %v5718
  %v6834 = vpop.f32.mrf.mxu0
  %v6835 = vadd.f32 %v6426, %v6834
  %v6836 = vpop.f32.mrf.mxu0
  %v6837 = vadd.f32 %v6428, %v6836
  %6838 = vmatmul.bf16.gmra.mxu0 %v5721
  %v6839 = vpop.f32.mrf.mxu0
  %v6840 = vadd.f32 %v6431, %v6839
  %v6841 = vpop.f32.mrf.mxu0
  %v6842 = vadd.f32 %v6433, %v6841
  %6843 = vmatmul.bf16.gmra.mxu0 %v5724
  %v6844 = vpop.f32.mrf.mxu0
  %v6845 = vadd.f32 %v6436, %v6844
  %v6846 = vpop.f32.mrf.mxu0
  %v6847 = vadd.f32 %v6438, %v6846
  %6848 = vmatmul.bf16.gmra.mxu0 %v5727
  %v6849 = vpop.f32.mrf.mxu0
  %v6850 = vadd.f32 %v6441, %v6849
  %v6851 = vpop.f32.mrf.mxu0
  %v6852 = vadd.f32 %v6443, %v6851
  %6853 = vmatmul.bf16.gmra.mxu0 %v5730
  %v6854 = vpop.f32.mrf.mxu0
  %v6855 = vadd.f32 %v6446, %v6854
  %v6856 = vpop.f32.mrf.mxu0
  %v6857 = vadd.f32 %v6448, %v6856
  %6858 = vmatmul.bf16.gmra.mxu0 %v5733
  %v6859 = vpop.f32.mrf.mxu0
  %v6860 = vadd.f32 %v6451, %v6859
  %v6861 = vpop.f32.mrf.mxu0
  %v6862 = vadd.f32 %v6453, %v6861
  %6863 = vmatmul.bf16.gmra.mxu0 %v5736
  %v6864 = vpop.f32.mrf.mxu0
  %v6865 = vadd.f32 %v6456, %v6864
  %v6866 = vpop.f32.mrf.mxu0
  %v6867 = vadd.f32 %v6458, %v6866
  %6868 = vmatmul.bf16.gmra.mxu0 %v5739
  %v6869 = vpop.f32.mrf.mxu0
  %v6870 = vadd.f32 %v6461, %v6869
  %v6871 = vpop.f32.mrf.mxu0
  %v6872 = vadd.f32 %v6463, %v6871
  %6873 = vmatmul.bf16.gmra.mxu0 %v5742
  %v6874 = vpop.f32.mrf.mxu0
  %v6875 = vadd.f32 %v6466, %v6874
  %v6876 = vpop.f32.mrf.mxu0
  %v6877 = vadd.f32 %v6468, %v6876
  %6878 = vmatmul.bf16.gmra.mxu0 %v5745
  %v6879 = vpop.f32.mrf.mxu0
  %v6880 = vadd.f32 %v6471, %v6879
  %v6881 = vpop.f32.mrf.mxu0
  %v6882 = vadd.f32 %v6473, %v6881
  %6883 = vmatmul.bf16.gmra.mxu0 %v5748
  %v6884 = vpop.f32.mrf.mxu0
  %v6885 = vadd.f32 %v6476, %v6884
  %v6886 = vpop.f32.mrf.mxu0
  %v6887 = vadd.f32 %v6478, %v6886
  %6888 = vmatmul.bf16.gmra.mxu0 %v5751
  %v6889 = vpop.f32.mrf.mxu0
  %v6890 = vadd.f32 %v6481, %v6889
  %v6891 = vpop.f32.mrf.mxu0
  %v6892 = vadd.f32 %v6483, %v6891
  %6893 = vmatmul.bf16.gmra.mxu0 %v5754
  %v6894 = vpop.f32.mrf.mxu0
  %v6895 = vadd.f32 %v6486, %v6894
  %v6896 = vpop.f32.mrf.mxu0
  %v6897 = vadd.f32 %v6488, %v6896
  %6898 = vmatmul.bf16.gmra.mxu0 %v5757
  %v6899 = vpop.f32.mrf.mxu0
  %v6900 = vadd.f32 %v6491, %v6899
  %v6901 = vpop.f32.mrf.mxu0
  %v6902 = vadd.f32 %v6493, %v6901
  %6903 = vmatmul.bf16.gmra.mxu0 %v5760
  %v6904 = vpop.f32.mrf.mxu0
  %v6905 = vadd.f32 %v6496, %v6904
  %v6906 = vpop.f32.mrf.mxu0
  %v6907 = vadd.f32 %v6498, %v6906
  %6908 = vmatmul.bf16.gmra.mxu0 %v5763
  %v6909 = vpop.f32.mrf.mxu0
  %v6910 = vadd.f32 %v6501, %v6909
  %v6911 = vpop.f32.mrf.mxu0
  %v6912 = vadd.f32 %v6503, %v6911
  %6913 = vmatmul.bf16.gmra.mxu0 %v5766
  %v6914 = vpop.f32.mrf.mxu0
  %v6915 = vadd.f32 %v6506, %v6914
  %v6916 = vpop.f32.mrf.mxu0
  %v6917 = vadd.f32 %v6508, %v6916
  %6918 = vmatmul.bf16.gmra.mxu0 %v5769
  %v6919 = vpop.f32.mrf.mxu0
  %v6920 = vadd.f32 %v6511, %v6919
  %v6921 = vpop.f32.mrf.mxu0
  %v6922 = vadd.f32 %v6513, %v6921
  %6923 = vmatmul.bf16.gmra.mxu0 %v5772
  %v6924 = vpop.f32.mrf.mxu0
  %v6925 = vadd.f32 %v6516, %v6924
  %v6926 = vpop.f32.mrf.mxu0
  %v6927 = vadd.f32 %v6518, %v6926
  %6928 = vmatmul.bf16.gmra.mxu0 %v5775
  %v6929 = vpop.f32.mrf.mxu0
  %v6930 = vadd.f32 %v6521, %v6929
  %v6931 = vpop.f32.mrf.mxu0
  %v6932 = vadd.f32 %v6523, %v6931
  %6933 = vmatmul.bf16.gmra.mxu0 %v5778
  %v6934 = vpop.f32.mrf.mxu0
  %v6935 = vadd.f32 %v6526, %v6934
  %v6936 = vpop.f32.mrf.mxu0
  %v6937 = vadd.f32 %v6528, %v6936
  %6938 = vmatmul.bf16.gmra.mxu0 %v5781
  %v6939 = vpop.f32.mrf.mxu0
  %v6940 = vadd.f32 %v6531, %v6939
  %v6941 = vpop.f32.mrf.mxu0
  %v6942 = vadd.f32 %v6533, %v6941
  %6943 = vmatmul.bf16.gmra.mxu0 %v5784
  %v6944 = vpop.f32.mrf.mxu0
  %v6945 = vadd.f32 %v6536, %v6944
  %v6946 = vpop.f32.mrf.mxu0
  %v6947 = vadd.f32 %v6538, %v6946
  %6948 = vmatmul.bf16.gmra.mxu0 %v5787
  %v6949 = vpop.f32.mrf.mxu0
  %v6950 = vadd.f32 %v6541, %v6949
  %v6951 = vpop.f32.mrf.mxu0
  %v6952 = vadd.f32 %v6543, %v6951
  %6953 = vmatmul.bf16.gmra.mxu0 %v5790
  %v6954 = vpop.f32.mrf.mxu0
  %v6955 = vadd.f32 %v6546, %v6954
  %v6956 = vpop.f32.mrf.mxu0
  %v6957 = vadd.f32 %v6548, %v6956
  %6958 = vmatmul.bf16.gmra.mxu0 %v5793
  %v6959 = vpop.f32.mrf.mxu0
  %v6960 = vadd.f32 %v6551, %v6959
  %v6961 = vpop.f32.mrf.mxu0
  %v6962 = vadd.f32 %v6553, %v6961
  %6963 = vmatmul.bf16.gmra.mxu0 %v5796
  %v6964 = vpop.f32.mrf.mxu0
  %v6965 = vadd.f32 %v6556, %v6964
  %v6966 = vpop.f32.mrf.mxu0
  %v6967 = vadd.f32 %v6558, %v6966
  %6968 = vmatmul.bf16.gmra.mxu0 %v5799
  %v6969 = vpop.f32.mrf.mxu0
  %v6970 = vadd.f32 %v6561, %v6969
  %v6971 = vpop.f32.mrf.mxu0
  %v6972 = vadd.f32 %v6563, %v6971
  %6973 = vmatmul.bf16.gmra.mxu0 %v5802
  %v6974 = vpop.f32.mrf.mxu0
  %v6975 = vadd.f32 %v6566, %v6974
  %v6976 = vpop.f32.mrf.mxu0
  %v6977 = vadd.f32 %v6568, %v6976
  %6978 = vmatmul.bf16.gmra.mxu0 %v5805
  %v6979 = vpop.f32.mrf.mxu0
  %v6980 = vadd.f32 %v6571, %v6979
  %v6981 = vpop.f32.mrf.mxu0
  %v6982 = vadd.f32 %v6573, %v6981
  %6983 = vmatmul.bf16.gmra.mxu0 %v5808
  %v6984 = vpop.f32.mrf.mxu0
  %v6985 = vadd.f32 %v6576, %v6984
  %v6986 = vpop.f32.mrf.mxu0
  %v6987 = vadd.f32 %v6578, %v6986
  %6988 = vmatmul.bf16.gmra.mxu0 %v5811
  %v6989 = vpop.f32.mrf.mxu0
  %v6990 = vadd.f32 %v6581, %v6989
  %v6991 = vpop.f32.mrf.mxu0
  %v6992 = vadd.f32 %v6583, %v6991
  %6993 = vmatmul.bf16.gmra.mxu0 %v5814
  %v6994 = vpop.f32.mrf.mxu0
  %v6995 = vadd.f32 %v6586, %v6994
  %v6996 = vpop.f32.mrf.mxu0
  %v6997 = vadd.f32 %v6588, %v6996
  %6998 = vmatmul.bf16.gmra.mxu0 %v5817
  %v6999 = vpop.f32.mrf.mxu0
  %v7000 = vadd.f32 %v6591, %v6999
  %v7001 = vpop.f32.mrf.mxu0
  %v7002 = vadd.f32 %v6593, %v7001
  %7003 = vmatmul.bf16.gmra.mxu0 %v5820
  %v7004 = vpop.f32.mrf.mxu0
  %v7005 = vadd.f32 %v6596, %v7004
  %v7006 = vpop.f32.mrf.mxu0
  %v7007 = vadd.f32 %v6598, %v7006
  %7008 = vmatmul.bf16.gmra.mxu0 %v5823
  %v7009 = vpop.f32.mrf.mxu0
  %v7010 = vadd.f32 %v6601, %v7009
  %v7011 = vpop.f32.mrf.mxu0
  %v7012 = vadd.f32 %v6603, %v7011
  %7013 = vmatmul.bf16.gmra.mxu0 %v5826
  %v7014 = vpop.f32.mrf.mxu0
  %v7015 = vadd.f32 %v6606, %v7014
  %v7016 = vpop.f32.mrf.mxu0
  %v7017 = vadd.f32 %v6608, %v7016
  %7018 = vmatmul.bf16.gmra.mxu0 %v5829
  %v7019 = vpop.f32.mrf.mxu0
  %v7020 = vadd.f32 %v6611, %v7019
  %v7021 = vpop.f32.mrf.mxu0
  %v7022 = vadd.f32 %v6613, %v7021
  %7023 = vmatmul.bf16.gmra.mxu0 %v5832
  %v7024 = vpop.f32.mrf.mxu0
  %v7025 = vadd.f32 %v6616, %v7024
  %v7026 = vpop.f32.mrf.mxu0
  %v7027 = vadd.f32 %v6618, %v7026
  %7028 = vmatmul.bf16.gmra.mxu0 %v5835
  %v7029 = vpop.f32.mrf.mxu0
  %v7030 = vadd.f32 %v6621, %v7029
  %v7031 = vpop.f32.mrf.mxu0
  %v7032 = vadd.f32 %v6623, %v7031
  %7033 = vmatmul.bf16.gmra.mxu0 %v5838
  %v7034 = vpop.f32.mrf.mxu0
  %v7035 = vadd.f32 %v6626, %v7034
  %v7036 = vpop.f32.mrf.mxu0
  %v7037 = vadd.f32 %v6628, %v7036
  %7038 = vmatmul.bf16.gmra.mxu0 %v5841
  %v7039 = vpop.f32.mrf.mxu0
  %v7040 = vadd.f32 %v6631, %v7039
  %v7041 = vpop.f32.mrf.mxu0
  %v7042 = vadd.f32 %v6633, %v7041
  %7043 = vmatmul.bf16.gmra.mxu0 %v5844
  %v7044 = vpop.f32.mrf.mxu0
  %v7045 = vadd.f32 %v6636, %v7044
  %v7046 = vpop.f32.mrf.mxu0
  %v7047 = vadd.f32 %v6638, %v7046
  %7048 = vmatmul.bf16.gmra.mxu0 %v5847
  %v7049 = vpop.f32.mrf.mxu0
  %v7050 = vadd.f32 %v6641, %v7049
  %v7051 = vpop.f32.mrf.mxu0
  %v7052 = vadd.f32 %v6643, %v7051
  %7053 = vmatmul.bf16.gmra.mxu0 %v5850
  %v7054 = vpop.f32.mrf.mxu0
  %v7055 = vadd.f32 %v6646, %v7054
  %v7056 = vpop.f32.mrf.mxu0
  %v7057 = vadd.f32 %v6648, %v7056
  %7058 = vmatmul.bf16.gmra.mxu0 %v5853
  %v7059 = vpop.f32.mrf.mxu0
  %v7060 = vadd.f32 %v6651, %v7059
  %v7061 = vpop.f32.mrf.mxu0
  %v7062 = vadd.f32 %v6653, %v7061
  %7063 = vmatmul.bf16.gmra.mxu0 %v5856
  %v7064 = vpop.f32.mrf.mxu0
  %v7065 = vadd.f32 %v6656, %v7064
  %v7066 = vpop.f32.mrf.mxu0
  %v7067 = vadd.f32 %v6658, %v7066
  %7068 = vmatmul.bf16.gmra.mxu0 %v5859
  %v7069 = vpop.f32.mrf.mxu0
  %v7070 = vadd.f32 %v6661, %v7069
  %v7071 = vpop.f32.mrf.mxu0
  %v7072 = vadd.f32 %v6663, %v7071
  %7073 = vmatmul.bf16.gmra.mxu0 %v5862
  %v7074 = vpop.f32.mrf.mxu0
  %v7075 = vadd.f32 %v6666, %v7074
  %v7076 = vpop.f32.mrf.mxu0
  %v7077 = vadd.f32 %v6668, %v7076
  %7078 = vmatmul.bf16.gmra.mxu0 %v5865
  %v7079 = vpop.f32.mrf.mxu0
  %v7080 = vadd.f32 %v6671, %v7079
  %v7081 = vpop.f32.mrf.mxu0
  %v7082 = vadd.f32 %v6673, %v7081
  %7083 = vmatmul.bf16.gmra.mxu0 %v5868
  %v7084 = vpop.f32.mrf.mxu0
  %v7085 = vadd.f32 %v6676, %v7084
  %v7086 = vpop.f32.mrf.mxu0
  %v7087 = vadd.f32 %v6678, %v7086
  %7088 = vmatmul.bf16.gmra.mxu0 %v5871
  %v7089 = vpop.f32.mrf.mxu0
  %v7090 = vadd.f32 %v6681, %v7089
  %v7091 = vpop.f32.mrf.mxu0
  %v7092 = vadd.f32 %v6683, %v7091
  %7093 = vmatmul.bf16.gmra.mxu0 %v5874
  %v7094 = vpop.f32.mrf.mxu0
  %v7095 = vadd.f32 %v6686, %v7094
  %v7096 = vpop.f32.mrf.mxu0
  %v7097 = vadd.f32 %v6688, %v7096
  %7098 = vmatmul.bf16.gmra.mxu0 %v5877
  %v7099 = vpop.f32.mrf.mxu0
  %v7100 = vadd.f32 %v6691, %v7099
  %v7101 = vpop.f32.mrf.mxu0
  %v7102 = vadd.f32 %v6693, %v7101
  %7103 = vmatmul.bf16.gmra.mxu0 %v5880
  %v7104 = vpop.f32.mrf.mxu0
  %v7105 = vadd.f32 %v6696, %v7104
  %v7106 = vpop.f32.mrf.mxu0
  %v7107 = vadd.f32 %v6698, %v7106
  %7108 = vdwg.mxu0
  %vm7109 = vcmask 400384
  %7110 = vst.msk [vmem:[%s5] sm:$0xff] %vm7109, %v6710
  %7111 = vst.msk [vmem:[%s5 + $0x8] sm:$0xff] %vm7109, %v6712
  %7112 = vst.msk [vmem:[%s5 + $0x10] sm:$0xff] %vm7109, %v6715
  %7113 = vst.msk [vmem:[%s5 + $0x18] sm:$0xff] %vm7109, %v6717
  %7114 = vst.msk [vmem:[%s5 + $0x20] sm:$0xff] %vm7109, %v6720
  %7115 = vst.msk [vmem:[%s5 + $0x28] sm:$0xff] %vm7109, %v6722
  %7116 = vst.msk [vmem:[%s5 + $0x30] sm:$0xff] %vm7109, %v6725
  %7117 = vst.msk [vmem:[%s5 + $0x38] sm:$0xff] %vm7109, %v6727
  %7118 = vst.msk [vmem:[%s5 + $0x40] sm:$0xff] %vm7109, %v6730
  %7119 = vst.msk [vmem:[%s5 + $0x48] sm:$0xff] %vm7109, %v6732
  %7120 = vst.msk [vmem:[%s5 + $0x50] sm:$0xff] %vm7109, %v6735
  %7121 = vst.msk [vmem:[%s5 + $0x58] sm:$0xff] %vm7109, %v6737
  %7122 = vst.msk [vmem:[%s5 + $0x60] sm:$0xff] %vm7109, %v6740
  %7123 = vst.msk [vmem:[%s5 + $0x68] sm:$0xff] %vm7109, %v6742
  %7124 = vst.msk [vmem:[%s5 + $0x70] sm:$0xff] %vm7109, %v6745
  %7125 = vst.msk [vmem:[%s5 + $0x78] sm:$0xff] %vm7109, %v6747
  %7126 = vst.msk [vmem:[%s5 + $0x80] sm:$0xff] %vm7109, %v6750
  %7127 = vst.msk [vmem:[%s5 + $0x88] sm:$0xff] %vm7109, %v6752
  %7128 = vst.msk [vmem:[%s5 + $0x90] sm:$0xff] %vm7109, %v6755
  %7129 = vst.msk [vmem:[%s5 + $0x98] sm:$0xff] %vm7109, %v6757
  %7130 = vst.msk [vmem:[%s5 + $0xa0] sm:$0xff] %vm7109, %v6760
  %7131 = vst.msk [vmem:[%s5 + $0xa8] sm:$0xff] %vm7109, %v6762
  %7132 = vst.msk [vmem:[%s5 + $0xb0] sm:$0xff] %vm7109, %v6765
  %7133 = vst.msk [vmem:[%s5 + $0xb8] sm:$0xff] %vm7109, %v6767
  %7134 = vst.msk [vmem:[%s5 + $0xc0] sm:$0xff] %vm7109, %v6770
  %7135 = vst.msk [vmem:[%s5 + $0xc8] sm:$0xff] %vm7109, %v6772
  %7136 = vst.msk [vmem:[%s5 + $0xd0] sm:$0xff] %vm7109, %v6775
  %7137 = vst.msk [vmem:[%s5 + $0xd8] sm:$0xff] %vm7109, %v6777
  %7138 = vst.msk [vmem:[%s5 + $0xe0] sm:$0xff] %vm7109, %v6780
  %7139 = vst.msk [vmem:[%s5 + $0xe8] sm:$0xff] %vm7109, %v6782
  %7140 = vst.msk [vmem:[%s5 + $0xf0] sm:$0xff] %vm7109, %v6785
  %7141 = vst.msk [vmem:[%s5 + $0xf8] sm:$0xff] %vm7109, %v6787
  %7142 = vst.msk [vmem:[%s5 + $0x100] sm:$0xff] %vm7109, %v6790
  %7143 = vst.msk [vmem:[%s5 + $0x108] sm:$0xff] %vm7109, %v6792
  %7144 = vst.msk [vmem:[%s5 + $0x110] sm:$0xff] %vm7109, %v6795
  %7145 = vst.msk [vmem:[%s5 + $0x118] sm:$0xff] %vm7109, %v6797
  %7146 = vst.msk [vmem:[%s5 + $0x120] sm:$0xff] %vm7109, %v6800
  %7147 = vst.msk [vmem:[%s5 + $0x128] sm:$0xff] %vm7109, %v6802
  %7148 = vst.msk [vmem:[%s5 + $0x130] sm:$0xff] %vm7109, %v6805
  %7149 = vst.msk [vmem:[%s5 + $0x138] sm:$0xff] %vm7109, %v6807
  %7150 = vst.msk [vmem:[%s5 + $0x140] sm:$0xff] %vm7109, %v6810
  %7151 = vst.msk [vmem:[%s5 + $0x148] sm:$0xff] %vm7109, %v6812
  %7152 = vst.msk [vmem:[%s5 + $0x150] sm:$0xff] %vm7109, %v6815
  %7153 = vst.msk [vmem:[%s5 + $0x158] sm:$0xff] %vm7109, %v6817
  %7154 = vst.msk [vmem:[%s5 + $0x160] sm:$0xff] %vm7109, %v6820
  %7155 = vst.msk [vmem:[%s5 + $0x168] sm:$0xff] %vm7109, %v6822
  %7156 = vst.msk [vmem:[%s5 + $0x170] sm:$0xff] %vm7109, %v6825
  %7157 = vst.msk [vmem:[%s5 + $0x178] sm:$0xff] %vm7109, %v6827
  %7158 = vst.msk [vmem:[%s5 + $0x180] sm:$0xff] %vm7109, %v6830
  %7159 = vst.msk [vmem:[%s5 + $0x188] sm:$0xff] %vm7109, %v6832
  %7160 = vst.msk [vmem:[%s5 + $0x190] sm:$0xff] %vm7109, %v6835
  %7161 = vst.msk [vmem:[%s5 + $0x198] sm:$0xff] %vm7109, %v6837
  %7162 = vst.msk [vmem:[%s5 + $0x1a0] sm:$0xff] %vm7109, %v6840
  %7163 = vst.msk [vmem:[%s5 + $0x1a8] sm:$0xff] %vm7109, %v6842
  %7164 = vst.msk [vmem:[%s5 + $0x1b0] sm:$0xff] %vm7109, %v6845
  %7165 = vst.msk [vmem:[%s5 + $0x1b8] sm:$0xff] %vm7109, %v6847
  %7166 = vst.msk [vmem:[%s5 + $0x1c0] sm:$0xff] %vm7109, %v6850
  %7167 = vst.msk [vmem:[%s5 + $0x1c8] sm:$0xff] %vm7109, %v6852
  %7168 = vst.msk [vmem:[%s5 + $0x1d0] sm:$0xff] %vm7109, %v6855
  %7169 = vst.msk [vmem:[%s5 + $0x1d8] sm:$0xff] %vm7109, %v6857
  %7170 = vst.msk [vmem:[%s5 + $0x1e0] sm:$0xff] %vm7109, %v6860
  %7171 = vst.msk [vmem:[%s5 + $0x1e8] sm:$0xff] %vm7109, %v6862
  %7172 = vst.msk [vmem:[%s5 + $0x1f0] sm:$0xff] %vm7109, %v6865
  %7173 = vst.msk [vmem:[%s5 + $0x1f8] sm:$0xff] %vm7109, %v6867
  %7174 = vst.msk [vmem:[%s5 + $0x200] sm:$0xff] %vm7109, %v6870
  %7175 = vst.msk [vmem:[%s5 + $0x208] sm:$0xff] %vm7109, %v6872
  %7176 = vst.msk [vmem:[%s5 + $0x210] sm:$0xff] %vm7109, %v6875
  %7177 = vst.msk [vmem:[%s5 + $0x218] sm:$0xff] %vm7109, %v6877
  %7178 = vst.msk [vmem:[%s5 + $0x220] sm:$0xff] %vm7109, %v6880
  %7179 = vst.msk [vmem:[%s5 + $0x228] sm:$0xff] %vm7109, %v6882
  %7180 = vst.msk [vmem:[%s5 + $0x230] sm:$0xff] %vm7109, %v6885
  %7181 = vst.msk [vmem:[%s5 + $0x238] sm:$0xff] %vm7109, %v6887
  %7182 = vst.msk [vmem:[%s5 + $0x240] sm:$0xff] %vm7109, %v6890
  %7183 = vst.msk [vmem:[%s5 + $0x248] sm:$0xff] %vm7109, %v6892
  %7184 = vst.msk [vmem:[%s5 + $0x250] sm:$0xff] %vm7109, %v6895
  %7185 = vst.msk [vmem:[%s5 + $0x258] sm:$0xff] %vm7109, %v6897
  %7186 = vst.msk [vmem:[%s5 + $0x260] sm:$0xff] %vm7109, %v6900
  %7187 = vst.msk [vmem:[%s5 + $0x268] sm:$0xff] %vm7109, %v6902
  %7188 = vst.msk [vmem:[%s5 + $0x270] sm:$0xff] %vm7109, %v6905
  %7189 = vst.msk [vmem:[%s5 + $0x278] sm:$0xff] %vm7109, %v6907
  %7190 = vst.msk [vmem:[%s5 + $0x280] sm:$0xff] %vm7109, %v6910
  %7191 = vst.msk [vmem:[%s5 + $0x288] sm:$0xff] %vm7109, %v6912
  %7192 = vst.msk [vmem:[%s5 + $0x290] sm:$0xff] %vm7109, %v6915
  %7193 = vst.msk [vmem:[%s5 + $0x298] sm:$0xff] %vm7109, %v6917
  %7194 = vst.msk [vmem:[%s5 + $0x2a0] sm:$0xff] %vm7109, %v6920
  %7195 = vst.msk [vmem:[%s5 + $0x2a8] sm:$0xff] %vm7109, %v6922
  %7196 = vst.msk [vmem:[%s5 + $0x2b0] sm:$0xff] %vm7109, %v6925
  %7197 = vst.msk [vmem:[%s5 + $0x2b8] sm:$0xff] %vm7109, %v6927
  %7198 = vst.msk [vmem:[%s5 + $0x2c0] sm:$0xff] %vm7109, %v6930
  %7199 = vst.msk [vmem:[%s5 + $0x2c8] sm:$0xff] %vm7109, %v6932
  %7200 = vst.msk [vmem:[%s5 + $0x2d0] sm:$0xff] %vm7109, %v6935
  %7201 = vst.msk [vmem:[%s5 + $0x2d8] sm:$0xff] %vm7109, %v6937
  %7202 = vst.msk [vmem:[%s5 + $0x2e0] sm:$0xff] %vm7109, %v6940
  %7203 = vst.msk [vmem:[%s5 + $0x2e8] sm:$0xff] %vm7109, %v6942
  %7204 = vst.msk [vmem:[%s5 + $0x2f0] sm:$0xff] %vm7109, %v6945
  %7205 = vst.msk [vmem:[%s5 + $0x2f8] sm:$0xff] %vm7109, %v6947
  %7206 = vst.msk [vmem:[%s5 + $0x300] sm:$0xff] %vm7109, %v6950
  %7207 = vst.msk [vmem:[%s5 + $0x308] sm:$0xff] %vm7109, %v6952
  %7208 = vst.msk [vmem:[%s5 + $0x310] sm:$0xff] %vm7109, %v6955
  %7209 = vst.msk [vmem:[%s5 + $0x318] sm:$0xff] %vm7109, %v6957
  %7210 = vst.msk [vmem:[%s5 + $0x320] sm:$0xff] %vm7109, %v6960
  %7211 = vst.msk [vmem:[%s5 + $0x328] sm:$0xff] %vm7109, %v6962
  %7212 = vst.msk [vmem:[%s5 + $0x330] sm:$0xff] %vm7109, %v6965
  %7213 = vst.msk [vmem:[%s5 + $0x338] sm:$0xff] %vm7109, %v6967
  %7214 = vst.msk [vmem:[%s5 + $0x340] sm:$0xff] %vm7109, %v6970
  %7215 = vst.msk [vmem:[%s5 + $0x348] sm:$0xff] %vm7109, %v6972
  %7216 = vst.msk [vmem:[%s5 + $0x350] sm:$0xff] %vm7109, %v6975
  %7217 = vst.msk [vmem:[%s5 + $0x358] sm:$0xff] %vm7109, %v6977
  %7218 = vst.msk [vmem:[%s5 + $0x360] sm:$0xff] %vm7109, %v6980
  %7219 = vst.msk [vmem:[%s5 + $0x368] sm:$0xff] %vm7109, %v6982
  %7220 = vst.msk [vmem:[%s5 + $0x370] sm:$0xff] %vm7109, %v6985
  %7221 = vst.msk [vmem:[%s5 + $0x378] sm:$0xff] %vm7109, %v6987
  %7222 = vst.msk [vmem:[%s5 + $0x380] sm:$0xff] %vm7109, %v6990
  %7223 = vst.msk [vmem:[%s5 + $0x388] sm:$0xff] %vm7109, %v6992
  %7224 = vst.msk [vmem:[%s5 + $0x390] sm:$0xff] %vm7109, %v6995
  %7225 = vst.msk [vmem:[%s5 + $0x398] sm:$0xff] %vm7109, %v6997
  %7226 = vst.msk [vmem:[%s5 + $0x3a0] sm:$0xff] %vm7109, %v7000
  %7227 = vst.msk [vmem:[%s5 + $0x3a8] sm:$0xff] %vm7109, %v7002
  %7228 = vst.msk [vmem:[%s5 + $0x3b0] sm:$0xff] %vm7109, %v7005
  %7229 = vst.msk [vmem:[%s5 + $0x3b8] sm:$0xff] %vm7109, %v7007
  %7230 = vst.msk [vmem:[%s5 + $0x3c0] sm:$0xff] %vm7109, %v7010
  %7231 = vst.msk [vmem:[%s5 + $0x3c8] sm:$0xff] %vm7109, %v7012
  %7232 = vst.msk [vmem:[%s5 + $0x3d0] sm:$0xff] %vm7109, %v7015
  %7233 = vst.msk [vmem:[%s5 + $0x3d8] sm:$0xff] %vm7109, %v7017
  %7234 = vst.msk [vmem:[%s5 + $0x3e0] sm:$0xff] %vm7109, %v7020
  %7235 = vst.msk [vmem:[%s5 + $0x3e8] sm:$0xff] %vm7109, %v7022
  %7236 = vst.msk [vmem:[%s5 + $0x3f0] sm:$0xff] %vm7109, %v7025
  %7237 = vst.msk [vmem:[%s5 + $0x3f8] sm:$0xff] %vm7109, %v7027
  %7238 = vst.msk [vmem:[%s5 + $0x400] sm:$0xff] %vm7109, %v7030
  %7239 = vst.msk [vmem:[%s5 + $0x408] sm:$0xff] %vm7109, %v7032
  %7240 = vst.msk [vmem:[%s5 + $0x410] sm:$0xff] %vm7109, %v7035
  %7241 = vst.msk [vmem:[%s5 + $0x418] sm:$0xff] %vm7109, %v7037
  %7242 = vst.msk [vmem:[%s5 + $0x420] sm:$0xff] %vm7109, %v7040
  %7243 = vst.msk [vmem:[%s5 + $0x428] sm:$0xff] %vm7109, %v7042
  %7244 = vst.msk [vmem:[%s5 + $0x430] sm:$0xff] %vm7109, %v7045
  %7245 = vst.msk [vmem:[%s5 + $0x438] sm:$0xff] %vm7109, %v7047
  %7246 = vst.msk [vmem:[%s5 + $0x440] sm:$0xff] %vm7109, %v7050
  %7247 = vst.msk [vmem:[%s5 + $0x448] sm:$0xff] %vm7109, %v7052
  %7248 = vst.msk [vmem:[%s5 + $0x450] sm:$0xff] %vm7109, %v7055
  %7249 = vst.msk [vmem:[%s5 + $0x458] sm:$0xff] %vm7109, %v7057
  %7250 = vst.msk [vmem:[%s5 + $0x460] sm:$0xff] %vm7109, %v7060
  %7251 = vst.msk [vmem:[%s5 + $0x468] sm:$0xff] %vm7109, %v7062
  %7252 = vst.msk [vmem:[%s5 + $0x470] sm:$0xff] %vm7109, %v7065
  %7253 = vst.msk [vmem:[%s5 + $0x478] sm:$0xff] %vm7109, %v7067
  %7254 = vst.msk [vmem:[%s5 + $0x480] sm:$0xff] %vm7109, %v7070
  %7255 = vst.msk [vmem:[%s5 + $0x488] sm:$0xff] %vm7109, %v7072
  %7256 = vst.msk [vmem:[%s5 + $0x490] sm:$0xff] %vm7109, %v7075
  %7257 = vst.msk [vmem:[%s5 + $0x498] sm:$0xff] %vm7109, %v7077
  %7258 = vst.msk [vmem:[%s5 + $0x4a0] sm:$0xff] %vm7109, %v7080
  %7259 = vst.msk [vmem:[%s5 + $0x4a8] sm:$0xff] %vm7109, %v7082
  %7260 = vst.msk [vmem:[%s5 + $0x4b0] sm:$0xff] %vm7109, %v7085
  %7261 = vst.msk [vmem:[%s5 + $0x4b8] sm:$0xff] %vm7109, %v7087
  %7262 = vst.msk [vmem:[%s5 + $0x4c0] sm:$0xff] %vm7109, %v7090
  %7263 = vst.msk [vmem:[%s5 + $0x4c8] sm:$0xff] %vm7109, %v7092
  %7264 = vst.msk [vmem:[%s5 + $0x4d0] sm:$0xff] %vm7109, %v7095
  %7265 = vst.msk [vmem:[%s5 + $0x4d8] sm:$0xff] %vm7109, %v7097
  %7266 = vst.msk [vmem:[%s5 + $0x4e0] sm:$0xff] %vm7109, %v7100
  %7267 = vst.msk [vmem:[%s5 + $0x4e8] sm:$0xff] %vm7109, %v7102
  %7268 = vst.msk [vmem:[%s5 + $0x4f0] sm:$0xff] %vm7109, %v7105
  %7269 = vst.msk [vmem:[%s5 + $0x4f8] sm:$0xff] %vm7109, %v7107
  // Predicated region
  $region22: #{fused_mul_conv_bn_conv.1} parent=0 // pred_check
    _
  $region23: #{fused_mul_conv_bn_conv.1} parent=0 // pred_check_branch
    %7271 = sbr.rel (0) target = $region25
  $region24: #{fused_mul_conv_bn_conv.1} parent=0 // pred_region
    _
  $region25: #{fused_mul_conv_bn_conv.1} parent=0 // pred_fallthru
    _
  // Predicated region
  $region26: #{fused_mul_conv_bn_conv.1} parent=0 // pred_check
    _
  $region27: #{fused_mul_conv_bn_conv.1} parent=0 // pred_check_branch
    %7273 = sbr.rel (0) target = $region29
  $region28: #{fused_mul_conv_bn_conv.1} parent=0 // pred_region
    _
  $region29: #{fused_mul_conv_bn_conv.1} parent=0 // pred_fallthru
    _

</llo_original>
